<compile_context>
chip_gen: v7x
topology: tpu7x:2x2x1
jax: 0.10.0
libtpu: 0.0.40
codegen_flags: <defaults>
</compile_context>

<pallas_src>
import functools

import jax
import jax.numpy as jnp
from jax.experimental import pallas as pl
from jax.experimental.pallas import tpu as pltpu

LATENT_DIM = 64
LATENT_PADDED = 128      # zero-padded contraction dim of layer 1 (full lane width)
OUT_DIM = 784            # true Generator output dim
OUT_DIM_PADDED = 896     # 7 * 128, lane-dense final matmul N / output stores


def _round_up(n, m):
    return ((n + m - 1) // m) * m


def _leaky_relu(x, negative_slope=0.2):
    return jnp.where(x > 0, x, negative_slope * x)


def generator_kernel(x_ref,
                     w1_ref, b1_ref,
                     w2_ref, b2_ref,
                     w3_ref, b3_ref,
                     w4_ref, b4_ref,
                     o_ref, *, num_subtiles):
    tb = x_ref.shape[0]
    rows = tb // num_subtiles
    # Static Python loop over independent row sub-tiles: the LLO scheduler can
    # overlap sub-tile s+1's matmuls (MXU/extended slots) with sub-tile s's
    # bias + LeakyReLU / tanh epilogue (VALU / EUP slots).
    for s in range(num_subtiles):
        r = pl.ds(s * rows, rows)
        # Layer 1: (rows, 128) @ (128, 256) -> LeakyReLU(0.2)
        h = jnp.dot(x_ref[r, :].astype(jnp.bfloat16), w1_ref[...],
                    preferred_element_type=jnp.float32)
        h = _leaky_relu(h + b1_ref[...])
        # Layer 2: -> 512
        h = jnp.dot(h.astype(jnp.bfloat16), w2_ref[...],
                    preferred_element_type=jnp.float32)
        h = _leaky_relu(h + b2_ref[...])
        # Layer 3: -> 1024
        h = jnp.dot(h.astype(jnp.bfloat16), w3_ref[...],
                    preferred_element_type=jnp.float32)
        h = _leaky_relu(h + b3_ref[...])
        # Layer 4: -> 896 (padded from 784), Tanh, stored as bf16
        h = jnp.dot(h.astype(jnp.bfloat16), w4_ref[...],
                    preferred_element_type=jnp.float32)
        o_ref[r, :] = jnp.tanh(h + b4_ref[...]).astype(o_ref.dtype)


def init_params(key, latent_dim):
    """f32 master params mirroring nn.Linear defaults: U(-1/sqrt(fan_in), ...).

    Weights are stored as (in_features, out_features) — the transpose of
    PyTorch's (out, in) — so the kernel computes x @ W + b directly.
    """
    dims = [latent_dim, 256, 512, 1024, OUT_DIM]
    params = {}
    for i in range(4):
        fan_in, fan_out = dims[i], dims[i + 1]
        key, kw, kb = jax.random.split(key, 3)
        bound = 1.0 / jnp.sqrt(fan_in)
        params[f"w{i+1}"] = jax.random.uniform(
            kw, (fan_in, fan_out), jnp.float32, minval=-bound, maxval=bound)
        params[f"b{i+1}"] = jax.random.uniform(
            kb, (1, fan_out), jnp.float32, minval=-bound, maxval=bound)
    return params


def prepare_params(params):
    """Kernel-ready params: bf16 weights, f32 biases.

    W1 is zero-padded to a 128-row contraction dim; layer-4 weight/bias are
    zero-padded to 896 output columns (lane-dense final matmul / stores).
    """
    kp = {}
    for i in range(1, 5):
        w = params[f"w{i}"]
        b = params[f"b{i}"]
        if i == 1:
            w = jnp.pad(w, ((0, LATENT_PADDED - w.shape[0]), (0, 0)))
        if i == 4:
            pad = OUT_DIM_PADDED - w.shape[1]
            w = jnp.pad(w, ((0, 0), (0, pad)))
            b = jnp.pad(b, ((0, 0), (0, pad)))
        kp[f"w{i}"] = w.astype(jnp.bfloat16)
        kp[f"b{i}"] = b.astype(jnp.float32)
    return kp


def _select_batch_tile(B):
    """Pick the batch tile (multiple of 8).

    - Small batches: one tile.
    - 128 < B <= 256: two even tiles so the 'parallel' grid axis can shard
      across both TensorCores on v7x (grid >= 2) instead of idling one core.
    - Large batches: 256-row tiles (512 when B >= 1024) to fill the MXU M dim
      and amortize per-step pipeline overhead.
    """
    Bp8 = _round_up(B, 8)
    if Bp8 <= 128:
        return Bp8
    if Bp8 <= 256:
        return _round_up((Bp8 + 1) // 2, 8)
    if Bp8 >= 1024:
        return 512
    return 256


@jax.jit
def generator_forward(x, kparams):
    """x: (B, latent_dim) f32. kparams: output of prepare_params(). Returns bf16."""
    B, latent = x.shape
    tb = _select_batch_tile(B)
    Bp = _round_up(B, tb)
    xp = jnp.pad(x, ((0, Bp - B), (0, LATENT_PADDED - latent)))
    # Interleave two independent half-tiles when the tile is large enough.
    num_subtiles = 2 if (tb >= 256 and (tb // 2) % 8 == 0) else 1
    kernel = functools.partial(generator_kernel, num_subtiles=num_subtiles)

    def _resident(shape):
        # Constant block index across the grid -> DMA'd once, stays in VMEM.
        return pl.BlockSpec(shape, lambda i: (0, 0))

    out = pl.pallas_call(
        kernel,
        out_shape=jax.ShapeDtypeStruct((Bp, OUT_DIM_PADDED), jnp.bfloat16),
        grid=(Bp // tb,),
        in_specs=[
            pl.BlockSpec((tb, LATENT_PADDED), lambda i: (i, 0)),
            _resident(kparams["w1"].shape), _resident(kparams["b1"].shape),
            _resident(kparams["w2"].shape), _resident(kparams["b2"].shape),
            _resident(kparams["w3"].shape), _resident(kparams["b3"].shape),
            _resident(kparams["w4"].shape), _resident(kparams["b4"].shape),
        ],
        out_specs=pl.BlockSpec((tb, OUT_DIM_PADDED), lambda i: (i, 0)),
        compiler_params=pltpu.CompilerParams(
            dimension_semantics=("parallel",),
            vmem_limit_bytes=32 << 20),
    )(xp,
      kparams["w1"], kparams["b1"],
      kparams["w2"], kparams["b2"],
      kparams["w3"], kparams["b3"],
      kparams["w4"], kparams["b4"])
    return out[:B, :OUT_DIM]


def reference_forward(x, params):
    """Plain-JAX reference matching the kernel's precision flow
    (bf16 weights/activations, f32 accumulation & elementwise)."""
    h = x
    for i in range(1, 4):
        w = params[f"w{i}"].astype(jnp.bfloat16)
        h = jnp.dot(h.astype(jnp.bfloat16), w,
                    preferred_element_type=jnp.float32) + params[f"b{i}"]
        h = jnp.where(h > 0, h, 0.2 * h)
    w4 = params["w4"].astype(jnp.bfloat16)
    h = jnp.dot(h.astype(jnp.bfloat16), w4,
                preferred_element_type=jnp.float32) + params["b4"]
    return jnp.tanh(h)


def _check(x, params, kparams, atol=2e-2):
    out = jax.block_until_ready(generator_forward(x, kparams))
    assert out.shape == (x.shape[0], OUT_DIM), out.shape
    ref = reference_forward(x, params)
    assert jnp.allclose(out.astype(jnp.float32), ref, atol=atol, rtol=atol), \
        f"mismatch vs JAX ref (B={x.shape[0]})"
    return out


if __name__ == "__main__":
    latent_dim = LATENT_DIM

    key = jax.random.PRNGKey(0)
    key_params, key_x, key_x2, key_x3 = jax.random.split(key, 4)
    params = init_params(key_params, latent_dim)
    kparams = prepare_params(params)

    # forward(x=None) draws x ~ N(0, I) of shape (batch, latent_dim); we pass
    # deterministic standard-normal samples instead.
    # Small batch: single tile.
    x = jax.random.normal(key_x, (8, latent_dim), jnp.float32)
    _check(x, params, kparams)

    # Medium batch: grid of 2 even tiles (v7x megacore path), row padding.
    x2 = jax.random.normal(key_x2, (192, latent_dim), jnp.float32)
    _check(x2, params, kparams)

    # Larger batch: 256-row tiles, sub-tile interleaving, padded final tile.
    x3 = jax.random.normal(key_x3, (600, latent_dim), jnp.float32)
    _check(x3, params, kparams)

    print("KERNEL_OK")
</pallas_src>

<mosaic_0001>
module attributes {stable_mosaic.version = 11 : i64} {
  func.func @generator_kernel(%arg0: i32, %arg1: memref<8x128xf32, #tpu.memory_space<vmem>>, %arg2: memref<128x256xbf16, #tpu.memory_space<vmem>>, %arg3: memref<1x256xf32, #tpu.memory_space<vmem>>, %arg4: memref<256x512xbf16, #tpu.memory_space<vmem>>, %arg5: memref<1x512xf32, #tpu.memory_space<vmem>>, %arg6: memref<512x1024xbf16, #tpu.memory_space<vmem>>, %arg7: memref<1x1024xf32, #tpu.memory_space<vmem>>, %arg8: memref<1024x896xbf16, #tpu.memory_space<vmem>>, %arg9: memref<1x896xf32, #tpu.memory_space<vmem>>, %arg10: memref<8x896xbf16, #tpu.memory_space<vmem>>) attributes {dimension_semantics = [#tpu.dimension_semantics<parallel>], iteration_bounds = array<i64: 1>, scalar_prefetch = 0 : i64, scratch_operands = 0 : i64, tpu.core_type = #tpu.core_type<tc>, window_params = [{transform_indices = @transform_0, window_bounds = array<i64: 8, 128>}, {pipeline_mode = #tpu.pipeline_mode<synchronous>, transform_indices = @transform_1, window_bounds = array<i64: 128, 256>}, {pipeline_mode = #tpu.pipeline_mode<synchronous>, transform_indices = @transform_2, window_bounds = array<i64: 1, 256>}, {pipeline_mode = #tpu.pipeline_mode<synchronous>, transform_indices = @transform_3, window_bounds = array<i64: 256, 512>}, {pipeline_mode = #tpu.pipeline_mode<synchronous>, transform_indices = @transform_4, window_bounds = array<i64: 1, 512>}, {pipeline_mode = #tpu.pipeline_mode<synchronous>, transform_indices = @transform_5, window_bounds = array<i64: 512, 1024>}, {pipeline_mode = #tpu.pipeline_mode<synchronous>, transform_indices = @transform_6, window_bounds = array<i64: 1, 1024>}, {pipeline_mode = #tpu.pipeline_mode<synchronous>, transform_indices = @transform_7, window_bounds = array<i64: 1024, 896>}, {pipeline_mode = #tpu.pipeline_mode<synchronous>, transform_indices = @transform_8, window_bounds = array<i64: 1, 896>}, {transform_indices = @transform_9, window_bounds = array<i64: 8, 896>}]} {
    %c0 = arith.constant 0 : index
    %c0_0 = arith.constant 0 : index
    %0 = vector.load %arg1[%c0, %c0_0] : memref<8x128xf32, #tpu.memory_space<vmem>>, vector<8x128xf32>
    %1 = arith.truncf %0 : vector<8x128xf32> to vector<8x128xbf16>
    %c0_1 = arith.constant 0 : index
    %c0_2 = arith.constant 0 : index
    %2 = vector.load %arg2[%c0_1, %c0_2] : memref<128x256xbf16, #tpu.memory_space<vmem>>, vector<128x256xbf16>
    %cst = arith.constant dense<0.000000e+00> : vector<8x256xf32>
    %3 = tpu.matmul %1, %2, %cst {dimension_numbers = #tpu.dot_dimension_numbers<[1], [0], [0], [1], [0, 0, 1, 1], [], []>} : vector<8x128xbf16>, vector<128x256xbf16>, vector<8x256xf32> -> vector<8x256xf32>
    %c0_3 = arith.constant 0 : index
    %c0_4 = arith.constant 0 : index
    %4 = vector.load %arg3[%c0_3, %c0_4] : memref<1x256xf32, #tpu.memory_space<vmem>>, vector<1x256xf32>
    %5 = vector.broadcast %4 : vector<1x256xf32> to vector<8x256xf32>
    %6 = arith.addf %3, %5 : vector<8x256xf32>
    %cst_5 = arith.constant 0.000000e+00 : f32
    %7 = vector.broadcast %cst_5 : f32 to vector<8x256xf32>
    %8 = arith.cmpf ogt, %6, %7 : vector<8x256xf32>
    %cst_6 = arith.constant 2.000000e-01 : f32
    %9 = vector.broadcast %cst_6 : f32 to vector<8x256xf32>
    %10 = arith.mulf %9, %6 : vector<8x256xf32>
    %11 = arith.select %8, %6, %10 : vector<8x256xi1>, vector<8x256xf32>
    %12 = arith.truncf %11 : vector<8x256xf32> to vector<8x256xbf16>
    %c0_7 = arith.constant 0 : index
    %c0_8 = arith.constant 0 : index
    %13 = vector.load %arg4[%c0_7, %c0_8] : memref<256x512xbf16, #tpu.memory_space<vmem>>, vector<256x512xbf16>
    %cst_9 = arith.constant dense<0.000000e+00> : vector<8x512xf32>
    %14 = tpu.matmul %12, %13, %cst_9 {dimension_numbers = #tpu.dot_dimension_numbers<[1], [0], [0], [1], [0, 0, 1, 1], [], []>} : vector<8x256xbf16>, vector<256x512xbf16>, vector<8x512xf32> -> vector<8x512xf32>
    %c0_10 = arith.constant 0 : index
    %c0_11 = arith.constant 0 : index
    %15 = vector.load %arg5[%c0_10, %c0_11] : memref<1x512xf32, #tpu.memory_space<vmem>>, vector<1x512xf32>
    %16 = vector.broadcast %15 : vector<1x512xf32> to vector<8x512xf32>
    %17 = arith.addf %14, %16 : vector<8x512xf32>
    %cst_12 = arith.constant 0.000000e+00 : f32
    %18 = vector.broadcast %cst_12 : f32 to vector<8x512xf32>
    %19 = arith.cmpf ogt, %17, %18 : vector<8x512xf32>
    %cst_13 = arith.constant 2.000000e-01 : f32
    %20 = vector.broadcast %cst_13 : f32 to vector<8x512xf32>
    %21 = arith.mulf %20, %17 : vector<8x512xf32>
    %22 = arith.select %19, %17, %21 : vector<8x512xi1>, vector<8x512xf32>
    %23 = arith.truncf %22 : vector<8x512xf32> to vector<8x512xbf16>
    %c0_14 = arith.constant 0 : index
    %c0_15 = arith.constant 0 : index
    %24 = vector.load %arg6[%c0_14, %c0_15] : memref<512x1024xbf16, #tpu.memory_space<vmem>>, vector<512x1024xbf16>
    %cst_16 = arith.constant dense<0.000000e+00> : vector<8x1024xf32>
    %25 = tpu.matmul %23, %24, %cst_16 {dimension_numbers = #tpu.dot_dimension_numbers<[1], [0], [0], [1], [0, 0, 1, 1], [], []>} : vector<8x512xbf16>, vector<512x1024xbf16>, vector<8x1024xf32> -> vector<8x1024xf32>
    %c0_17 = arith.constant 0 : index
    %c0_18 = arith.constant 0 : index
    %26 = vector.load %arg7[%c0_17, %c0_18] : memref<1x1024xf32, #tpu.memory_space<vmem>>, vector<1x1024xf32>
    %27 = vector.broadcast %26 : vector<1x1024xf32> to vector<8x1024xf32>
    %28 = arith.addf %25, %27 : vector<8x1024xf32>
    %cst_19 = arith.constant 0.000000e+00 : f32
    %29 = vector.broadcast %cst_19 : f32 to vector<8x1024xf32>
    %30 = arith.cmpf ogt, %28, %29 : vector<8x1024xf32>
    %cst_20 = arith.constant 2.000000e-01 : f32
    %31 = vector.broadcast %cst_20 : f32 to vector<8x1024xf32>
    %32 = arith.mulf %31, %28 : vector<8x1024xf32>
    %33 = arith.select %30, %28, %32 : vector<8x1024xi1>, vector<8x1024xf32>
    %34 = arith.truncf %33 : vector<8x1024xf32> to vector<8x1024xbf16>
    %c0_21 = arith.constant 0 : index
    %c0_22 = arith.constant 0 : index
    %35 = vector.load %arg8[%c0_21, %c0_22] : memref<1024x896xbf16, #tpu.memory_space<vmem>>, vector<1024x896xbf16>
    %cst_23 = arith.constant dense<0.000000e+00> : vector<8x896xf32>
    %36 = tpu.matmul %34, %35, %cst_23 {dimension_numbers = #tpu.dot_dimension_numbers<[1], [0], [0], [1], [0, 0, 1, 1], [], []>} : vector<8x1024xbf16>, vector<1024x896xbf16>, vector<8x896xf32> -> vector<8x896xf32>
    %c0_24 = arith.constant 0 : index
    %c0_25 = arith.constant 0 : index
    %37 = vector.load %arg9[%c0_24, %c0_25] : memref<1x896xf32, #tpu.memory_space<vmem>>, vector<1x896xf32>
    %38 = vector.broadcast %37 : vector<1x896xf32> to vector<8x896xf32>
    %39 = arith.addf %36, %38 : vector<8x896xf32>
    %40 = math.tanh %39 : vector<8x896xf32>
    %41 = arith.truncf %40 : vector<8x896xf32> to vector<8x896xbf16>
    %c0_26 = arith.constant 0 : index
    %c0_27 = arith.constant 0 : index
    %42 = vector.load %arg10[%c0_26, %c0_27] : memref<8x896xbf16, #tpu.memory_space<vmem>>, vector<8x896xbf16>
    tpu.vector_store %arg10[%c0_26, %c0_27], %41 {strides = array<i32>} : memref<8x896xbf16, #tpu.memory_space<vmem>>, vector<8x896xbf16>,
    return
  }
  func.func @transform_0(%arg0: i32) -> (i32, i32) {
    %c0_i32 = arith.constant 0 : i32
    %c0_i32_0 = arith.constant 0 : i32
    return %arg0, %c0_i32 : i32, i32
  }
  func.func @transform_1(%arg0: i32) -> (i32, i32) {
    %c0_i32 = arith.constant 0 : i32
    %c0_i32_0 = arith.constant 0 : i32
    %c0_i32_1 = arith.constant 0 : i32
    return %c0_i32, %c0_i32_0 : i32, i32
  }
  func.func @transform_2(%arg0: i32) -> (i32, i32) {
    %c0_i32 = arith.constant 0 : i32
    %c0_i32_0 = arith.constant 0 : i32
    %c0_i32_1 = arith.constant 0 : i32
    return %c0_i32, %c0_i32_0 : i32, i32
  }
  func.func @transform_3(%arg0: i32) -> (i32, i32) {
    %c0_i32 = arith.constant 0 : i32
    %c0_i32_0 = arith.constant 0 : i32
    %c0_i32_1 = arith.constant 0 : i32
    return %c0_i32, %c0_i32_0 : i32, i32
  }
  func.func @transform_4(%arg0: i32) -> (i32, i32) {
    %c0_i32 = arith.constant 0 : i32
    %c0_i32_0 = arith.constant 0 : i32
    %c0_i32_1 = arith.constant 0 : i32
    return %c0_i32, %c0_i32_0 : i32, i32
  }
  func.func @transform_5(%arg0: i32) -> (i32, i32) {
    %c0_i32 = arith.constant 0 : i32
    %c0_i32_0 = arith.constant 0 : i32
    %c0_i32_1 = arith.constant 0 : i32
    return %c0_i32, %c0_i32_0 : i32, i32
  }
  func.func @transform_6(%arg0: i32) -> (i32, i32) {
    %c0_i32 = arith.constant 0 : i32
    %c0_i32_0 = arith.constant 0 : i32
    %c0_i32_1 = arith.constant 0 : i32
    return %c0_i32, %c0_i32_0 : i32, i32
  }
  func.func @transform_7(%arg0: i32) -> (i32, i32) {
    %c0_i32 = arith.constant 0 : i32
    %c0_i32_0 = arith.constant 0 : i32
    %c0_i32_1 = arith.constant 0 : i32
    return %c0_i32, %c0_i32_0 : i32, i32
  }
  func.func @transform_8(%arg0: i32) -> (i32, i32) {
    %c0_i32 = arith.constant 0 : i32
    %c0_i32_0 = arith.constant 0 : i32
    %c0_i32_1 = arith.constant 0 : i32
    return %c0_i32, %c0_i32_0 : i32, i32
  }
  func.func @transform_9(%arg0: i32) -> (i32, i32) {
    %c0_i32 = arith.constant 0 : i32
    %c0_i32_0 = arith.constant 0 : i32
    return %arg0, %c0_i32 : i32, i32
  }
}

</mosaic_0001>

<llo_original>
// kernel: generator_forward.1
$region0: #{generator_forward.1}
  #allocation0 [shape = 'u32[]', space=smem, size = 0x4, offset = 0x4, fixed_abs, tag = 'smem constant byte address 0x4 - core index']
  #allocation1 [shape = 'u32[144,128]{1,0:T(1,128)}', space=vmem, size = 0x12000, scoped, tag = 'internal scratch']
  %s0 = inlined_call_operand.vmem [shape: f32[8,128], index: 0, kind: input, shape index: {}]
  %s1 = inlined_call_operand.hbm [shape: bf16[128,256], index: 1, kind: input, shape index: {}]
  %s2 = inlined_call_operand.hbm [shape: f32[1,256], index: 2, kind: input, shape index: {}]
  %s3 = inlined_call_operand.hbm [shape: bf16[256,512], index: 3, kind: input, shape index: {}]
  %s4 = inlined_call_operand.hbm [shape: f32[1,512], index: 4, kind: input, shape index: {}]
  %s5 = inlined_call_operand.hbm [shape: bf16[512,1024], index: 5, kind: input, shape index: {}]
  %s6 = inlined_call_operand.hbm [shape: f32[1,1024], index: 6, kind: input, shape index: {}]
  %s7 = inlined_call_operand.hbm [shape: bf16[1024,896], index: 7, kind: input, shape index: {}]
  %s8 = inlined_call_operand.hbm [shape: f32[1,896], index: 8, kind: input, shape index: {}]
  %s9 = inlined_call_operand.hbm [shape: bf16[8,896], index: 9, kind: output, shape index: {}]
  %s10 = sld [smem:[#allocation0]]
  $region78: #{generator_forward.1} parent=0
    _
  %s12 = ssub.s32 1, %s10
  %s13 = scalar_select 0, %s12, %s10
  $region1: #{generator_forward.1} parent=0
    #allocation2 [shape = 'u8[65536]{0}', space=vmem, size = 0x10000, scoped, tag = 'input window, operand 1, single buffered']
    #allocation3 [shape = 's32[1]{0}', space=sflag, size = 0x4, scoped, tag = 'scoped memory for generator_forward.1']
    #allocation4 [shape = 's32[1]{0}', space=sflag, size = 0x4, scoped, tag = 'scoped memory for generator_forward.1']
    #allocation5 [shape = 'u8[1024]{0}', space=vmem, size = 0x400, scoped, tag = 'input window, operand 2, single buffered']
    #allocation6 [shape = 's32[1]{0}', space=sflag, size = 0x4, scoped, tag = 'scoped memory for generator_forward.1']
    #allocation7 [shape = 'u8[262144]{0}', space=vmem, size = 0x40000, scoped, tag = 'input window, operand 3, single buffered']
    #allocation8 [shape = 'u8[2048]{0}', space=vmem, size = 0x800, scoped, tag = 'input window, operand 4, single buffered']
    #allocation9 [shape = 's32[1]{0}', space=sflag, size = 0x4, scoped, tag = 'scoped memory for generator_forward.1']
    #allocation10 [shape = 'u8[1048576]{0}', space=vmem, size = 0x100000, scoped, tag = 'input window, operand 5, single buffered']
    #allocation11 [shape = 'u8[4096]{0}', space=vmem, size = 0x1000, scoped, tag = 'input window, operand 6, single buffered']
    #allocation12 [shape = 's32[1]{0}', space=sflag, size = 0x4, scoped, tag = 'scoped memory for generator_forward.1']
    #allocation13 [shape = 'u8[1835008]{0}', space=vmem, size = 0x1c0000, scoped, tag = 'input window, operand 7, single buffered']
    #allocation14 [shape = 'u8[3584]{0}', space=vmem, size = 0x1000, scoped, tag = 'input window, operand 8, single buffered']
    #allocation15 [shape = 's32[1]{0}', space=sflag, size = 0x4, scoped, tag = 'scoped memory for generator_forward.1']
    #allocation16 [shape = 'u8[14336]{0}', space=vmem, size = 0x3800, scoped, tag = 'output window, operand 0, single buffered']
    %14 = vsyncpa [#allocation3], 0
    %15 = vsyncpa [#allocation6], 0
    %16 = vsyncpa [#allocation9], 0
    %17 = vsyncpa [#allocation12], 0
    %18 = vsyncpa [#allocation15], 0
    %19 = vsyncpa [#allocation4], 0
    // Predicated region
    $region2: #{generator_forward.1} parent=1 // pred_check
      _
    $region3: #{generator_forward.1} parent=1 // pred_check_branch
      %21 = sbr.rel (0) target = $region5
    $region4: #{generator_forward.1} parent=1 // pred_region
      _
    $region5: #{generator_forward.1} parent=1 // pred_fallthru
      _
    // Predicated region
    $region6: #{generator_forward.1} parent=1 // pred_check
      _
    $region7: #{generator_forward.1} parent=1 // pred_check_branch
      %23 = sbr.rel (0) target = $region9
    $region8: #{generator_forward.1} parent=1 // pred_region
      %s25 = ssub.s32 2048, 2048
      %26 = vsyncadd [#allocation3], %s25
      %s27 = sshll.u32 [#allocation2], 4
      %s28 = int_to_ptr.vmem [resolvable:$true] %s27
      %33 = dma.hbm_to_vmem [thread:$0]  %s1, 2048, %s28, [#allocation3], 128, 128, 8
    $region9: #{generator_forward.1} parent=1 // pred_fallthru
      _
    // Predicated region
    $region10: #{generator_forward.1} parent=1 // pred_check
      _
    $region11: #{generator_forward.1} parent=1 // pred_check_branch
      %35 = sbr.rel (0) target = $region13
    $region12: #{generator_forward.1} parent=1 // pred_region
      %s37 = ssub.s32 32, 32
      %38 = vsyncadd [#allocation6], %s37
      %s40 = sshll.u32 [#allocation5], 4
      %s41 = int_to_ptr.vmem [resolvable:$true] %s40
      %43 = dma.hbm_to_vmem [thread:$0]  %s2, 32, %s41, [#allocation6]
    $region13: #{generator_forward.1} parent=1 // pred_fallthru
      _
    // Predicated region
    $region14: #{generator_forward.1} parent=1 // pred_check
      _
    $region15: #{generator_forward.1} parent=1 // pred_check_branch
      %45 = sbr.rel (0) target = $region17
    $region16: #{generator_forward.1} parent=1 // pred_region
      %s47 = ssub.s32 8192, 8192
      %48 = vsyncadd [#allocation6], %s47
      %s49 = sshll.u32 [#allocation7], 4
      %s50 = int_to_ptr.vmem [resolvable:$true] %s49
      %55 = dma.hbm_to_vmem [thread:$0]  %s3, 8192, %s50, [#allocation6], 256, 256, 16
    $region17: #{generator_forward.1} parent=1 // pred_fallthru
      _
    // Predicated region
    $region18: #{generator_forward.1} parent=1 // pred_check
      _
    $region19: #{generator_forward.1} parent=1 // pred_check_branch
      %57 = sbr.rel (0) target = $region21
    $region20: #{generator_forward.1} parent=1 // pred_region
      %s59 = ssub.s32 64, 64
      %60 = vsyncadd [#allocation9], %s59
      %s62 = sshll.u32 [#allocation8], 4
      %s63 = int_to_ptr.vmem [resolvable:$true] %s62
      %65 = dma.hbm_to_vmem [thread:$0]  %s4, 64, %s63, [#allocation9]
    $region21: #{generator_forward.1} parent=1 // pred_fallthru
      _
    // Predicated region
    $region22: #{generator_forward.1} parent=1 // pred_check
      _
    $region23: #{generator_forward.1} parent=1 // pred_check_branch
      %67 = sbr.rel (0) target = $region25
    $region24: #{generator_forward.1} parent=1 // pred_region
      %s69 = ssub.s32 32768, 32768
      %70 = vsyncadd [#allocation9], %s69
      %s71 = sshll.u32 [#allocation10], 4
      %s72 = int_to_ptr.vmem [resolvable:$true] %s71
      %77 = dma.hbm_to_vmem [thread:$0]  %s5, 32768, %s72, [#allocation9], 512, 512, 32
    $region25: #{generator_forward.1} parent=1 // pred_fallthru
      _
    // Predicated region
    $region26: #{generator_forward.1} parent=1 // pred_check
      _
    $region27: #{generator_forward.1} parent=1 // pred_check_branch
      %79 = sbr.rel (0) target = $region29
    $region28: #{generator_forward.1} parent=1 // pred_region
      %s81 = ssub.s32 128, 128
      %82 = vsyncadd [#allocation12], %s81
      %s84 = sshll.u32 [#allocation11], 4
      %s85 = int_to_ptr.vmem [resolvable:$true] %s84
      %87 = dma.hbm_to_vmem [thread:$0]  %s6, 128, %s85, [#allocation12]
    $region29: #{generator_forward.1} parent=1 // pred_fallthru
      _
    // Predicated region
    $region30: #{generator_forward.1} parent=1 // pred_check
      _
    $region31: #{generator_forward.1} parent=1 // pred_check_branch
      %89 = sbr.rel (0) target = $region33
    $region32: #{generator_forward.1} parent=1 // pred_region
      %s91 = ssub.s32 57344, 57344
      %92 = vsyncadd [#allocation12], %s91
      %s93 = sshll.u32 [#allocation13], 4
      %s94 = int_to_ptr.vmem [resolvable:$true] %s93
      %99 = dma.hbm_to_vmem [thread:$0]  %s7, 57344, %s94, [#allocation12], 448, 448, 28
    $region33: #{generator_forward.1} parent=1 // pred_fallthru
      _
    // Predicated region
    $region34: #{generator_forward.1} parent=1 // pred_check
      _
    $region35: #{generator_forward.1} parent=1 // pred_check_branch
      %101 = sbr.rel (0) target = $region37
    $region36: #{generator_forward.1} parent=1 // pred_region
      %s103 = ssub.s32 112, 112
      %104 = vsyncadd [#allocation15], %s103
      %s106 = sshll.u32 [#allocation14], 4
      %s107 = int_to_ptr.vmem [resolvable:$true] %s106
      %109 = dma.hbm_to_vmem [thread:$0]  %s8, 112, %s107, [#allocation15]
    $region37: #{generator_forward.1} parent=1 // pred_fallthru
      _
    // Predicated region
    $region38: #{generator_forward.1} parent=1 // pred_check
      _
    $region39: #{generator_forward.1} parent=1 // pred_check_branch
      %111 = sbr.rel (0) target = $region41
    $region40: #{generator_forward.1} parent=1 // pred_region
      %112 = dma.done [#allocation3], 2048
    $region41: #{generator_forward.1} parent=1 // pred_fallthru
      _
    // Predicated region
    $region42: #{generator_forward.1} parent=1 // pred_check
      _
    $region43: #{generator_forward.1} parent=1 // pred_check_branch
      %114 = sbr.rel (0) target = $region45
    $region44: #{generator_forward.1} parent=1 // pred_region
      %115 = dma.done [#allocation6], 32
    $region45: #{generator_forward.1} parent=1 // pred_fallthru
      _
    // Predicated region
    $region46: #{generator_forward.1} parent=1 // pred_check
      _
    $region47: #{generator_forward.1} parent=1 // pred_check_branch
      %117 = sbr.rel (0) target = $region49
    $region48: #{generator_forward.1} parent=1 // pred_region
      %118 = dma.done [#allocation6], 8192
    $region49: #{generator_forward.1} parent=1 // pred_fallthru
      _
    // Predicated region
    $region50: #{generator_forward.1} parent=1 // pred_check
      _
    $region51: #{generator_forward.1} parent=1 // pred_check_branch
      %120 = sbr.rel (0) target = $region53
    $region52: #{generator_forward.1} parent=1 // pred_region
      %121 = dma.done [#allocation9], 64
    $region53: #{generator_forward.1} parent=1 // pred_fallthru
      _
    // Predicated region
    $region54: #{generator_forward.1} parent=1 // pred_check
      _
    $region55: #{generator_forward.1} parent=1 // pred_check_branch
      %123 = sbr.rel (0) target = $region57
    $region56: #{generator_forward.1} parent=1 // pred_region
      %124 = dma.done [#allocation9], 32768
    $region57: #{generator_forward.1} parent=1 // pred_fallthru
      _
    // Predicated region
    $region58: #{generator_forward.1} parent=1 // pred_check
      _
    $region59: #{generator_forward.1} parent=1 // pred_check_branch
      %126 = sbr.rel (0) target = $region61
    $region60: #{generator_forward.1} parent=1 // pred_region
      %127 = dma.done [#allocation12], 128
    $region61: #{generator_forward.1} parent=1 // pred_fallthru
      _
    // Predicated region
    $region62: #{generator_forward.1} parent=1 // pred_check
      _
    $region63: #{generator_forward.1} parent=1 // pred_check_branch
      %129 = sbr.rel (0) target = $region65
    $region64: #{generator_forward.1} parent=1 // pred_region
      %130 = dma.done [#allocation12], 57344
    $region65: #{generator_forward.1} parent=1 // pred_fallthru
      _
    // Predicated region
    $region66: #{generator_forward.1} parent=1 // pred_check
      _
    $region67: #{generator_forward.1} parent=1 // pred_check_branch
      %132 = sbr.rel (0) target = $region69
    $region68: #{generator_forward.1} parent=1 // pred_region
      %133 = dma.done [#allocation15], 112
    $region69: #{generator_forward.1} parent=1 // pred_fallthru
      _
    %v135 = vld [vmem:[%s0] sm:$0xff]
    %v136 = vpack.c.bf16 %v135, %v135
    %v137 = vld [vmem:[#allocation2] sm:$0xff]
    %v138 = vld [vmem:[#allocation2 + $0x8] sm:$0xff]
    %v139 = vld [vmem:[#allocation2 + $0x10] sm:$0xff]
    %v140 = vld [vmem:[#allocation2 + $0x18] sm:$0xff]
    %v141 = vld [vmem:[#allocation2 + $0x20] sm:$0xff]
    %v142 = vld [vmem:[#allocation2 + $0x28] sm:$0xff]
    %v143 = vld [vmem:[#allocation2 + $0x30] sm:$0xff]
    %v144 = vld [vmem:[#allocation2 + $0x38] sm:$0xff]
    %v145 = vld [vmem:[#allocation2 + $0x40] sm:$0xff]
    %v146 = vld [vmem:[#allocation2 + $0x48] sm:$0xff]
    %v147 = vld [vmem:[#allocation2 + $0x50] sm:$0xff]
    %v148 = vld [vmem:[#allocation2 + $0x58] sm:$0xff]
    %v149 = vld [vmem:[#allocation2 + $0x60] sm:$0xff]
    %v150 = vld [vmem:[#allocation2 + $0x68] sm:$0xff]
    %v151 = vld [vmem:[#allocation2 + $0x70] sm:$0xff]
    %v152 = vld [vmem:[#allocation2 + $0x78] sm:$0xff]
    %v153 = vld [vmem:[#allocation5] sm:$0x3]
    %v155 = vlaneseq
    %v156 = vshrl.u32 %v155, 7
    %v157 = vsub.s32 0, %v156
    %v158 = vrot.slane %v153, %v157
    %v159 = vlaneseq
    %v160 = vshrl.u32 %v159, 7
    %v161 = vsub.s32 1, %v160
    %v162 = vrot.slane %v153, %v161
    %v181 = vunpack.c.l.b16 %v137
    %v182 = vunpack.c.h.b16 %v137
    %v183 = vunpack.c.l.b16 %v138
    %v184 = vunpack.c.h.b16 %v138
    %v185 = vunpack.c.l.b16 %v139
    %v186 = vunpack.c.h.b16 %v139
    %v187 = vunpack.c.l.b16 %v140
    %v188 = vunpack.c.h.b16 %v140
    %v189 = vunpack.c.l.b16 %v141
    %v190 = vunpack.c.h.b16 %v141
    %v191 = vunpack.c.l.b16 %v142
    %v192 = vunpack.c.h.b16 %v142
    %v193 = vunpack.c.l.b16 %v143
    %v194 = vunpack.c.h.b16 %v143
    %v195 = vunpack.c.l.b16 %v144
    %v196 = vunpack.c.h.b16 %v144
    %v197 = vunpack.c.l.b16 %v145
    %v198 = vunpack.c.h.b16 %v145
    %v199 = vunpack.c.l.b16 %v146
    %v200 = vunpack.c.h.b16 %v146
    %v201 = vunpack.c.l.b16 %v147
    %v202 = vunpack.c.h.b16 %v147
    %v203 = vunpack.c.l.b16 %v148
    %v204 = vunpack.c.h.b16 %v148
    %v205 = vunpack.c.l.b16 %v149
    %v206 = vunpack.c.h.b16 %v149
    %v207 = vunpack.c.l.b16 %v150
    %v208 = vunpack.c.h.b16 %v150
    %v209 = vunpack.c.l.b16 %v151
    %v210 = vunpack.c.h.b16 %v151
    %v211 = vunpack.c.l.b16 %v152
    %v212 = vunpack.c.h.b16 %v152
    %v213 = vpack.c.b16 %v183, %v181
    %v214 = vpack.c.b16 %v184, %v182
    %v215 = vpack.c.b16 %v187, %v185
    %v216 = vpack.c.b16 %v188, %v186
    %v217 = vpack.c.b16 %v191, %v189
    %v218 = vpack.c.b16 %v192, %v190
    %v219 = vpack.c.b16 %v195, %v193
    %v220 = vpack.c.b16 %v196, %v194
    %v221 = vpack.c.b16 %v199, %v197
    %v222 = vpack.c.b16 %v200, %v198
    %v223 = vpack.c.b16 %v203, %v201
    %v224 = vpack.c.b16 %v204, %v202
    %v225 = vpack.c.b16 %v207, %v205
    %v226 = vpack.c.b16 %v208, %v206
    %v227 = vpack.c.b16 %v211, %v209
    %v228 = vpack.c.b16 %v212, %v210
    %245 = vmatprep.subr.bf16.mxu0 %v214
    %246 = vmatpush1.bf16.msra.mxu0 %v213
    %247 = vmatprep.subr.bf16.mxu0 %v216
    %248 = vmatpush1.bf16.msra.mxu0 %v215
    %249 = vmatprep.subr.bf16.mxu0 %v218
    %250 = vmatpush1.bf16.msra.mxu0 %v217
    %251 = vmatprep.subr.bf16.mxu0 %v220
    %252 = vmatpush1.bf16.msra.mxu0 %v219
    %253 = vmatprep.subr.bf16.mxu0 %v222
    %254 = vmatpush1.bf16.msra.mxu0 %v221
    %255 = vmatprep.subr.bf16.mxu0 %v224
    %256 = vmatpush1.bf16.msra.mxu0 %v223
    %257 = vmatprep.subr.bf16.mxu0 %v226
    %258 = vmatpush1.bf16.msra.mxu0 %v225
    %259 = vmatprep.subr.bf16.mxu0 %v228
    %260 = vmatpush1.bf16.msra.mxu0 %v227
    %261 = vmatprep.subr.bf16.mxu0 0
    %262 = vmatpush1.bf16.msra.mxu0 0
    %263 = vmatprep.subr.bf16.mxu0 0
    %264 = vmatpush1.bf16.msra.mxu0 0
    %265 = vmatprep.subr.bf16.mxu0 0
    %266 = vmatpush1.bf16.msra.mxu0 0
    %267 = vmatprep.subr.bf16.mxu0 0
    %268 = vmatpush1.bf16.msra.mxu0 0
    %269 = vmatprep.subr.bf16.mxu0 0
    %270 = vmatpush1.bf16.msra.mxu0 0
    %271 = vmatprep.subr.bf16.mxu0 0
    %272 = vmatpush1.bf16.msra.mxu0 0
    %273 = vmatprep.subr.bf16.mxu0 0
    %274 = vmatpush1.bf16.msra.mxu0 0
    %275 = vmatprep.subr.bf16.mxu0 0
    %276 = vmatpush1.bf16.msra.mxu0 0
    %277 = vmatprep.mubr.bf16.mxu0 0
    %278 = vmatmul.mubr.bf16.gmra.mrb[0].mxu0 %v136
    %v279 = vpop.f32.mrb[0].mxu0
    %v280 = vadd.f32 %v158, %v279
    %v281 = vpop.f32.mrb[0].mxu0
    %v282 = vadd.f32 %v162, %v281
    %v283 = vpop.f32.mrb[0].mxu0
    %v284 = vpop.f32.mrb[0].mxu0
    %285 = vdwg.mxu0
    %vm286 = vcmp.gt.f32.partialorder %v280, 0.0
    %vm287 = vcmp.gt.f32.partialorder %v282, 0.0
    %v288 = vmul.f32 %v280, 0.2
    %v289 = vmul.f32 %v282, 0.2
    %v290 = vsel %vm286, %v280, %v288
    %v291 = vsel %vm287, %v282, %v289
    %v292 = vpack.c.bf16 %v290, %v290
    %v293 = vpack.c.bf16 %v291, %v291
    %v294 = vld [vmem:[#allocation7] sm:$0xff]
    %v295 = vld [vmem:[#allocation7 + $0x8] sm:$0xff]
    %v296 = vld [vmem:[#allocation7 + $0x10] sm:$0xff]
    %v297 = vld [vmem:[#allocation7 + $0x18] sm:$0xff]
    %v298 = vld [vmem:[#allocation7 + $0x20] sm:$0xff]
    %v299 = vld [vmem:[#allocation7 + $0x28] sm:$0xff]
    %v300 = vld [vmem:[#allocation7 + $0x30] sm:$0xff]
    %v301 = vld [vmem:[#allocation7 + $0x38] sm:$0xff]
    %v302 = vld [vmem:[#allocation7 + $0x40] sm:$0xff]
    %v303 = vld [vmem:[#allocation7 + $0x48] sm:$0xff]
    %v304 = vld [vmem:[#allocation7 + $0x50] sm:$0xff]
    %v305 = vld [vmem:[#allocation7 + $0x58] sm:$0xff]
    %v306 = vld [vmem:[#allocation7 + $0x60] sm:$0xff]
    %v307 = vld [vmem:[#allocation7 + $0x68] sm:$0xff]
    %v308 = vld [vmem:[#allocation7 + $0x70] sm:$0xff]
    %v309 = vld [vmem:[#allocation7 + $0x78] sm:$0xff]
    %v310 = vld [vmem:[#allocation7 + $0x80] sm:$0xff]
    %v311 = vld [vmem:[#allocation7 + $0x88] sm:$0xff]
    %v312 = vld [vmem:[#allocation7 + $0x90] sm:$0xff]
    %v313 = vld [vmem:[#allocation7 + $0x98] sm:$0xff]
    %v314 = vld [vmem:[#allocation7 + $0xa0] sm:$0xff]
    %v315 = vld [vmem:[#allocation7 + $0xa8] sm:$0xff]
    %v316 = vld [vmem:[#allocation7 + $0xb0] sm:$0xff]
    %v317 = vld [vmem:[#allocation7 + $0xb8] sm:$0xff]
    %v318 = vld [vmem:[#allocation7 + $0xc0] sm:$0xff]
    %v319 = vld [vmem:[#allocation7 + $0xc8] sm:$0xff]
    %v320 = vld [vmem:[#allocation7 + $0xd0] sm:$0xff]
    %v321 = vld [vmem:[#allocation7 + $0xd8] sm:$0xff]
    %v322 = vld [vmem:[#allocation7 + $0xe0] sm:$0xff]
    %v323 = vld [vmem:[#allocation7 + $0xe8] sm:$0xff]
    %v324 = vld [vmem:[#allocation7 + $0xf0] sm:$0xff]
    %v325 = vld [vmem:[#allocation7 + $0xf8] sm:$0xff]
    %v326 = vld [vmem:[#allocation7 + $0x100] sm:$0xff]
    %v327 = vld [vmem:[#allocation7 + $0x108] sm:$0xff]
    %v328 = vld [vmem:[#allocation7 + $0x110] sm:$0xff]
    %v329 = vld [vmem:[#allocation7 + $0x118] sm:$0xff]
    %v330 = vld [vmem:[#allocation7 + $0x120] sm:$0xff]
    %v331 = vld [vmem:[#allocation7 + $0x128] sm:$0xff]
    %v332 = vld [vmem:[#allocation7 + $0x130] sm:$0xff]
    %v333 = vld [vmem:[#allocation7 + $0x138] sm:$0xff]
    %v334 = vld [vmem:[#allocation7 + $0x140] sm:$0xff]
    %v335 = vld [vmem:[#allocation7 + $0x148] sm:$0xff]
    %v336 = vld [vmem:[#allocation7 + $0x150] sm:$0xff]
    %v337 = vld [vmem:[#allocation7 + $0x158] sm:$0xff]
    %v338 = vld [vmem:[#allocation7 + $0x160] sm:$0xff]
    %v339 = vld [vmem:[#allocation7 + $0x168] sm:$0xff]
    %v340 = vld [vmem:[#allocation7 + $0x170] sm:$0xff]
    %v341 = vld [vmem:[#allocation7 + $0x178] sm:$0xff]
    %v342 = vld [vmem:[#allocation7 + $0x180] sm:$0xff]
    %v343 = vld [vmem:[#allocation7 + $0x188] sm:$0xff]
    %v344 = vld [vmem:[#allocation7 + $0x190] sm:$0xff]
    %v345 = vld [vmem:[#allocation7 + $0x198] sm:$0xff]
    %v346 = vld [vmem:[#allocation7 + $0x1a0] sm:$0xff]
    %v347 = vld [vmem:[#allocation7 + $0x1a8] sm:$0xff]
    %v348 = vld [vmem:[#allocation7 + $0x1b0] sm:$0xff]
    %v349 = vld [vmem:[#allocation7 + $0x1b8] sm:$0xff]
    %v350 = vld [vmem:[#allocation7 + $0x1c0] sm:$0xff]
    %v351 = vld [vmem:[#allocation7 + $0x1c8] sm:$0xff]
    %v352 = vld [vmem:[#allocation7 + $0x1d0] sm:$0xff]
    %v353 = vld [vmem:[#allocation7 + $0x1d8] sm:$0xff]
    %v354 = vld [vmem:[#allocation7 + $0x1e0] sm:$0xff]
    %v355 = vld [vmem:[#allocation7 + $0x1e8] sm:$0xff]
    %v356 = vld [vmem:[#allocation7 + $0x1f0] sm:$0xff]
    %v357 = vld [vmem:[#allocation7 + $0x1f8] sm:$0xff]
    %v358 = vld [vmem:[#allocation8] sm:$0xf]
    %v360 = vlaneseq
    %v361 = vshrl.u32 %v360, 7
    %v362 = vsub.s32 0, %v361
    %v363 = vrot.slane %v358, %v362
    %v364 = vlaneseq
    %v365 = vshrl.u32 %v364, 7
    %v366 = vsub.s32 1, %v365
    %v367 = vrot.slane %v358, %v366
    %v368 = vlaneseq
    %v369 = vshrl.u32 %v368, 7
    %v370 = vsub.s32 2, %v369
    %v371 = vrot.slane %v358, %v370
    %v372 = vlaneseq
    %v373 = vshrl.u32 %v372, 7
    %v374 = vsub.s32 3, %v373
    %v375 = vrot.slane %v358, %v374
    %v444 = vunpack.c.l.b16 %v294
    %v445 = vunpack.c.h.b16 %v294
    %v446 = vunpack.c.l.b16 %v295
    %v447 = vunpack.c.h.b16 %v295
    %v448 = vunpack.c.l.b16 %v296
    %v449 = vunpack.c.h.b16 %v296
    %v450 = vunpack.c.l.b16 %v297
    %v451 = vunpack.c.h.b16 %v297
    %v452 = vunpack.c.l.b16 %v298
    %v453 = vunpack.c.h.b16 %v298
    %v454 = vunpack.c.l.b16 %v299
    %v455 = vunpack.c.h.b16 %v299
    %v456 = vunpack.c.l.b16 %v300
    %v457 = vunpack.c.h.b16 %v300
    %v458 = vunpack.c.l.b16 %v301
    %v459 = vunpack.c.h.b16 %v301
    %v460 = vunpack.c.l.b16 %v302
    %v461 = vunpack.c.h.b16 %v302
    %v462 = vunpack.c.l.b16 %v303
    %v463 = vunpack.c.h.b16 %v303
    %v464 = vunpack.c.l.b16 %v304
    %v465 = vunpack.c.h.b16 %v304
    %v466 = vunpack.c.l.b16 %v305
    %v467 = vunpack.c.h.b16 %v305
    %v468 = vunpack.c.l.b16 %v306
    %v469 = vunpack.c.h.b16 %v306
    %v470 = vunpack.c.l.b16 %v307
    %v471 = vunpack.c.h.b16 %v307
    %v472 = vunpack.c.l.b16 %v308
    %v473 = vunpack.c.h.b16 %v308
    %v474 = vunpack.c.l.b16 %v309
    %v475 = vunpack.c.h.b16 %v309
    %v476 = vunpack.c.l.b16 %v310
    %v477 = vunpack.c.h.b16 %v310
    %v478 = vunpack.c.l.b16 %v311
    %v479 = vunpack.c.h.b16 %v311
    %v480 = vunpack.c.l.b16 %v312
    %v481 = vunpack.c.h.b16 %v312
    %v482 = vunpack.c.l.b16 %v313
    %v483 = vunpack.c.h.b16 %v313
    %v484 = vunpack.c.l.b16 %v314
    %v485 = vunpack.c.h.b16 %v314
    %v486 = vunpack.c.l.b16 %v315
    %v487 = vunpack.c.h.b16 %v315
    %v488 = vunpack.c.l.b16 %v316
    %v489 = vunpack.c.h.b16 %v316
    %v490 = vunpack.c.l.b16 %v317
    %v491 = vunpack.c.h.b16 %v317
    %v492 = vunpack.c.l.b16 %v318
    %v493 = vunpack.c.h.b16 %v318
    %v494 = vunpack.c.l.b16 %v319
    %v495 = vunpack.c.h.b16 %v319
    %v496 = vunpack.c.l.b16 %v320
    %v497 = vunpack.c.h.b16 %v320
    %v498 = vunpack.c.l.b16 %v321
    %v499 = vunpack.c.h.b16 %v321
    %v500 = vunpack.c.l.b16 %v322
    %v501 = vunpack.c.h.b16 %v322
    %v502 = vunpack.c.l.b16 %v323
    %v503 = vunpack.c.h.b16 %v323
    %v504 = vunpack.c.l.b16 %v324
    %v505 = vunpack.c.h.b16 %v324
    %v506 = vunpack.c.l.b16 %v325
    %v507 = vunpack.c.h.b16 %v325
    %v508 = vunpack.c.l.b16 %v326
    %v509 = vunpack.c.h.b16 %v326
    %v510 = vunpack.c.l.b16 %v327
    %v511 = vunpack.c.h.b16 %v327
    %v512 = vunpack.c.l.b16 %v328
    %v513 = vunpack.c.h.b16 %v328
    %v514 = vunpack.c.l.b16 %v329
    %v515 = vunpack.c.h.b16 %v329
    %v516 = vunpack.c.l.b16 %v330
    %v517 = vunpack.c.h.b16 %v330
    %v518 = vunpack.c.l.b16 %v331
    %v519 = vunpack.c.h.b16 %v331
    %v520 = vunpack.c.l.b16 %v332
    %v521 = vunpack.c.h.b16 %v332
    %v522 = vunpack.c.l.b16 %v333
    %v523 = vunpack.c.h.b16 %v333
    %v524 = vunpack.c.l.b16 %v334
    %v525 = vunpack.c.h.b16 %v334
    %v526 = vunpack.c.l.b16 %v335
    %v527 = vunpack.c.h.b16 %v335
    %v528 = vunpack.c.l.b16 %v336
    %v529 = vunpack.c.h.b16 %v336
    %v530 = vunpack.c.l.b16 %v337
    %v531 = vunpack.c.h.b16 %v337
    %v532 = vunpack.c.l.b16 %v338
    %v533 = vunpack.c.h.b16 %v338
    %v534 = vunpack.c.l.b16 %v339
    %v535 = vunpack.c.h.b16 %v339
    %v536 = vunpack.c.l.b16 %v340
    %v537 = vunpack.c.h.b16 %v340
    %v538 = vunpack.c.l.b16 %v341
    %v539 = vunpack.c.h.b16 %v341
    %v540 = vunpack.c.l.b16 %v342
    %v541 = vunpack.c.h.b16 %v342
    %v542 = vunpack.c.l.b16 %v343
    %v543 = vunpack.c.h.b16 %v343
    %v544 = vunpack.c.l.b16 %v344
    %v545 = vunpack.c.h.b16 %v344
    %v546 = vunpack.c.l.b16 %v345
    %v547 = vunpack.c.h.b16 %v345
    %v548 = vunpack.c.l.b16 %v346
    %v549 = vunpack.c.h.b16 %v346
    %v550 = vunpack.c.l.b16 %v347
    %v551 = vunpack.c.h.b16 %v347
    %v552 = vunpack.c.l.b16 %v348
    %v553 = vunpack.c.h.b16 %v348
    %v554 = vunpack.c.l.b16 %v349
    %v555 = vunpack.c.h.b16 %v349
    %v556 = vunpack.c.l.b16 %v350
    %v557 = vunpack.c.h.b16 %v350
    %v558 = vunpack.c.l.b16 %v351
    %v559 = vunpack.c.h.b16 %v351
    %v560 = vunpack.c.l.b16 %v352
    %v561 = vunpack.c.h.b16 %v352
    %v562 = vunpack.c.l.b16 %v353
    %v563 = vunpack.c.h.b16 %v353
    %v564 = vunpack.c.l.b16 %v354
    %v565 = vunpack.c.h.b16 %v354
    %v566 = vunpack.c.l.b16 %v355
    %v567 = vunpack.c.h.b16 %v355
    %v568 = vunpack.c.l.b16 %v356
    %v569 = vunpack.c.h.b16 %v356
    %v570 = vunpack.c.l.b16 %v357
    %v571 = vunpack.c.h.b16 %v357
    %v572 = vpack.c.b16 %v448, %v444
    %v573 = vpack.c.b16 %v449, %v445
    %v574 = vpack.c.b16 %v450, %v446
    %v575 = vpack.c.b16 %v451, %v447
    %v576 = vpack.c.b16 %v456, %v452
    %v577 = vpack.c.b16 %v457, %v453
    %v578 = vpack.c.b16 %v458, %v454
    %v579 = vpack.c.b16 %v459, %v455
    %v580 = vpack.c.b16 %v464, %v460
    %v581 = vpack.c.b16 %v465, %v461
    %v582 = vpack.c.b16 %v466, %v462
    %v583 = vpack.c.b16 %v467, %v463
    %v584 = vpack.c.b16 %v472, %v468
    %v585 = vpack.c.b16 %v473, %v469
    %v586 = vpack.c.b16 %v474, %v470
    %v587 = vpack.c.b16 %v475, %v471
    %v588 = vpack.c.b16 %v480, %v476
    %v589 = vpack.c.b16 %v481, %v477
    %v590 = vpack.c.b16 %v482, %v478
    %v591 = vpack.c.b16 %v483, %v479
    %v592 = vpack.c.b16 %v488, %v484
    %v593 = vpack.c.b16 %v489, %v485
    %v594 = vpack.c.b16 %v490, %v486
    %v595 = vpack.c.b16 %v491, %v487
    %v596 = vpack.c.b16 %v496, %v492
    %v597 = vpack.c.b16 %v497, %v493
    %v598 = vpack.c.b16 %v498, %v494
    %v599 = vpack.c.b16 %v499, %v495
    %v600 = vpack.c.b16 %v504, %v500
    %v601 = vpack.c.b16 %v505, %v501
    %v602 = vpack.c.b16 %v506, %v502
    %v603 = vpack.c.b16 %v507, %v503
    %v604 = vpack.c.b16 %v512, %v508
    %v605 = vpack.c.b16 %v513, %v509
    %v606 = vpack.c.b16 %v514, %v510
    %v607 = vpack.c.b16 %v515, %v511
    %v608 = vpack.c.b16 %v520, %v516
    %v609 = vpack.c.b16 %v521, %v517
    %v610 = vpack.c.b16 %v522, %v518
    %v611 = vpack.c.b16 %v523, %v519
    %v612 = vpack.c.b16 %v528, %v524
    %v613 = vpack.c.b16 %v529, %v525
    %v614 = vpack.c.b16 %v530, %v526
    %v615 = vpack.c.b16 %v531, %v527
    %v616 = vpack.c.b16 %v536, %v532
    %v617 = vpack.c.b16 %v537, %v533
    %v618 = vpack.c.b16 %v538, %v534
    %v619 = vpack.c.b16 %v539, %v535
    %v620 = vpack.c.b16 %v544, %v540
    %v621 = vpack.c.b16 %v545, %v541
    %v622 = vpack.c.b16 %v546, %v542
    %v623 = vpack.c.b16 %v547, %v543
    %v624 = vpack.c.b16 %v552, %v548
    %v625 = vpack.c.b16 %v553, %v549
    %v626 = vpack.c.b16 %v554, %v550
    %v627 = vpack.c.b16 %v555, %v551
    %v628 = vpack.c.b16 %v560, %v556
    %v629 = vpack.c.b16 %v561, %v557
    %v630 = vpack.c.b16 %v562, %v558
    %v631 = vpack.c.b16 %v563, %v559
    %v632 = vpack.c.b16 %v568, %v564
    %v633 = vpack.c.b16 %v569, %v565
    %v634 = vpack.c.b16 %v570, %v566
    %v635 = vpack.c.b16 %v571, %v567
    %700 = vmatprep.subr.bf16.mxu0 %v573
    %701 = vmatpush1.bf16.msra.mxu0 %v572
    %702 = vmatprep.subr.bf16.mxu0 %v577
    %703 = vmatpush1.bf16.msra.mxu0 %v576
    %704 = vmatprep.subr.bf16.mxu0 %v581
    %705 = vmatpush1.bf16.msra.mxu0 %v580
    %706 = vmatprep.subr.bf16.mxu0 %v585
    %707 = vmatpush1.bf16.msra.mxu0 %v584
    %708 = vmatprep.subr.bf16.mxu0 %v589
    %709 = vmatpush1.bf16.msra.mxu0 %v588
    %710 = vmatprep.subr.bf16.mxu0 %v593
    %711 = vmatpush1.bf16.msra.mxu0 %v592
    %712 = vmatprep.subr.bf16.mxu0 %v597
    %713 = vmatpush1.bf16.msra.mxu0 %v596
    %714 = vmatprep.subr.bf16.mxu0 %v601
    %715 = vmatpush1.bf16.msra.mxu0 %v600
    %716 = vmatprep.subr.bf16.mxu0 %v605
    %717 = vmatpush1.bf16.msra.mxu0 %v604
    %718 = vmatprep.subr.bf16.mxu0 %v609
    %719 = vmatpush1.bf16.msra.mxu0 %v608
    %720 = vmatprep.subr.bf16.mxu0 %v613
    %721 = vmatpush1.bf16.msra.mxu0 %v612
    %722 = vmatprep.subr.bf16.mxu0 %v617
    %723 = vmatpush1.bf16.msra.mxu0 %v616
    %724 = vmatprep.subr.bf16.mxu0 %v621
    %725 = vmatpush1.bf16.msra.mxu0 %v620
    %726 = vmatprep.subr.bf16.mxu0 %v625
    %727 = vmatpush1.bf16.msra.mxu0 %v624
    %728 = vmatprep.subr.bf16.mxu0 %v629
    %729 = vmatpush1.bf16.msra.mxu0 %v628
    %730 = vmatprep.subr.bf16.mxu0 %v633
    %731 = vmatpush1.bf16.msra.mxu0 %v632
    %732 = vmatprep.mubr.bf16.mxu0 %v293
    %733 = vmatmul.mubr.bf16.gmra.mrb[0].mxu0 %v292
    %v734 = vpop.f32.mrb[0].mxu0
    %v735 = vadd.f32 %v363, %v734
    %v736 = vpop.f32.mrb[0].mxu0
    %v737 = vadd.f32 %v367, %v736
    %v738 = vpop.f32.mrb[0].mxu0
    %v739 = vpop.f32.mrb[0].mxu0
    %740 = vdwg.mxu0
    %741 = vmatprep.subr.bf16.mxu0 %v575
    %742 = vmatpush1.bf16.msra.mxu0 %v574
    %743 = vmatprep.subr.bf16.mxu0 %v579
    %744 = vmatpush1.bf16.msra.mxu0 %v578
    %745 = vmatprep.subr.bf16.mxu0 %v583
    %746 = vmatpush1.bf16.msra.mxu0 %v582
    %747 = vmatprep.subr.bf16.mxu0 %v587
    %748 = vmatpush1.bf16.msra.mxu0 %v586
    %749 = vmatprep.subr.bf16.mxu0 %v591
    %750 = vmatpush1.bf16.msra.mxu0 %v590
    %751 = vmatprep.subr.bf16.mxu0 %v595
    %752 = vmatpush1.bf16.msra.mxu0 %v594
    %753 = vmatprep.subr.bf16.mxu0 %v599
    %754 = vmatpush1.bf16.msra.mxu0 %v598
    %755 = vmatprep.subr.bf16.mxu0 %v603
    %756 = vmatpush1.bf16.msra.mxu0 %v602
    %757 = vmatprep.subr.bf16.mxu0 %v607
    %758 = vmatpush1.bf16.msra.mxu0 %v606
    %759 = vmatprep.subr.bf16.mxu0 %v611
    %760 = vmatpush1.bf16.msra.mxu0 %v610
    %761 = vmatprep.subr.bf16.mxu0 %v615
    %762 = vmatpush1.bf16.msra.mxu0 %v614
    %763 = vmatprep.subr.bf16.mxu0 %v619
    %764 = vmatpush1.bf16.msra.mxu0 %v618
    %765 = vmatprep.subr.bf16.mxu0 %v623
    %766 = vmatpush1.bf16.msra.mxu0 %v622
    %767 = vmatprep.subr.bf16.mxu0 %v627
    %768 = vmatpush1.bf16.msra.mxu0 %v626
    %769 = vmatprep.subr.bf16.mxu0 %v631
    %770 = vmatpush1.bf16.msra.mxu0 %v630
    %771 = vmatprep.subr.bf16.mxu0 %v635
    %772 = vmatpush1.bf16.msra.mxu0 %v634
    %773 = vmatprep.mubr.bf16.mxu0 %v293
    %774 = vmatmul.mubr.bf16.gmra.mrb[0].mxu0 %v292
    %v775 = vpop.f32.mrb[0].mxu0
    %v776 = vadd.f32 %v371, %v775
    %v777 = vpop.f32.mrb[0].mxu0
    %v778 = vadd.f32 %v375, %v777
    %v779 = vpop.f32.mrb[0].mxu0
    %v780 = vpop.f32.mrb[0].mxu0
    %781 = vdwg.mxu0
    %vm782 = vcmp.gt.f32.partialorder %v735, 0.0
    %vm783 = vcmp.gt.f32.partialorder %v737, 0.0
    %vm784 = vcmp.gt.f32.partialorder %v776, 0.0
    %vm785 = vcmp.gt.f32.partialorder %v778, 0.0
    %v786 = vmul.f32 %v735, 0.2
    %v787 = vmul.f32 %v737, 0.2
    %v788 = vmul.f32 %v776, 0.2
    %v789 = vmul.f32 %v778, 0.2
    %v790 = vsel %vm782, %v735, %v786
    %v791 = vsel %vm783, %v737, %v787
    %v792 = vsel %vm784, %v776, %v788
    %v793 = vsel %vm785, %v778, %v789
    %v794 = vpack.c.bf16 %v790, %v790
    %v795 = vpack.c.bf16 %v791, %v791
    %v796 = vpack.c.bf16 %v792, %v792
    %v797 = vpack.c.bf16 %v793, %v793
    %v798 = vld [vmem:[#allocation10] sm:$0xff]
    %v799 = vld [vmem:[#allocation10 + $0x8] sm:$0xff]
    %v800 = vld [vmem:[#allocation10 + $0x10] sm:$0xff]
    %v801 = vld [vmem:[#allocation10 + $0x18] sm:$0xff]
    %v802 = vld [vmem:[#allocation10 + $0x20] sm:$0xff]
    %v803 = vld [vmem:[#allocation10 + $0x28] sm:$0xff]
    %v804 = vld [vmem:[#allocation10 + $0x30] sm:$0xff]
    %v805 = vld [vmem:[#allocation10 + $0x38] sm:$0xff]
    %v806 = vld [vmem:[#allocation10 + $0x40] sm:$0xff]
    %v807 = vld [vmem:[#allocation10 + $0x48] sm:$0xff]
    %v808 = vld [vmem:[#allocation10 + $0x50] sm:$0xff]
    %v809 = vld [vmem:[#allocation10 + $0x58] sm:$0xff]
    %v810 = vld [vmem:[#allocation10 + $0x60] sm:$0xff]
    %v811 = vld [vmem:[#allocation10 + $0x68] sm:$0xff]
    %v812 = vld [vmem:[#allocation10 + $0x70] sm:$0xff]
    %v813 = vld [vmem:[#allocation10 + $0x78] sm:$0xff]
    %v814 = vld [vmem:[#allocation10 + $0x80] sm:$0xff]
    %v815 = vld [vmem:[#allocation10 + $0x88] sm:$0xff]
    %v816 = vld [vmem:[#allocation10 + $0x90] sm:$0xff]
    %v817 = vld [vmem:[#allocation10 + $0x98] sm:$0xff]
    %v818 = vld [vmem:[#allocation10 + $0xa0] sm:$0xff]
    %v819 = vld [vmem:[#allocation10 + $0xa8] sm:$0xff]
    %v820 = vld [vmem:[#allocation10 + $0xb0] sm:$0xff]
    %v821 = vld [vmem:[#allocation10 + $0xb8] sm:$0xff]
    %v822 = vld [vmem:[#allocation10 + $0xc0] sm:$0xff]
    %v823 = vld [vmem:[#allocation10 + $0xc8] sm:$0xff]
    %v824 = vld [vmem:[#allocation10 + $0xd0] sm:$0xff]
    %v825 = vld [vmem:[#allocation10 + $0xd8] sm:$0xff]
    %v826 = vld [vmem:[#allocation10 + $0xe0] sm:$0xff]
    %v827 = vld [vmem:[#allocation10 + $0xe8] sm:$0xff]
    %v828 = vld [vmem:[#allocation10 + $0xf0] sm:$0xff]
    %v829 = vld [vmem:[#allocation10 + $0xf8] sm:$0xff]
    %v830 = vld [vmem:[#allocation10 + $0x100] sm:$0xff]
    %v831 = vld [vmem:[#allocation10 + $0x108] sm:$0xff]
    %v832 = vld [vmem:[#allocation10 + $0x110] sm:$0xff]
    %v833 = vld [vmem:[#allocation10 + $0x118] sm:$0xff]
    %v834 = vld [vmem:[#allocation10 + $0x120] sm:$0xff]
    %v835 = vld [vmem:[#allocation10 + $0x128] sm:$0xff]
    %v836 = vld [vmem:[#allocation10 + $0x130] sm:$0xff]
    %v837 = vld [vmem:[#allocation10 + $0x138] sm:$0xff]
    %v838 = vld [vmem:[#allocation10 + $0x140] sm:$0xff]
    %v839 = vld [vmem:[#allocation10 + $0x148] sm:$0xff]
    %v840 = vld [vmem:[#allocation10 + $0x150] sm:$0xff]
    %v841 = vld [vmem:[#allocation10 + $0x158] sm:$0xff]
    %v842 = vld [vmem:[#allocation10 + $0x160] sm:$0xff]
    %v843 = vld [vmem:[#allocation10 + $0x168] sm:$0xff]
    %v844 = vld [vmem:[#allocation10 + $0x170] sm:$0xff]
    %v845 = vld [vmem:[#allocation10 + $0x178] sm:$0xff]
    %v846 = vld [vmem:[#allocation10 + $0x180] sm:$0xff]
    %v847 = vld [vmem:[#allocation10 + $0x188] sm:$0xff]
    %v848 = vld [vmem:[#allocation10 + $0x190] sm:$0xff]
    %v849 = vld [vmem:[#allocation10 + $0x198] sm:$0xff]
    %v850 = vld [vmem:[#allocation10 + $0x1a0] sm:$0xff]
    %v851 = vld [vmem:[#allocation10 + $0x1a8] sm:$0xff]
    %v852 = vld [vmem:[#allocation10 + $0x1b0] sm:$0xff]
    %v853 = vld [vmem:[#allocation10 + $0x1b8] sm:$0xff]
    %v854 = vld [vmem:[#allocation10 + $0x1c0] sm:$0xff]
    %v855 = vld [vmem:[#allocation10 + $0x1c8] sm:$0xff]
    %v856 = vld [vmem:[#allocation10 + $0x1d0] sm:$0xff]
    %v857 = vld [vmem:[#allocation10 + $0x1d8] sm:$0xff]
    %v858 = vld [vmem:[#allocation10 + $0x1e0] sm:$0xff]
    %v859 = vld [vmem:[#allocation10 + $0x1e8] sm:$0xff]
    %v860 = vld [vmem:[#allocation10 + $0x1f0] sm:$0xff]
    %v861 = vld [vmem:[#allocation10 + $0x1f8] sm:$0xff]
    %v862 = vld [vmem:[#allocation10 + $0x200] sm:$0xff]
    %v863 = vld [vmem:[#allocation10 + $0x208] sm:$0xff]
    %v864 = vld [vmem:[#allocation10 + $0x210] sm:$0xff]
    %v865 = vld [vmem:[#allocation10 + $0x218] sm:$0xff]
    %v866 = vld [vmem:[#allocation10 + $0x220] sm:$0xff]
    %v867 = vld [vmem:[#allocation10 + $0x228] sm:$0xff]
    %v868 = vld [vmem:[#allocation10 + $0x230] sm:$0xff]
    %v869 = vld [vmem:[#allocation10 + $0x238] sm:$0xff]
    %v870 = vld [vmem:[#allocation10 + $0x240] sm:$0xff]
    %v871 = vld [vmem:[#allocation10 + $0x248] sm:$0xff]
    %v872 = vld [vmem:[#allocation10 + $0x250] sm:$0xff]
    %v873 = vld [vmem:[#allocation10 + $0x258] sm:$0xff]
    %v874 = vld [vmem:[#allocation10 + $0x260] sm:$0xff]
    %v875 = vld [vmem:[#allocation10 + $0x268] sm:$0xff]
    %v876 = vld [vmem:[#allocation10 + $0x270] sm:$0xff]
    %v877 = vld [vmem:[#allocation10 + $0x278] sm:$0xff]
    %v878 = vld [vmem:[#allocation10 + $0x280] sm:$0xff]
    %v879 = vld [vmem:[#allocation10 + $0x288] sm:$0xff]
    %v880 = vld [vmem:[#allocation10 + $0x290] sm:$0xff]
    %v881 = vld [vmem:[#allocation10 + $0x298] sm:$0xff]
    %v882 = vld [vmem:[#allocation10 + $0x2a0] sm:$0xff]
    %v883 = vld [vmem:[#allocation10 + $0x2a8] sm:$0xff]
    %v884 = vld [vmem:[#allocation10 + $0x2b0] sm:$0xff]
    %v885 = vld [vmem:[#allocation10 + $0x2b8] sm:$0xff]
    %v886 = vld [vmem:[#allocation10 + $0x2c0] sm:$0xff]
    %v887 = vld [vmem:[#allocation10 + $0x2c8] sm:$0xff]
    %v888 = vld [vmem:[#allocation10 + $0x2d0] sm:$0xff]
    %v889 = vld [vmem:[#allocation10 + $0x2d8] sm:$0xff]
    %v890 = vld [vmem:[#allocation10 + $0x2e0] sm:$0xff]
    %v891 = vld [vmem:[#allocation10 + $0x2e8] sm:$0xff]
    %v892 = vld [vmem:[#allocation10 + $0x2f0] sm:$0xff]
    %v893 = vld [vmem:[#allocation10 + $0x2f8] sm:$0xff]
    %v894 = vld [vmem:[#allocation10 + $0x300] sm:$0xff]
    %v895 = vld [vmem:[#allocation10 + $0x308] sm:$0xff]
    %v896 = vld [vmem:[#allocation10 + $0x310] sm:$0xff]
    %v897 = vld [vmem:[#allocation10 + $0x318] sm:$0xff]
    %v898 = vld [vmem:[#allocation10 + $0x320] sm:$0xff]
    %v899 = vld [vmem:[#allocation10 + $0x328] sm:$0xff]
    %v900 = vld [vmem:[#allocation10 + $0x330] sm:$0xff]
    %v901 = vld [vmem:[#allocation10 + $0x338] sm:$0xff]
    %v902 = vld [vmem:[#allocation10 + $0x340] sm:$0xff]
    %v903 = vld [vmem:[#allocation10 + $0x348] sm:$0xff]
    %v904 = vld [vmem:[#allocation10 + $0x350] sm:$0xff]
    %v905 = vld [vmem:[#allocation10 + $0x358] sm:$0xff]
    %v906 = vld [vmem:[#allocation10 + $0x360] sm:$0xff]
    %v907 = vld [vmem:[#allocation10 + $0x368] sm:$0xff]
    %v908 = vld [vmem:[#allocation10 + $0x370] sm:$0xff]
    %v909 = vld [vmem:[#allocation10 + $0x378] sm:$0xff]
    %v910 = vld [vmem:[#allocation10 + $0x380] sm:$0xff]
    %v911 = vld [vmem:[#allocation10 + $0x388] sm:$0xff]
    %v912 = vld [vmem:[#allocation10 + $0x390] sm:$0xff]
    %v913 = vld [vmem:[#allocation10 + $0x398] sm:$0xff]
    %v914 = vld [vmem:[#allocation10 + $0x3a0] sm:$0xff]
    %v915 = vld [vmem:[#allocation10 + $0x3a8] sm:$0xff]
    %v916 = vld [vmem:[#allocation10 + $0x3b0] sm:$0xff]
    %v917 = vld [vmem:[#allocation10 + $0x3b8] sm:$0xff]
    %v918 = vld [vmem:[#allocation10 + $0x3c0] sm:$0xff]
    %v919 = vld [vmem:[#allocation10 + $0x3c8] sm:$0xff]
    %v920 = vld [vmem:[#allocation10 + $0x3d0] sm:$0xff]
    %v921 = vld [vmem:[#allocation10 + $0x3d8] sm:$0xff]
    %v922 = vld [vmem:[#allocation10 + $0x3e0] sm:$0xff]
    %v923 = vld [vmem:[#allocation10 + $0x3e8] sm:$0xff]
    %v924 = vld [vmem:[#allocation10 + $0x3f0] sm:$0xff]
    %v925 = vld [vmem:[#allocation10 + $0x3f8] sm:$0xff]
    %v926 = vld [vmem:[#allocation10 + $0x400] sm:$0xff]
    %v927 = vld [vmem:[#allocation10 + $0x408] sm:$0xff]
    %v928 = vld [vmem:[#allocation10 + $0x410] sm:$0xff]
    %v929 = vld [vmem:[#allocation10 + $0x418] sm:$0xff]
    %v930 = vld [vmem:[#allocation10 + $0x420] sm:$0xff]
    %v931 = vld [vmem:[#allocation10 + $0x428] sm:$0xff]
    %v932 = vld [vmem:[#allocation10 + $0x430] sm:$0xff]
    %v933 = vld [vmem:[#allocation10 + $0x438] sm:$0xff]
    %v934 = vld [vmem:[#allocation10 + $0x440] sm:$0xff]
    %v935 = vld [vmem:[#allocation10 + $0x448] sm:$0xff]
    %v936 = vld [vmem:[#allocation10 + $0x450] sm:$0xff]
    %v937 = vld [vmem:[#allocation10 + $0x458] sm:$0xff]
    %v938 = vld [vmem:[#allocation10 + $0x460] sm:$0xff]
    %v939 = vld [vmem:[#allocation10 + $0x468] sm:$0xff]
    %v940 = vld [vmem:[#allocation10 + $0x470] sm:$0xff]
    %v941 = vld [vmem:[#allocation10 + $0x478] sm:$0xff]
    %v942 = vld [vmem:[#allocation10 + $0x480] sm:$0xff]
    %v943 = vld [vmem:[#allocation10 + $0x488] sm:$0xff]
    %v944 = vld [vmem:[#allocation10 + $0x490] sm:$0xff]
    %v945 = vld [vmem:[#allocation10 + $0x498] sm:$0xff]
    %v946 = vld [vmem:[#allocation10 + $0x4a0] sm:$0xff]
    %v947 = vld [vmem:[#allocation10 + $0x4a8] sm:$0xff]
    %v948 = vld [vmem:[#allocation10 + $0x4b0] sm:$0xff]
    %v949 = vld [vmem:[#allocation10 + $0x4b8] sm:$0xff]
    %v950 = vld [vmem:[#allocation10 + $0x4c0] sm:$0xff]
    %v951 = vld [vmem:[#allocation10 + $0x4c8] sm:$0xff]
    %v952 = vld [vmem:[#allocation10 + $0x4d0] sm:$0xff]
    %v953 = vld [vmem:[#allocation10 + $0x4d8] sm:$0xff]
    %v954 = vld [vmem:[#allocation10 + $0x4e0] sm:$0xff]
    %v955 = vld [vmem:[#allocation10 + $0x4e8] sm:$0xff]
    %v956 = vld [vmem:[#allocation10 + $0x4f0] sm:$0xff]
    %v957 = vld [vmem:[#allocation10 + $0x4f8] sm:$0xff]
    %v958 = vld [vmem:[#allocation10 + $0x500] sm:$0xff]
    %v959 = vld [vmem:[#allocation10 + $0x508] sm:$0xff]
    %v960 = vld [vmem:[#allocation10 + $0x510] sm:$0xff]
    %v961 = vld [vmem:[#allocation10 + $0x518] sm:$0xff]
    %v962 = vld [vmem:[#allocation10 + $0x520] sm:$0xff]
    %v963 = vld [vmem:[#allocation10 + $0x528] sm:$0xff]
    %v964 = vld [vmem:[#allocation10 + $0x530] sm:$0xff]
    %v965 = vld [vmem:[#allocation10 + $0x538] sm:$0xff]
    %v966 = vld [vmem:[#allocation10 + $0x540] sm:$0xff]
    %v967 = vld [vmem:[#allocation10 + $0x548] sm:$0xff]
    %v968 = vld [vmem:[#allocation10 + $0x550] sm:$0xff]
    %v969 = vld [vmem:[#allocation10 + $0x558] sm:$0xff]
    %v970 = vld [vmem:[#allocation10 + $0x560] sm:$0xff]
    %v971 = vld [vmem:[#allocation10 + $0x568] sm:$0xff]
    %v972 = vld [vmem:[#allocation10 + $0x570] sm:$0xff]
    %v973 = vld [vmem:[#allocation10 + $0x578] sm:$0xff]
    %v974 = vld [vmem:[#allocation10 + $0x580] sm:$0xff]
    %v975 = vld [vmem:[#allocation10 + $0x588] sm:$0xff]
    %v976 = vld [vmem:[#allocation10 + $0x590] sm:$0xff]
    %v977 = vld [vmem:[#allocation10 + $0x598] sm:$0xff]
    %v978 = vld [vmem:[#allocation10 + $0x5a0] sm:$0xff]
    %v979 = vld [vmem:[#allocation10 + $0x5a8] sm:$0xff]
    %v980 = vld [vmem:[#allocation10 + $0x5b0] sm:$0xff]
    %v981 = vld [vmem:[#allocation10 + $0x5b8] sm:$0xff]
    %v982 = vld [vmem:[#allocation10 + $0x5c0] sm:$0xff]
    %v983 = vld [vmem:[#allocation10 + $0x5c8] sm:$0xff]
    %v984 = vld [vmem:[#allocation10 + $0x5d0] sm:$0xff]
    %v985 = vld [vmem:[#allocation10 + $0x5d8] sm:$0xff]
    %v986 = vld [vmem:[#allocation10 + $0x5e0] sm:$0xff]
    %v987 = vld [vmem:[#allocation10 + $0x5e8] sm:$0xff]
    %v988 = vld [vmem:[#allocation10 + $0x5f0] sm:$0xff]
    %v989 = vld [vmem:[#allocation10 + $0x5f8] sm:$0xff]
    %v990 = vld [vmem:[#allocation10 + $0x600] sm:$0xff]
    %v991 = vld [vmem:[#allocation10 + $0x608] sm:$0xff]
    %v992 = vld [vmem:[#allocation10 + $0x610] sm:$0xff]
    %v993 = vld [vmem:[#allocation10 + $0x618] sm:$0xff]
    %v994 = vld [vmem:[#allocation10 + $0x620] sm:$0xff]
    %v995 = vld [vmem:[#allocation10 + $0x628] sm:$0xff]
    %v996 = vld [vmem:[#allocation10 + $0x630] sm:$0xff]
    %v997 = vld [vmem:[#allocation10 + $0x638] sm:$0xff]
    %v998 = vld [vmem:[#allocation10 + $0x640] sm:$0xff]
    %v999 = vld [vmem:[#allocation10 + $0x648] sm:$0xff]
    %v1000 = vld [vmem:[#allocation10 + $0x650] sm:$0xff]
    %v1001 = vld [vmem:[#allocation10 + $0x658] sm:$0xff]
    %v1002 = vld [vmem:[#allocation10 + $0x660] sm:$0xff]
    %v1003 = vld [vmem:[#allocation10 + $0x668] sm:$0xff]
    %v1004 = vld [vmem:[#allocation10 + $0x670] sm:$0xff]
    %v1005 = vld [vmem:[#allocation10 + $0x678] sm:$0xff]
    %v1006 = vld [vmem:[#allocation10 + $0x680] sm:$0xff]
    %v1007 = vld [vmem:[#allocation10 + $0x688] sm:$0xff]
    %v1008 = vld [vmem:[#allocation10 + $0x690] sm:$0xff]
    %v1009 = vld [vmem:[#allocation10 + $0x698] sm:$0xff]
    %v1010 = vld [vmem:[#allocation10 + $0x6a0] sm:$0xff]
    %v1011 = vld [vmem:[#allocation10 + $0x6a8] sm:$0xff]
    %v1012 = vld [vmem:[#allocation10 + $0x6b0] sm:$0xff]
    %v1013 = vld [vmem:[#allocation10 + $0x6b8] sm:$0xff]
    %v1014 = vld [vmem:[#allocation10 + $0x6c0] sm:$0xff]
    %v1015 = vld [vmem:[#allocation10 + $0x6c8] sm:$0xff]
    %v1016 = vld [vmem:[#allocation10 + $0x6d0] sm:$0xff]
    %v1017 = vld [vmem:[#allocation10 + $0x6d8] sm:$0xff]
    %v1018 = vld [vmem:[#allocation10 + $0x6e0] sm:$0xff]
    %v1019 = vld [vmem:[#allocation10 + $0x6e8] sm:$0xff]
    %v1020 = vld [vmem:[#allocation10 + $0x6f0] sm:$0xff]
    %v1021 = vld [vmem:[#allocation10 + $0x6f8] sm:$0xff]
    %v1022 = vld [vmem:[#allocation10 + $0x700] sm:$0xff]
    %v1023 = vld [vmem:[#allocation10 + $0x708] sm:$0xff]
    %v1024 = vld [vmem:[#allocation10 + $0x710] sm:$0xff]
    %v1025 = vld [vmem:[#allocation10 + $0x718] sm:$0xff]
    %v1026 = vld [vmem:[#allocation10 + $0x720] sm:$0xff]
    %v1027 = vld [vmem:[#allocation10 + $0x728] sm:$0xff]
    %v1028 = vld [vmem:[#allocation10 + $0x730] sm:$0xff]
    %v1029 = vld [vmem:[#allocation10 + $0x738] sm:$0xff]
    %v1030 = vld [vmem:[#allocation10 + $0x740] sm:$0xff]
    %v1031 = vld [vmem:[#allocation10 + $0x748] sm:$0xff]
    %v1032 = vld [vmem:[#allocation10 + $0x750] sm:$0xff]
    %v1033 = vld [vmem:[#allocation10 + $0x758] sm:$0xff]
    %v1034 = vld [vmem:[#allocation10 + $0x760] sm:$0xff]
    %v1035 = vld [vmem:[#allocation10 + $0x768] sm:$0xff]
    %v1036 = vld [vmem:[#allocation10 + $0x770] sm:$0xff]
    %v1037 = vld [vmem:[#allocation10 + $0x778] sm:$0xff]
    %v1038 = vld [vmem:[#allocation10 + $0x780] sm:$0xff]
    %v1039 = vld [vmem:[#allocation10 + $0x788] sm:$0xff]
    %v1040 = vld [vmem:[#allocation10 + $0x790] sm:$0xff]
    %v1041 = vld [vmem:[#allocation10 + $0x798] sm:$0xff]
    %v1042 = vld [vmem:[#allocation10 + $0x7a0] sm:$0xff]
    %v1043 = vld [vmem:[#allocation10 + $0x7a8] sm:$0xff]
    %v1044 = vld [vmem:[#allocation10 + $0x7b0] sm:$0xff]
    %v1045 = vld [vmem:[#allocation10 + $0x7b8] sm:$0xff]
    %v1046 = vld [vmem:[#allocation10 + $0x7c0] sm:$0xff]
    %v1047 = vld [vmem:[#allocation10 + $0x7c8] sm:$0xff]
    %v1048 = vld [vmem:[#allocation10 + $0x7d0] sm:$0xff]
    %v1049 = vld [vmem:[#allocation10 + $0x7d8] sm:$0xff]
    %v1050 = vld [vmem:[#allocation10 + $0x7e0] sm:$0xff]
    %v1051 = vld [vmem:[#allocation10 + $0x7e8] sm:$0xff]
    %v1052 = vld [vmem:[#allocation10 + $0x7f0] sm:$0xff]
    %v1053 = vld [vmem:[#allocation10 + $0x7f8] sm:$0xff]
    %v1054 = vld [vmem:[#allocation11] sm:$0xff]
    %v1056 = vlaneseq
    %v1057 = vshrl.u32 %v1056, 7
    %v1058 = vsub.s32 0, %v1057
    %v1059 = vrot.slane %v1054, %v1058
    %v1060 = vlaneseq
    %v1061 = vshrl.u32 %v1060, 7
    %v1062 = vsub.s32 1, %v1061
    %v1063 = vrot.slane %v1054, %v1062
    %v1064 = vlaneseq
    %v1065 = vshrl.u32 %v1064, 7
    %v1066 = vsub.s32 2, %v1065
    %v1067 = vrot.slane %v1054, %v1066
    %v1068 = vlaneseq
    %v1069 = vshrl.u32 %v1068, 7
    %v1070 = vsub.s32 3, %v1069
    %v1071 = vrot.slane %v1054, %v1070
    %v1072 = vlaneseq
    %v1073 = vshrl.u32 %v1072, 7
    %v1074 = vsub.s32 4, %v1073
    %v1075 = vrot.slane %v1054, %v1074
    %v1076 = vlaneseq
    %v1077 = vshrl.u32 %v1076, 7
    %v1078 = vsub.s32 5, %v1077
    %v1079 = vrot.slane %v1054, %v1078
    %v1080 = vlaneseq
    %v1081 = vshrl.u32 %v1080, 7
    %v1082 = vsub.s32 6, %v1081
    %v1083 = vrot.slane %v1054, %v1082
    %v1084 = vlaneseq
    %v1085 = vshrl.u32 %v1084, 7
    %v1086 = vsub.s32 7, %v1085
    %v1087 = vrot.slane %v1054, %v1086
    %v1352 = vunpack.c.l.b16 %v798
    %v1353 = vunpack.c.h.b16 %v798
    %v1354 = vunpack.c.l.b16 %v799
    %v1355 = vunpack.c.h.b16 %v799
    %v1356 = vunpack.c.l.b16 %v800
    %v1357 = vunpack.c.h.b16 %v800
    %v1358 = vunpack.c.l.b16 %v801
    %v1359 = vunpack.c.h.b16 %v801
    %v1360 = vunpack.c.l.b16 %v802
    %v1361 = vunpack.c.h.b16 %v802
    %v1362 = vunpack.c.l.b16 %v803
    %v1363 = vunpack.c.h.b16 %v803
    %v1364 = vunpack.c.l.b16 %v804
    %v1365 = vunpack.c.h.b16 %v804
    %v1366 = vunpack.c.l.b16 %v805
    %v1367 = vunpack.c.h.b16 %v805
    %v1368 = vunpack.c.l.b16 %v806
    %v1369 = vunpack.c.h.b16 %v806
    %v1370 = vunpack.c.l.b16 %v807
    %v1371 = vunpack.c.h.b16 %v807
    %v1372 = vunpack.c.l.b16 %v808
    %v1373 = vunpack.c.h.b16 %v808
    %v1374 = vunpack.c.l.b16 %v809
    %v1375 = vunpack.c.h.b16 %v809
    %v1376 = vunpack.c.l.b16 %v810
    %v1377 = vunpack.c.h.b16 %v810
    %v1378 = vunpack.c.l.b16 %v811
    %v1379 = vunpack.c.h.b16 %v811
    %v1380 = vunpack.c.l.b16 %v812
    %v1381 = vunpack.c.h.b16 %v812
    %v1382 = vunpack.c.l.b16 %v813
    %v1383 = vunpack.c.h.b16 %v813
    %v1384 = vunpack.c.l.b16 %v814
    %v1385 = vunpack.c.h.b16 %v814
    %v1386 = vunpack.c.l.b16 %v815
    %v1387 = vunpack.c.h.b16 %v815
    %v1388 = vunpack.c.l.b16 %v816
    %v1389 = vunpack.c.h.b16 %v816
    %v1390 = vunpack.c.l.b16 %v817
    %v1391 = vunpack.c.h.b16 %v817
    %v1392 = vunpack.c.l.b16 %v818
    %v1393 = vunpack.c.h.b16 %v818
    %v1394 = vunpack.c.l.b16 %v819
    %v1395 = vunpack.c.h.b16 %v819
    %v1396 = vunpack.c.l.b16 %v820
    %v1397 = vunpack.c.h.b16 %v820
    %v1398 = vunpack.c.l.b16 %v821
    %v1399 = vunpack.c.h.b16 %v821
    %v1400 = vunpack.c.l.b16 %v822
    %v1401 = vunpack.c.h.b16 %v822
    %v1402 = vunpack.c.l.b16 %v823
    %v1403 = vunpack.c.h.b16 %v823
    %v1404 = vunpack.c.l.b16 %v824
    %v1405 = vunpack.c.h.b16 %v824
    %v1406 = vunpack.c.l.b16 %v825
    %v1407 = vunpack.c.h.b16 %v825
    %v1408 = vunpack.c.l.b16 %v826
    %v1409 = vunpack.c.h.b16 %v826
    %v1410 = vunpack.c.l.b16 %v827
    %v1411 = vunpack.c.h.b16 %v827
    %v1412 = vunpack.c.l.b16 %v828
    %v1413 = vunpack.c.h.b16 %v828
    %v1414 = vunpack.c.l.b16 %v829
    %v1415 = vunpack.c.h.b16 %v829
    %v1416 = vunpack.c.l.b16 %v830
    %v1417 = vunpack.c.h.b16 %v830
    %v1418 = vunpack.c.l.b16 %v831
    %v1419 = vunpack.c.h.b16 %v831
    %v1420 = vunpack.c.l.b16 %v832
    %v1421 = vunpack.c.h.b16 %v832
    %v1422 = vunpack.c.l.b16 %v833
    %v1423 = vunpack.c.h.b16 %v833
    %v1424 = vunpack.c.l.b16 %v834
    %v1425 = vunpack.c.h.b16 %v834
    %v1426 = vunpack.c.l.b16 %v835
    %v1427 = vunpack.c.h.b16 %v835
    %v1428 = vunpack.c.l.b16 %v836
    %v1429 = vunpack.c.h.b16 %v836
    %v1430 = vunpack.c.l.b16 %v837
    %v1431 = vunpack.c.h.b16 %v837
    %v1432 = vunpack.c.l.b16 %v838
    %v1433 = vunpack.c.h.b16 %v838
    %v1434 = vunpack.c.l.b16 %v839
    %v1435 = vunpack.c.h.b16 %v839
    %v1436 = vunpack.c.l.b16 %v840
    %v1437 = vunpack.c.h.b16 %v840
    %v1438 = vunpack.c.l.b16 %v841
    %v1439 = vunpack.c.h.b16 %v841
    %v1440 = vunpack.c.l.b16 %v842
    %v1441 = vunpack.c.h.b16 %v842
    %v1442 = vunpack.c.l.b16 %v843
    %v1443 = vunpack.c.h.b16 %v843
    %v1444 = vunpack.c.l.b16 %v844
    %v1445 = vunpack.c.h.b16 %v844
    %v1446 = vunpack.c.l.b16 %v845
    %v1447 = vunpack.c.h.b16 %v845
    %v1448 = vunpack.c.l.b16 %v846
    %v1449 = vunpack.c.h.b16 %v846
    %v1450 = vunpack.c.l.b16 %v847
    %v1451 = vunpack.c.h.b16 %v847
    %v1452 = vunpack.c.l.b16 %v848
    %v1453 = vunpack.c.h.b16 %v848
    %v1454 = vunpack.c.l.b16 %v849
    %v1455 = vunpack.c.h.b16 %v849
    %v1456 = vunpack.c.l.b16 %v850
    %v1457 = vunpack.c.h.b16 %v850
    %v1458 = vunpack.c.l.b16 %v851
    %v1459 = vunpack.c.h.b16 %v851
    %v1460 = vunpack.c.l.b16 %v852
    %v1461 = vunpack.c.h.b16 %v852
    %v1462 = vunpack.c.l.b16 %v853
    %v1463 = vunpack.c.h.b16 %v853
    %v1464 = vunpack.c.l.b16 %v854
    %v1465 = vunpack.c.h.b16 %v854
    %v1466 = vunpack.c.l.b16 %v855
    %v1467 = vunpack.c.h.b16 %v855
    %v1468 = vunpack.c.l.b16 %v856
    %v1469 = vunpack.c.h.b16 %v856
    %v1470 = vunpack.c.l.b16 %v857
    %v1471 = vunpack.c.h.b16 %v857
    %v1472 = vunpack.c.l.b16 %v858
    %v1473 = vunpack.c.h.b16 %v858
    %v1474 = vunpack.c.l.b16 %v859
    %v1475 = vunpack.c.h.b16 %v859
    %v1476 = vunpack.c.l.b16 %v860
    %v1477 = vunpack.c.h.b16 %v860
    %v1478 = vunpack.c.l.b16 %v861
    %v1479 = vunpack.c.h.b16 %v861
    %v1480 = vunpack.c.l.b16 %v862
    %v1481 = vunpack.c.h.b16 %v862
    %v1482 = vunpack.c.l.b16 %v863
    %v1483 = vunpack.c.h.b16 %v863
    %v1484 = vunpack.c.l.b16 %v864
    %v1485 = vunpack.c.h.b16 %v864
    %v1486 = vunpack.c.l.b16 %v865
    %v1487 = vunpack.c.h.b16 %v865
    %v1488 = vunpack.c.l.b16 %v866
    %v1489 = vunpack.c.h.b16 %v866
    %v1490 = vunpack.c.l.b16 %v867
    %v1491 = vunpack.c.h.b16 %v867
    %v1492 = vunpack.c.l.b16 %v868
    %v1493 = vunpack.c.h.b16 %v868
    %v1494 = vunpack.c.l.b16 %v869
    %v1495 = vunpack.c.h.b16 %v869
    %v1496 = vunpack.c.l.b16 %v870
    %v1497 = vunpack.c.h.b16 %v870
    %v1498 = vunpack.c.l.b16 %v871
    %v1499 = vunpack.c.h.b16 %v871
    %v1500 = vunpack.c.l.b16 %v872
    %v1501 = vunpack.c.h.b16 %v872
    %v1502 = vunpack.c.l.b16 %v873
    %v1503 = vunpack.c.h.b16 %v873
    %v1504 = vunpack.c.l.b16 %v874
    %v1505 = vunpack.c.h.b16 %v874
    %v1506 = vunpack.c.l.b16 %v875
    %v1507 = vunpack.c.h.b16 %v875
    %v1508 = vunpack.c.l.b16 %v876
    %v1509 = vunpack.c.h.b16 %v876
    %v1510 = vunpack.c.l.b16 %v877
    %v1511 = vunpack.c.h.b16 %v877
    %v1512 = vunpack.c.l.b16 %v878
    %v1513 = vunpack.c.h.b16 %v878
    %v1514 = vunpack.c.l.b16 %v879
    %v1515 = vunpack.c.h.b16 %v879
    %v1516 = vunpack.c.l.b16 %v880
    %v1517 = vunpack.c.h.b16 %v880
    %v1518 = vunpack.c.l.b16 %v881
    %v1519 = vunpack.c.h.b16 %v881
    %v1520 = vunpack.c.l.b16 %v882
    %v1521 = vunpack.c.h.b16 %v882
    %v1522 = vunpack.c.l.b16 %v883
    %v1523 = vunpack.c.h.b16 %v883
    %v1524 = vunpack.c.l.b16 %v884
    %v1525 = vunpack.c.h.b16 %v884
    %v1526 = vunpack.c.l.b16 %v885
    %v1527 = vunpack.c.h.b16 %v885
    %v1528 = vunpack.c.l.b16 %v886
    %v1529 = vunpack.c.h.b16 %v886
    %v1530 = vunpack.c.l.b16 %v887
    %v1531 = vunpack.c.h.b16 %v887
    %v1532 = vunpack.c.l.b16 %v888
    %v1533 = vunpack.c.h.b16 %v888
    %v1534 = vunpack.c.l.b16 %v889
    %v1535 = vunpack.c.h.b16 %v889
    %v1536 = vunpack.c.l.b16 %v890
    %v1537 = vunpack.c.h.b16 %v890
    %v1538 = vunpack.c.l.b16 %v891
    %v1539 = vunpack.c.h.b16 %v891
    %v1540 = vunpack.c.l.b16 %v892
    %v1541 = vunpack.c.h.b16 %v892
    %v1542 = vunpack.c.l.b16 %v893
    %v1543 = vunpack.c.h.b16 %v893
    %v1544 = vunpack.c.l.b16 %v894
    %v1545 = vunpack.c.h.b16 %v894
    %v1546 = vunpack.c.l.b16 %v895
    %v1547 = vunpack.c.h.b16 %v895
    %v1548 = vunpack.c.l.b16 %v896
    %v1549 = vunpack.c.h.b16 %v896
    %v1550 = vunpack.c.l.b16 %v897
    %v1551 = vunpack.c.h.b16 %v897
    %v1552 = vunpack.c.l.b16 %v898
    %v1553 = vunpack.c.h.b16 %v898
    %v1554 = vunpack.c.l.b16 %v899
    %v1555 = vunpack.c.h.b16 %v899
    %v1556 = vunpack.c.l.b16 %v900
    %v1557 = vunpack.c.h.b16 %v900
    %v1558 = vunpack.c.l.b16 %v901
    %v1559 = vunpack.c.h.b16 %v901
    %v1560 = vunpack.c.l.b16 %v902
    %v1561 = vunpack.c.h.b16 %v902
    %v1562 = vunpack.c.l.b16 %v903
    %v1563 = vunpack.c.h.b16 %v903
    %v1564 = vunpack.c.l.b16 %v904
    %v1565 = vunpack.c.h.b16 %v904
    %v1566 = vunpack.c.l.b16 %v905
    %v1567 = vunpack.c.h.b16 %v905
    %v1568 = vunpack.c.l.b16 %v906
    %v1569 = vunpack.c.h.b16 %v906
    %v1570 = vunpack.c.l.b16 %v907
    %v1571 = vunpack.c.h.b16 %v907
    %v1572 = vunpack.c.l.b16 %v908
    %v1573 = vunpack.c.h.b16 %v908
    %v1574 = vunpack.c.l.b16 %v909
    %v1575 = vunpack.c.h.b16 %v909
    %v1576 = vunpack.c.l.b16 %v910
    %v1577 = vunpack.c.h.b16 %v910
    %v1578 = vunpack.c.l.b16 %v911
    %v1579 = vunpack.c.h.b16 %v911
    %v1580 = vunpack.c.l.b16 %v912
    %v1581 = vunpack.c.h.b16 %v912
    %v1582 = vunpack.c.l.b16 %v913
    %v1583 = vunpack.c.h.b16 %v913
    %v1584 = vunpack.c.l.b16 %v914
    %v1585 = vunpack.c.h.b16 %v914
    %v1586 = vunpack.c.l.b16 %v915
    %v1587 = vunpack.c.h.b16 %v915
    %v1588 = vunpack.c.l.b16 %v916
    %v1589 = vunpack.c.h.b16 %v916
    %v1590 = vunpack.c.l.b16 %v917
    %v1591 = vunpack.c.h.b16 %v917
    %v1592 = vunpack.c.l.b16 %v918
    %v1593 = vunpack.c.h.b16 %v918
    %v1594 = vunpack.c.l.b16 %v919
    %v1595 = vunpack.c.h.b16 %v919
    %v1596 = vunpack.c.l.b16 %v920
    %v1597 = vunpack.c.h.b16 %v920
    %v1598 = vunpack.c.l.b16 %v921
    %v1599 = vunpack.c.h.b16 %v921
    %v1600 = vunpack.c.l.b16 %v922
    %v1601 = vunpack.c.h.b16 %v922
    %v1602 = vunpack.c.l.b16 %v923
    %v1603 = vunpack.c.h.b16 %v923
    %v1604 = vunpack.c.l.b16 %v924
    %v1605 = vunpack.c.h.b16 %v924
    %v1606 = vunpack.c.l.b16 %v925
    %v1607 = vunpack.c.h.b16 %v925
    %v1608 = vunpack.c.l.b16 %v926
    %v1609 = vunpack.c.h.b16 %v926
    %v1610 = vunpack.c.l.b16 %v927
    %v1611 = vunpack.c.h.b16 %v927
    %v1612 = vunpack.c.l.b16 %v928
    %v1613 = vunpack.c.h.b16 %v928
    %v1614 = vunpack.c.l.b16 %v929
    %v1615 = vunpack.c.h.b16 %v929
    %v1616 = vunpack.c.l.b16 %v930
    %v1617 = vunpack.c.h.b16 %v930
    %v1618 = vunpack.c.l.b16 %v931
    %v1619 = vunpack.c.h.b16 %v931
    %v1620 = vunpack.c.l.b16 %v932
    %v1621 = vunpack.c.h.b16 %v932
    %v1622 = vunpack.c.l.b16 %v933
    %v1623 = vunpack.c.h.b16 %v933
    %v1624 = vunpack.c.l.b16 %v934
    %v1625 = vunpack.c.h.b16 %v934
    %v1626 = vunpack.c.l.b16 %v935
    %v1627 = vunpack.c.h.b16 %v935
    %v1628 = vunpack.c.l.b16 %v936
    %v1629 = vunpack.c.h.b16 %v936
    %v1630 = vunpack.c.l.b16 %v937
    %v1631 = vunpack.c.h.b16 %v937
    %v1632 = vunpack.c.l.b16 %v938
    %v1633 = vunpack.c.h.b16 %v938
    %v1634 = vunpack.c.l.b16 %v939
    %v1635 = vunpack.c.h.b16 %v939
    %v1636 = vunpack.c.l.b16 %v940
    %v1637 = vunpack.c.h.b16 %v940
    %v1638 = vunpack.c.l.b16 %v941
    %v1639 = vunpack.c.h.b16 %v941
    %v1640 = vunpack.c.l.b16 %v942
    %v1641 = vunpack.c.h.b16 %v942
    %v1642 = vunpack.c.l.b16 %v943
    %v1643 = vunpack.c.h.b16 %v943
    %v1644 = vunpack.c.l.b16 %v944
    %v1645 = vunpack.c.h.b16 %v944
    %v1646 = vunpack.c.l.b16 %v945
    %v1647 = vunpack.c.h.b16 %v945
    %v1648 = vunpack.c.l.b16 %v946
    %v1649 = vunpack.c.h.b16 %v946
    %v1650 = vunpack.c.l.b16 %v947
    %v1651 = vunpack.c.h.b16 %v947
    %v1652 = vunpack.c.l.b16 %v948
    %v1653 = vunpack.c.h.b16 %v948
    %v1654 = vunpack.c.l.b16 %v949
    %v1655 = vunpack.c.h.b16 %v949
    %v1656 = vunpack.c.l.b16 %v950
    %v1657 = vunpack.c.h.b16 %v950
    %v1658 = vunpack.c.l.b16 %v951
    %v1659 = vunpack.c.h.b16 %v951
    %v1660 = vunpack.c.l.b16 %v952
    %v1661 = vunpack.c.h.b16 %v952
    %v1662 = vunpack.c.l.b16 %v953
    %v1663 = vunpack.c.h.b16 %v953
    %v1664 = vunpack.c.l.b16 %v954
    %v1665 = vunpack.c.h.b16 %v954
    %v1666 = vunpack.c.l.b16 %v955
    %v1667 = vunpack.c.h.b16 %v955
    %v1668 = vunpack.c.l.b16 %v956
    %v1669 = vunpack.c.h.b16 %v956
    %v1670 = vunpack.c.l.b16 %v957
    %v1671 = vunpack.c.h.b16 %v957
    %v1672 = vunpack.c.l.b16 %v958
    %v1673 = vunpack.c.h.b16 %v958
    %v1674 = vunpack.c.l.b16 %v959
    %v1675 = vunpack.c.h.b16 %v959
    %v1676 = vunpack.c.l.b16 %v960
    %v1677 = vunpack.c.h.b16 %v960
    %v1678 = vunpack.c.l.b16 %v961
    %v1679 = vunpack.c.h.b16 %v961
    %v1680 = vunpack.c.l.b16 %v962
    %v1681 = vunpack.c.h.b16 %v962
    %v1682 = vunpack.c.l.b16 %v963
    %v1683 = vunpack.c.h.b16 %v963
    %v1684 = vunpack.c.l.b16 %v964
    %v1685 = vunpack.c.h.b16 %v964
    %v1686 = vunpack.c.l.b16 %v965
    %v1687 = vunpack.c.h.b16 %v965
    %v1688 = vunpack.c.l.b16 %v966
    %v1689 = vunpack.c.h.b16 %v966
    %v1690 = vunpack.c.l.b16 %v967
    %v1691 = vunpack.c.h.b16 %v967
    %v1692 = vunpack.c.l.b16 %v968
    %v1693 = vunpack.c.h.b16 %v968
    %v1694 = vunpack.c.l.b16 %v969
    %v1695 = vunpack.c.h.b16 %v969
    %v1696 = vunpack.c.l.b16 %v970
    %v1697 = vunpack.c.h.b16 %v970
    %v1698 = vunpack.c.l.b16 %v971
    %v1699 = vunpack.c.h.b16 %v971
    %v1700 = vunpack.c.l.b16 %v972
    %v1701 = vunpack.c.h.b16 %v972
    %v1702 = vunpack.c.l.b16 %v973
    %v1703 = vunpack.c.h.b16 %v973
    %v1704 = vunpack.c.l.b16 %v974
    %v1705 = vunpack.c.h.b16 %v974
    %v1706 = vunpack.c.l.b16 %v975
    %v1707 = vunpack.c.h.b16 %v975
    %v1708 = vunpack.c.l.b16 %v976
    %v1709 = vunpack.c.h.b16 %v976
    %v1710 = vunpack.c.l.b16 %v977
    %v1711 = vunpack.c.h.b16 %v977
    %v1712 = vunpack.c.l.b16 %v978
    %v1713 = vunpack.c.h.b16 %v978
    %v1714 = vunpack.c.l.b16 %v979
    %v1715 = vunpack.c.h.b16 %v979
    %v1716 = vunpack.c.l.b16 %v980
    %v1717 = vunpack.c.h.b16 %v980
    %v1718 = vunpack.c.l.b16 %v981
    %v1719 = vunpack.c.h.b16 %v981
    %v1720 = vunpack.c.l.b16 %v982
    %v1721 = vunpack.c.h.b16 %v982
    %v1722 = vunpack.c.l.b16 %v983
    %v1723 = vunpack.c.h.b16 %v983
    %v1724 = vunpack.c.l.b16 %v984
    %v1725 = vunpack.c.h.b16 %v984
    %v1726 = vunpack.c.l.b16 %v985
    %v1727 = vunpack.c.h.b16 %v985
    %v1728 = vunpack.c.l.b16 %v986
    %v1729 = vunpack.c.h.b16 %v986
    %v1730 = vunpack.c.l.b16 %v987
    %v1731 = vunpack.c.h.b16 %v987
    %v1732 = vunpack.c.l.b16 %v988
    %v1733 = vunpack.c.h.b16 %v988
    %v1734 = vunpack.c.l.b16 %v989
    %v1735 = vunpack.c.h.b16 %v989
    %v1736 = vunpack.c.l.b16 %v990
    %v1737 = vunpack.c.h.b16 %v990
    %v1738 = vunpack.c.l.b16 %v991
    %v1739 = vunpack.c.h.b16 %v991
    %v1740 = vunpack.c.l.b16 %v992
    %v1741 = vunpack.c.h.b16 %v992
    %v1742 = vunpack.c.l.b16 %v993
    %v1743 = vunpack.c.h.b16 %v993
    %v1744 = vunpack.c.l.b16 %v994
    %v1745 = vunpack.c.h.b16 %v994
    %v1746 = vunpack.c.l.b16 %v995
    %v1747 = vunpack.c.h.b16 %v995
    %v1748 = vunpack.c.l.b16 %v996
    %v1749 = vunpack.c.h.b16 %v996
    %v1750 = vunpack.c.l.b16 %v997
    %v1751 = vunpack.c.h.b16 %v997
    %v1752 = vunpack.c.l.b16 %v998
    %v1753 = vunpack.c.h.b16 %v998
    %v1754 = vunpack.c.l.b16 %v999
    %v1755 = vunpack.c.h.b16 %v999
    %v1756 = vunpack.c.l.b16 %v1000
    %v1757 = vunpack.c.h.b16 %v1000
    %v1758 = vunpack.c.l.b16 %v1001
    %v1759 = vunpack.c.h.b16 %v1001
    %v1760 = vunpack.c.l.b16 %v1002
    %v1761 = vunpack.c.h.b16 %v1002
    %v1762 = vunpack.c.l.b16 %v1003
    %v1763 = vunpack.c.h.b16 %v1003
    %v1764 = vunpack.c.l.b16 %v1004
    %v1765 = vunpack.c.h.b16 %v1004
    %v1766 = vunpack.c.l.b16 %v1005
    %v1767 = vunpack.c.h.b16 %v1005
    %v1768 = vunpack.c.l.b16 %v1006
    %v1769 = vunpack.c.h.b16 %v1006
    %v1770 = vunpack.c.l.b16 %v1007
    %v1771 = vunpack.c.h.b16 %v1007
    %v1772 = vunpack.c.l.b16 %v1008
    %v1773 = vunpack.c.h.b16 %v1008
    %v1774 = vunpack.c.l.b16 %v1009
    %v1775 = vunpack.c.h.b16 %v1009
    %v1776 = vunpack.c.l.b16 %v1010
    %v1777 = vunpack.c.h.b16 %v1010
    %v1778 = vunpack.c.l.b16 %v1011
    %v1779 = vunpack.c.h.b16 %v1011
    %v1780 = vunpack.c.l.b16 %v1012
    %v1781 = vunpack.c.h.b16 %v1012
    %v1782 = vunpack.c.l.b16 %v1013
    %v1783 = vunpack.c.h.b16 %v1013
    %v1784 = vunpack.c.l.b16 %v1014
    %v1785 = vunpack.c.h.b16 %v1014
    %v1786 = vunpack.c.l.b16 %v1015
    %v1787 = vunpack.c.h.b16 %v1015
    %v1788 = vunpack.c.l.b16 %v1016
    %v1789 = vunpack.c.h.b16 %v1016
    %v1790 = vunpack.c.l.b16 %v1017
    %v1791 = vunpack.c.h.b16 %v1017
    %v1792 = vunpack.c.l.b16 %v1018
    %v1793 = vunpack.c.h.b16 %v1018
    %v1794 = vunpack.c.l.b16 %v1019
    %v1795 = vunpack.c.h.b16 %v1019
    %v1796 = vunpack.c.l.b16 %v1020
    %v1797 = vunpack.c.h.b16 %v1020
    %v1798 = vunpack.c.l.b16 %v1021
    %v1799 = vunpack.c.h.b16 %v1021
    %v1800 = vunpack.c.l.b16 %v1022
    %v1801 = vunpack.c.h.b16 %v1022
    %v1802 = vunpack.c.l.b16 %v1023
    %v1803 = vunpack.c.h.b16 %v1023
    %v1804 = vunpack.c.l.b16 %v1024
    %v1805 = vunpack.c.h.b16 %v1024
    %v1806 = vunpack.c.l.b16 %v1025
    %v1807 = vunpack.c.h.b16 %v1025
    %v1808 = vunpack.c.l.b16 %v1026
    %v1809 = vunpack.c.h.b16 %v1026
    %v1810 = vunpack.c.l.b16 %v1027
    %v1811 = vunpack.c.h.b16 %v1027
    %v1812 = vunpack.c.l.b16 %v1028
    %v1813 = vunpack.c.h.b16 %v1028
    %v1814 = vunpack.c.l.b16 %v1029
    %v1815 = vunpack.c.h.b16 %v1029
    %v1816 = vunpack.c.l.b16 %v1030
    %v1817 = vunpack.c.h.b16 %v1030
    %v1818 = vunpack.c.l.b16 %v1031
    %v1819 = vunpack.c.h.b16 %v1031
    %v1820 = vunpack.c.l.b16 %v1032
    %v1821 = vunpack.c.h.b16 %v1032
    %v1822 = vunpack.c.l.b16 %v1033
    %v1823 = vunpack.c.h.b16 %v1033
    %v1824 = vunpack.c.l.b16 %v1034
    %v1825 = vunpack.c.h.b16 %v1034
    %v1826 = vunpack.c.l.b16 %v1035
    %v1827 = vunpack.c.h.b16 %v1035
    %v1828 = vunpack.c.l.b16 %v1036
    %v1829 = vunpack.c.h.b16 %v1036
    %v1830 = vunpack.c.l.b16 %v1037
    %v1831 = vunpack.c.h.b16 %v1037
    %v1832 = vunpack.c.l.b16 %v1038
    %v1833 = vunpack.c.h.b16 %v1038
    %v1834 = vunpack.c.l.b16 %v1039
    %v1835 = vunpack.c.h.b16 %v1039
    %v1836 = vunpack.c.l.b16 %v1040
    %v1837 = vunpack.c.h.b16 %v1040
    %v1838 = vunpack.c.l.b16 %v1041
    %v1839 = vunpack.c.h.b16 %v1041
    %v1840 = vunpack.c.l.b16 %v1042
    %v1841 = vunpack.c.h.b16 %v1042
    %v1842 = vunpack.c.l.b16 %v1043
    %v1843 = vunpack.c.h.b16 %v1043
    %v1844 = vunpack.c.l.b16 %v1044
    %v1845 = vunpack.c.h.b16 %v1044
    %v1846 = vunpack.c.l.b16 %v1045
    %v1847 = vunpack.c.h.b16 %v1045
    %v1848 = vunpack.c.l.b16 %v1046
    %v1849 = vunpack.c.h.b16 %v1046
    %v1850 = vunpack.c.l.b16 %v1047
    %v1851 = vunpack.c.h.b16 %v1047
    %v1852 = vunpack.c.l.b16 %v1048
    %v1853 = vunpack.c.h.b16 %v1048
    %v1854 = vunpack.c.l.b16 %v1049
    %v1855 = vunpack.c.h.b16 %v1049
    %v1856 = vunpack.c.l.b16 %v1050
    %v1857 = vunpack.c.h.b16 %v1050
    %v1858 = vunpack.c.l.b16 %v1051
    %v1859 = vunpack.c.h.b16 %v1051
    %v1860 = vunpack.c.l.b16 %v1052
    %v1861 = vunpack.c.h.b16 %v1052
    %v1862 = vunpack.c.l.b16 %v1053
    %v1863 = vunpack.c.h.b16 %v1053
    %v1864 = vpack.c.b16 %v1360, %v1352
    %v1865 = vpack.c.b16 %v1361, %v1353
    %v1866 = vpack.c.b16 %v1362, %v1354
    %v1867 = vpack.c.b16 %v1363, %v1355
    %v1868 = vpack.c.b16 %v1364, %v1356
    %v1869 = vpack.c.b16 %v1365, %v1357
    %v1870 = vpack.c.b16 %v1366, %v1358
    %v1871 = vpack.c.b16 %v1367, %v1359
    %v1872 = vpack.c.b16 %v1376, %v1368
    %v1873 = vpack.c.b16 %v1377, %v1369
    %v1874 = vpack.c.b16 %v1378, %v1370
    %v1875 = vpack.c.b16 %v1379, %v1371
    %v1876 = vpack.c.b16 %v1380, %v1372
    %v1877 = vpack.c.b16 %v1381, %v1373
    %v1878 = vpack.c.b16 %v1382, %v1374
    %v1879 = vpack.c.b16 %v1383, %v1375
    %v1880 = vpack.c.b16 %v1392, %v1384
    %v1881 = vpack.c.b16 %v1393, %v1385
    %v1882 = vpack.c.b16 %v1394, %v1386
    %v1883 = vpack.c.b16 %v1395, %v1387
    %v1884 = vpack.c.b16 %v1396, %v1388
    %v1885 = vpack.c.b16 %v1397, %v1389
    %v1886 = vpack.c.b16 %v1398, %v1390
    %v1887 = vpack.c.b16 %v1399, %v1391
    %v1888 = vpack.c.b16 %v1408, %v1400
    %v1889 = vpack.c.b16 %v1409, %v1401
    %v1890 = vpack.c.b16 %v1410, %v1402
    %v1891 = vpack.c.b16 %v1411, %v1403
    %v1892 = vpack.c.b16 %v1412, %v1404
    %v1893 = vpack.c.b16 %v1413, %v1405
    %v1894 = vpack.c.b16 %v1414, %v1406
    %v1895 = vpack.c.b16 %v1415, %v1407
    %v1896 = vpack.c.b16 %v1424, %v1416
    %v1897 = vpack.c.b16 %v1425, %v1417
    %v1898 = vpack.c.b16 %v1426, %v1418
    %v1899 = vpack.c.b16 %v1427, %v1419
    %v1900 = vpack.c.b16 %v1428, %v1420
    %v1901 = vpack.c.b16 %v1429, %v1421
    %v1902 = vpack.c.b16 %v1430, %v1422
    %v1903 = vpack.c.b16 %v1431, %v1423
    %v1904 = vpack.c.b16 %v1440, %v1432
    %v1905 = vpack.c.b16 %v1441, %v1433
    %v1906 = vpack.c.b16 %v1442, %v1434
    %v1907 = vpack.c.b16 %v1443, %v1435
    %v1908 = vpack.c.b16 %v1444, %v1436
    %v1909 = vpack.c.b16 %v1445, %v1437
    %v1910 = vpack.c.b16 %v1446, %v1438
    %v1911 = vpack.c.b16 %v1447, %v1439
    %v1912 = vpack.c.b16 %v1456, %v1448
    %v1913 = vpack.c.b16 %v1457, %v1449
    %v1914 = vpack.c.b16 %v1458, %v1450
    %v1915 = vpack.c.b16 %v1459, %v1451
    %v1916 = vpack.c.b16 %v1460, %v1452
    %v1917 = vpack.c.b16 %v1461, %v1453
    %v1918 = vpack.c.b16 %v1462, %v1454
    %v1919 = vpack.c.b16 %v1463, %v1455
    %v1920 = vpack.c.b16 %v1472, %v1464
    %v1921 = vpack.c.b16 %v1473, %v1465
    %v1922 = vpack.c.b16 %v1474, %v1466
    %v1923 = vpack.c.b16 %v1475, %v1467
    %v1924 = vpack.c.b16 %v1476, %v1468
    %v1925 = vpack.c.b16 %v1477, %v1469
    %v1926 = vpack.c.b16 %v1478, %v1470
    %v1927 = vpack.c.b16 %v1479, %v1471
    %v1928 = vpack.c.b16 %v1488, %v1480
    %v1929 = vpack.c.b16 %v1489, %v1481
    %v1930 = vpack.c.b16 %v1490, %v1482
    %v1931 = vpack.c.b16 %v1491, %v1483
    %v1932 = vpack.c.b16 %v1492, %v1484
    %v1933 = vpack.c.b16 %v1493, %v1485
    %v1934 = vpack.c.b16 %v1494, %v1486
    %v1935 = vpack.c.b16 %v1495, %v1487
    %v1936 = vpack.c.b16 %v1504, %v1496
    %v1937 = vpack.c.b16 %v1505, %v1497
    %v1938 = vpack.c.b16 %v1506, %v1498
    %v1939 = vpack.c.b16 %v1507, %v1499
    %v1940 = vpack.c.b16 %v1508, %v1500
    %v1941 = vpack.c.b16 %v1509, %v1501
    %v1942 = vpack.c.b16 %v1510, %v1502
    %v1943 = vpack.c.b16 %v1511, %v1503
    %v1944 = vpack.c.b16 %v1520, %v1512
    %v1945 = vpack.c.b16 %v1521, %v1513
    %v1946 = vpack.c.b16 %v1522, %v1514
    %v1947 = vpack.c.b16 %v1523, %v1515
    %v1948 = vpack.c.b16 %v1524, %v1516
    %v1949 = vpack.c.b16 %v1525, %v1517
    %v1950 = vpack.c.b16 %v1526, %v1518
    %v1951 = vpack.c.b16 %v1527, %v1519
    %v1952 = vpack.c.b16 %v1536, %v1528
    %v1953 = vpack.c.b16 %v1537, %v1529
    %v1954 = vpack.c.b16 %v1538, %v1530
    %v1955 = vpack.c.b16 %v1539, %v1531
    %v1956 = vpack.c.b16 %v1540, %v1532
    %v1957 = vpack.c.b16 %v1541, %v1533
    %v1958 = vpack.c.b16 %v1542, %v1534
    %v1959 = vpack.c.b16 %v1543, %v1535
    %v1960 = vpack.c.b16 %v1552, %v1544
    %v1961 = vpack.c.b16 %v1553, %v1545
    %v1962 = vpack.c.b16 %v1554, %v1546
    %v1963 = vpack.c.b16 %v1555, %v1547
    %v1964 = vpack.c.b16 %v1556, %v1548
    %v1965 = vpack.c.b16 %v1557, %v1549
    %v1966 = vpack.c.b16 %v1558, %v1550
    %v1967 = vpack.c.b16 %v1559, %v1551
    %v1968 = vpack.c.b16 %v1568, %v1560
    %v1969 = vpack.c.b16 %v1569, %v1561
    %v1970 = vpack.c.b16 %v1570, %v1562
    %v1971 = vpack.c.b16 %v1571, %v1563
    %v1972 = vpack.c.b16 %v1572, %v1564
    %v1973 = vpack.c.b16 %v1573, %v1565
    %v1974 = vpack.c.b16 %v1574, %v1566
    %v1975 = vpack.c.b16 %v1575, %v1567
    %v1976 = vpack.c.b16 %v1584, %v1576
    %v1977 = vpack.c.b16 %v1585, %v1577
    %v1978 = vpack.c.b16 %v1586, %v1578
    %v1979 = vpack.c.b16 %v1587, %v1579
    %v1980 = vpack.c.b16 %v1588, %v1580
    %v1981 = vpack.c.b16 %v1589, %v1581
    %v1982 = vpack.c.b16 %v1590, %v1582
    %v1983 = vpack.c.b16 %v1591, %v1583
    %v1984 = vpack.c.b16 %v1600, %v1592
    %v1985 = vpack.c.b16 %v1601, %v1593
    %v1986 = vpack.c.b16 %v1602, %v1594
    %v1987 = vpack.c.b16 %v1603, %v1595
    %v1988 = vpack.c.b16 %v1604, %v1596
    %v1989 = vpack.c.b16 %v1605, %v1597
    %v1990 = vpack.c.b16 %v1606, %v1598
    %v1991 = vpack.c.b16 %v1607, %v1599
    %v1992 = vpack.c.b16 %v1616, %v1608
    %v1993 = vpack.c.b16 %v1617, %v1609
    %v1994 = vpack.c.b16 %v1618, %v1610
    %v1995 = vpack.c.b16 %v1619, %v1611
    %v1996 = vpack.c.b16 %v1620, %v1612
    %v1997 = vpack.c.b16 %v1621, %v1613
    %v1998 = vpack.c.b16 %v1622, %v1614
    %v1999 = vpack.c.b16 %v1623, %v1615
    %v2000 = vpack.c.b16 %v1632, %v1624
    %v2001 = vpack.c.b16 %v1633, %v1625
    %v2002 = vpack.c.b16 %v1634, %v1626
    %v2003 = vpack.c.b16 %v1635, %v1627
    %v2004 = vpack.c.b16 %v1636, %v1628
    %v2005 = vpack.c.b16 %v1637, %v1629
    %v2006 = vpack.c.b16 %v1638, %v1630
    %v2007 = vpack.c.b16 %v1639, %v1631
    %v2008 = vpack.c.b16 %v1648, %v1640
    %v2009 = vpack.c.b16 %v1649, %v1641
    %v2010 = vpack.c.b16 %v1650, %v1642
    %v2011 = vpack.c.b16 %v1651, %v1643
    %v2012 = vpack.c.b16 %v1652, %v1644
    %v2013 = vpack.c.b16 %v1653, %v1645
    %v2014 = vpack.c.b16 %v1654, %v1646
    %v2015 = vpack.c.b16 %v1655, %v1647
    %v2016 = vpack.c.b16 %v1664, %v1656
    %v2017 = vpack.c.b16 %v1665, %v1657
    %v2018 = vpack.c.b16 %v1666, %v1658
    %v2019 = vpack.c.b16 %v1667, %v1659
    %v2020 = vpack.c.b16 %v1668, %v1660
    %v2021 = vpack.c.b16 %v1669, %v1661
    %v2022 = vpack.c.b16 %v1670, %v1662
    %v2023 = vpack.c.b16 %v1671, %v1663
    %v2024 = vpack.c.b16 %v1680, %v1672
    %v2025 = vpack.c.b16 %v1681, %v1673
    %v2026 = vpack.c.b16 %v1682, %v1674
    %v2027 = vpack.c.b16 %v1683, %v1675
    %v2028 = vpack.c.b16 %v1684, %v1676
    %v2029 = vpack.c.b16 %v1685, %v1677
    %v2030 = vpack.c.b16 %v1686, %v1678
    %v2031 = vpack.c.b16 %v1687, %v1679
    %v2032 = vpack.c.b16 %v1696, %v1688
    %v2033 = vpack.c.b16 %v1697, %v1689
    %v2034 = vpack.c.b16 %v1698, %v1690
    %v2035 = vpack.c.b16 %v1699, %v1691
    %v2036 = vpack.c.b16 %v1700, %v1692
    %v2037 = vpack.c.b16 %v1701, %v1693
    %v2038 = vpack.c.b16 %v1702, %v1694
    %v2039 = vpack.c.b16 %v1703, %v1695
    %v2040 = vpack.c.b16 %v1712, %v1704
    %v2041 = vpack.c.b16 %v1713, %v1705
    %v2042 = vpack.c.b16 %v1714, %v1706
    %v2043 = vpack.c.b16 %v1715, %v1707
    %v2044 = vpack.c.b16 %v1716, %v1708
    %v2045 = vpack.c.b16 %v1717, %v1709
    %v2046 = vpack.c.b16 %v1718, %v1710
    %v2047 = vpack.c.b16 %v1719, %v1711
    %v2048 = vpack.c.b16 %v1728, %v1720
    %v2049 = vpack.c.b16 %v1729, %v1721
    %v2050 = vpack.c.b16 %v1730, %v1722
    %v2051 = vpack.c.b16 %v1731, %v1723
    %v2052 = vpack.c.b16 %v1732, %v1724
    %v2053 = vpack.c.b16 %v1733, %v1725
    %v2054 = vpack.c.b16 %v1734, %v1726
    %v2055 = vpack.c.b16 %v1735, %v1727
    %v2056 = vpack.c.b16 %v1744, %v1736
    %v2057 = vpack.c.b16 %v1745, %v1737
    %v2058 = vpack.c.b16 %v1746, %v1738
    %v2059 = vpack.c.b16 %v1747, %v1739
    %v2060 = vpack.c.b16 %v1748, %v1740
    %v2061 = vpack.c.b16 %v1749, %v1741
    %v2062 = vpack.c.b16 %v1750, %v1742
    %v2063 = vpack.c.b16 %v1751, %v1743
    %v2064 = vpack.c.b16 %v1760, %v1752
    %v2065 = vpack.c.b16 %v1761, %v1753
    %v2066 = vpack.c.b16 %v1762, %v1754
    %v2067 = vpack.c.b16 %v1763, %v1755
    %v2068 = vpack.c.b16 %v1764, %v1756
    %v2069 = vpack.c.b16 %v1765, %v1757
    %v2070 = vpack.c.b16 %v1766, %v1758
    %v2071 = vpack.c.b16 %v1767, %v1759
    %v2072 = vpack.c.b16 %v1776, %v1768
    %v2073 = vpack.c.b16 %v1777, %v1769
    %v2074 = vpack.c.b16 %v1778, %v1770
    %v2075 = vpack.c.b16 %v1779, %v1771
    %v2076 = vpack.c.b16 %v1780, %v1772
    %v2077 = vpack.c.b16 %v1781, %v1773
    %v2078 = vpack.c.b16 %v1782, %v1774
    %v2079 = vpack.c.b16 %v1783, %v1775
    %v2080 = vpack.c.b16 %v1792, %v1784
    %v2081 = vpack.c.b16 %v1793, %v1785
    %v2082 = vpack.c.b16 %v1794, %v1786
    %v2083 = vpack.c.b16 %v1795, %v1787
    %v2084 = vpack.c.b16 %v1796, %v1788
    %v2085 = vpack.c.b16 %v1797, %v1789
    %v2086 = vpack.c.b16 %v1798, %v1790
    %v2087 = vpack.c.b16 %v1799, %v1791
    %v2088 = vpack.c.b16 %v1808, %v1800
    %v2089 = vpack.c.b16 %v1809, %v1801
    %v2090 = vpack.c.b16 %v1810, %v1802
    %v2091 = vpack.c.b16 %v1811, %v1803
    %v2092 = vpack.c.b16 %v1812, %v1804
    %v2093 = vpack.c.b16 %v1813, %v1805
    %v2094 = vpack.c.b16 %v1814, %v1806
    %v2095 = vpack.c.b16 %v1815, %v1807
    %v2096 = vpack.c.b16 %v1824, %v1816
    %v2097 = vpack.c.b16 %v1825, %v1817
    %v2098 = vpack.c.b16 %v1826, %v1818
    %v2099 = vpack.c.b16 %v1827, %v1819
    %v2100 = vpack.c.b16 %v1828, %v1820
    %v2101 = vpack.c.b16 %v1829, %v1821
    %v2102 = vpack.c.b16 %v1830, %v1822
    %v2103 = vpack.c.b16 %v1831, %v1823
    %v2104 = vpack.c.b16 %v1840, %v1832
    %v2105 = vpack.c.b16 %v1841, %v1833
    %v2106 = vpack.c.b16 %v1842, %v1834
    %v2107 = vpack.c.b16 %v1843, %v1835
    %v2108 = vpack.c.b16 %v1844, %v1836
    %v2109 = vpack.c.b16 %v1845, %v1837
    %v2110 = vpack.c.b16 %v1846, %v1838
    %v2111 = vpack.c.b16 %v1847, %v1839
    %v2112 = vpack.c.b16 %v1856, %v1848
    %v2113 = vpack.c.b16 %v1857, %v1849
    %v2114 = vpack.c.b16 %v1858, %v1850
    %v2115 = vpack.c.b16 %v1859, %v1851
    %v2116 = vpack.c.b16 %v1860, %v1852
    %v2117 = vpack.c.b16 %v1861, %v1853
    %v2118 = vpack.c.b16 %v1862, %v1854
    %v2119 = vpack.c.b16 %v1863, %v1855
    %2376 = vmatprep.subr.bf16.mxu0 %v1865
    %2377 = vmatpush1.bf16.msra.mxu0 %v1864
    %2378 = vmatprep.subr.bf16.mxu0 %v1873
    %2379 = vmatpush1.bf16.msra.mxu0 %v1872
    %2380 = vmatprep.subr.bf16.mxu0 %v1881
    %2381 = vmatpush1.bf16.msra.mxu0 %v1880
    %2382 = vmatprep.subr.bf16.mxu0 %v1889
    %2383 = vmatpush1.bf16.msra.mxu0 %v1888
    %2384 = vmatprep.subr.bf16.mxu0 %v1897
    %2385 = vmatpush1.bf16.msra.mxu0 %v1896
    %2386 = vmatprep.subr.bf16.mxu0 %v1905
    %2387 = vmatpush1.bf16.msra.mxu0 %v1904
    %2388 = vmatprep.subr.bf16.mxu0 %v1913
    %2389 = vmatpush1.bf16.msra.mxu0 %v1912
    %2390 = vmatprep.subr.bf16.mxu0 %v1921
    %2391 = vmatpush1.bf16.msra.mxu0 %v1920
    %2392 = vmatprep.subr.bf16.mxu0 %v1929
    %2393 = vmatpush1.bf16.msra.mxu0 %v1928
    %2394 = vmatprep.subr.bf16.mxu0 %v1937
    %2395 = vmatpush1.bf16.msra.mxu0 %v1936
    %2396 = vmatprep.subr.bf16.mxu0 %v1945
    %2397 = vmatpush1.bf16.msra.mxu0 %v1944
    %2398 = vmatprep.subr.bf16.mxu0 %v1953
    %2399 = vmatpush1.bf16.msra.mxu0 %v1952
    %2400 = vmatprep.subr.bf16.mxu0 %v1961
    %2401 = vmatpush1.bf16.msra.mxu0 %v1960
    %2402 = vmatprep.subr.bf16.mxu0 %v1969
    %2403 = vmatpush1.bf16.msra.mxu0 %v1968
    %2404 = vmatprep.subr.bf16.mxu0 %v1977
    %2405 = vmatpush1.bf16.msra.mxu0 %v1976
    %2406 = vmatprep.subr.bf16.mxu0 %v1985
    %2407 = vmatpush1.bf16.msra.mxu0 %v1984
    %2408 = vmatprep.mubr.bf16.mxu0 %v795
    %2409 = vmatmul.mubr.bf16.gmra.mrb[0].mxu0 %v794
    %v2410 = vpop.f32.mrb[0].mxu0
    %v2411 = vadd.f32 %v1059, %v2410
    %v2412 = vpop.f32.mrb[0].mxu0
    %v2413 = vadd.f32 %v1063, %v2412
    %v2414 = vpop.f32.mrb[0].mxu0
    %v2415 = vpop.f32.mrb[0].mxu0
    %2416 = vdwg.mxu0
    %2417 = vmatprep.subr.bf16.mxu0 %v1993
    %2418 = vmatpush1.bf16.msra.mxu0 %v1992
    %2419 = vmatprep.subr.bf16.mxu0 %v2001
    %2420 = vmatpush1.bf16.msra.mxu0 %v2000
    %2421 = vmatprep.subr.bf16.mxu0 %v2009
    %2422 = vmatpush1.bf16.msra.mxu0 %v2008
    %2423 = vmatprep.subr.bf16.mxu0 %v2017
    %2424 = vmatpush1.bf16.msra.mxu0 %v2016
    %2425 = vmatprep.subr.bf16.mxu0 %v2025
    %2426 = vmatpush1.bf16.msra.mxu0 %v2024
    %2427 = vmatprep.subr.bf16.mxu0 %v2033
    %2428 = vmatpush1.bf16.msra.mxu0 %v2032
    %2429 = vmatprep.subr.bf16.mxu0 %v2041
    %2430 = vmatpush1.bf16.msra.mxu0 %v2040
    %2431 = vmatprep.subr.bf16.mxu0 %v2049
    %2432 = vmatpush1.bf16.msra.mxu0 %v2048
    %2433 = vmatprep.subr.bf16.mxu0 %v2057
    %2434 = vmatpush1.bf16.msra.mxu0 %v2056
    %2435 = vmatprep.subr.bf16.mxu0 %v2065
    %2436 = vmatpush1.bf16.msra.mxu0 %v2064
    %2437 = vmatprep.subr.bf16.mxu0 %v2073
    %2438 = vmatpush1.bf16.msra.mxu0 %v2072
    %2439 = vmatprep.subr.bf16.mxu0 %v2081
    %2440 = vmatpush1.bf16.msra.mxu0 %v2080
    %2441 = vmatprep.subr.bf16.mxu0 %v2089
    %2442 = vmatpush1.bf16.msra.mxu0 %v2088
    %2443 = vmatprep.subr.bf16.mxu0 %v2097
    %2444 = vmatpush1.bf16.msra.mxu0 %v2096
    %2445 = vmatprep.subr.bf16.mxu0 %v2105
    %2446 = vmatpush1.bf16.msra.mxu0 %v2104
    %2447 = vmatprep.subr.bf16.mxu0 %v2113
    %2448 = vmatpush1.bf16.msra.mxu0 %v2112
    %2449 = vmatprep.mubr.bf16.mxu0 %v797
    %2450 = vmatmul.mubr.bf16.gmra.mrb[0].mxu0 %v796
    %v2451 = vpop.f32.mrb[0].mxu0
    %v2452 = vadd.f32 %v2411, %v2451
    %v2453 = vpop.f32.mrb[0].mxu0
    %v2454 = vadd.f32 %v2413, %v2453
    %v2455 = vpop.f32.mrb[0].mxu0
    %v2456 = vpop.f32.mrb[0].mxu0
    %2457 = vdwg.mxu0
    %2458 = vmatprep.subr.bf16.mxu0 %v1867
    %2459 = vmatpush1.bf16.msra.mxu0 %v1866
    %2460 = vmatprep.subr.bf16.mxu0 %v1875
    %2461 = vmatpush1.bf16.msra.mxu0 %v1874
    %2462 = vmatprep.subr.bf16.mxu0 %v1883
    %2463 = vmatpush1.bf16.msra.mxu0 %v1882
    %2464 = vmatprep.subr.bf16.mxu0 %v1891
    %2465 = vmatpush1.bf16.msra.mxu0 %v1890
    %2466 = vmatprep.subr.bf16.mxu0 %v1899
    %2467 = vmatpush1.bf16.msra.mxu0 %v1898
    %2468 = vmatprep.subr.bf16.mxu0 %v1907
    %2469 = vmatpush1.bf16.msra.mxu0 %v1906
    %2470 = vmatprep.subr.bf16.mxu0 %v1915
    %2471 = vmatpush1.bf16.msra.mxu0 %v1914
    %2472 = vmatprep.subr.bf16.mxu0 %v1923
    %2473 = vmatpush1.bf16.msra.mxu0 %v1922
    %2474 = vmatprep.subr.bf16.mxu0 %v1931
    %2475 = vmatpush1.bf16.msra.mxu0 %v1930
    %2476 = vmatprep.subr.bf16.mxu0 %v1939
    %2477 = vmatpush1.bf16.msra.mxu0 %v1938
    %2478 = vmatprep.subr.bf16.mxu0 %v1947
    %2479 = vmatpush1.bf16.msra.mxu0 %v1946
    %2480 = vmatprep.subr.bf16.mxu0 %v1955
    %2481 = vmatpush1.bf16.msra.mxu0 %v1954
    %2482 = vmatprep.subr.bf16.mxu0 %v1963
    %2483 = vmatpush1.bf16.msra.mxu0 %v1962
    %2484 = vmatprep.subr.bf16.mxu0 %v1971
    %2485 = vmatpush1.bf16.msra.mxu0 %v1970
    %2486 = vmatprep.subr.bf16.mxu0 %v1979
    %2487 = vmatpush1.bf16.msra.mxu0 %v1978
    %2488 = vmatprep.subr.bf16.mxu0 %v1987
    %2489 = vmatpush1.bf16.msra.mxu0 %v1986
    %2490 = vmatprep.mubr.bf16.mxu0 %v795
    %2491 = vmatmul.mubr.bf16.gmra.mrb[0].mxu0 %v794
    %v2492 = vpop.f32.mrb[0].mxu0
    %v2493 = vadd.f32 %v1067, %v2492
    %v2494 = vpop.f32.mrb[0].mxu0
    %v2495 = vadd.f32 %v1071, %v2494
    %v2496 = vpop.f32.mrb[0].mxu0
    %v2497 = vpop.f32.mrb[0].mxu0
    %2498 = vdwg.mxu0
    %2499 = vmatprep.subr.bf16.mxu0 %v1995
    %2500 = vmatpush1.bf16.msra.mxu0 %v1994
    %2501 = vmatprep.subr.bf16.mxu0 %v2003
    %2502 = vmatpush1.bf16.msra.mxu0 %v2002
    %2503 = vmatprep.subr.bf16.mxu0 %v2011
    %2504 = vmatpush1.bf16.msra.mxu0 %v2010
    %2505 = vmatprep.subr.bf16.mxu0 %v2019
    %2506 = vmatpush1.bf16.msra.mxu0 %v2018
    %2507 = vmatprep.subr.bf16.mxu0 %v2027
    %2508 = vmatpush1.bf16.msra.mxu0 %v2026
    %2509 = vmatprep.subr.bf16.mxu0 %v2035
    %2510 = vmatpush1.bf16.msra.mxu0 %v2034
    %2511 = vmatprep.subr.bf16.mxu0 %v2043
    %2512 = vmatpush1.bf16.msra.mxu0 %v2042
    %2513 = vmatprep.subr.bf16.mxu0 %v2051
    %2514 = vmatpush1.bf16.msra.mxu0 %v2050
    %2515 = vmatprep.subr.bf16.mxu0 %v2059
    %2516 = vmatpush1.bf16.msra.mxu0 %v2058
    %2517 = vmatprep.subr.bf16.mxu0 %v2067
    %2518 = vmatpush1.bf16.msra.mxu0 %v2066
    %2519 = vmatprep.subr.bf16.mxu0 %v2075
    %2520 = vmatpush1.bf16.msra.mxu0 %v2074
    %2521 = vmatprep.subr.bf16.mxu0 %v2083
    %2522 = vmatpush1.bf16.msra.mxu0 %v2082
    %2523 = vmatprep.subr.bf16.mxu0 %v2091
    %2524 = vmatpush1.bf16.msra.mxu0 %v2090
    %2525 = vmatprep.subr.bf16.mxu0 %v2099
    %2526 = vmatpush1.bf16.msra.mxu0 %v2098
    %2527 = vmatprep.subr.bf16.mxu0 %v2107
    %2528 = vmatpush1.bf16.msra.mxu0 %v2106
    %2529 = vmatprep.subr.bf16.mxu0 %v2115
    %2530 = vmatpush1.bf16.msra.mxu0 %v2114
    %2531 = vmatprep.mubr.bf16.mxu0 %v797
    %2532 = vmatmul.mubr.bf16.gmra.mrb[0].mxu0 %v796
    %v2533 = vpop.f32.mrb[0].mxu0
    %v2534 = vadd.f32 %v2493, %v2533
    %v2535 = vpop.f32.mrb[0].mxu0
    %v2536 = vadd.f32 %v2495, %v2535
    %v2537 = vpop.f32.mrb[0].mxu0
    %v2538 = vpop.f32.mrb[0].mxu0
    %2539 = vdwg.mxu0
    %2540 = vmatprep.subr.bf16.mxu0 %v1869
    %2541 = vmatpush1.bf16.msra.mxu0 %v1868
    %2542 = vmatprep.subr.bf16.mxu0 %v1877
    %2543 = vmatpush1.bf16.msra.mxu0 %v1876
    %2544 = vmatprep.subr.bf16.mxu0 %v1885
    %2545 = vmatpush1.bf16.msra.mxu0 %v1884
    %2546 = vmatprep.subr.bf16.mxu0 %v1893
    %2547 = vmatpush1.bf16.msra.mxu0 %v1892
    %2548 = vmatprep.subr.bf16.mxu0 %v1901
    %2549 = vmatpush1.bf16.msra.mxu0 %v1900
    %2550 = vmatprep.subr.bf16.mxu0 %v1909
    %2551 = vmatpush1.bf16.msra.mxu0 %v1908
    %2552 = vmatprep.subr.bf16.mxu0 %v1917
    %2553 = vmatpush1.bf16.msra.mxu0 %v1916
    %2554 = vmatprep.subr.bf16.mxu0 %v1925
    %2555 = vmatpush1.bf16.msra.mxu0 %v1924
    %2556 = vmatprep.subr.bf16.mxu0 %v1933
    %2557 = vmatpush1.bf16.msra.mxu0 %v1932
    %2558 = vmatprep.subr.bf16.mxu0 %v1941
    %2559 = vmatpush1.bf16.msra.mxu0 %v1940
    %2560 = vmatprep.subr.bf16.mxu0 %v1949
    %2561 = vmatpush1.bf16.msra.mxu0 %v1948
    %2562 = vmatprep.subr.bf16.mxu0 %v1957
    %2563 = vmatpush1.bf16.msra.mxu0 %v1956
    %2564 = vmatprep.subr.bf16.mxu0 %v1965
    %2565 = vmatpush1.bf16.msra.mxu0 %v1964
    %2566 = vmatprep.subr.bf16.mxu0 %v1973
    %2567 = vmatpush1.bf16.msra.mxu0 %v1972
    %2568 = vmatprep.subr.bf16.mxu0 %v1981
    %2569 = vmatpush1.bf16.msra.mxu0 %v1980
    %2570 = vmatprep.subr.bf16.mxu0 %v1989
    %2571 = vmatpush1.bf16.msra.mxu0 %v1988
    %2572 = vmatprep.mubr.bf16.mxu0 %v795
    %2573 = vmatmul.mubr.bf16.gmra.mrb[0].mxu0 %v794
    %v2574 = vpop.f32.mrb[0].mxu0
    %v2575 = vadd.f32 %v1075, %v2574
    %v2576 = vpop.f32.mrb[0].mxu0
    %v2577 = vadd.f32 %v1079, %v2576
    %v2578 = vpop.f32.mrb[0].mxu0
    %v2579 = vpop.f32.mrb[0].mxu0
    %2580 = vdwg.mxu0
    %2581 = vmatprep.subr.bf16.mxu0 %v1997
    %2582 = vmatpush1.bf16.msra.mxu0 %v1996
    %2583 = vmatprep.subr.bf16.mxu0 %v2005
    %2584 = vmatpush1.bf16.msra.mxu0 %v2004
    %2585 = vmatprep.subr.bf16.mxu0 %v2013
    %2586 = vmatpush1.bf16.msra.mxu0 %v2012
    %2587 = vmatprep.subr.bf16.mxu0 %v2021
    %2588 = vmatpush1.bf16.msra.mxu0 %v2020
    %2589 = vmatprep.subr.bf16.mxu0 %v2029
    %2590 = vmatpush1.bf16.msra.mxu0 %v2028
    %2591 = vmatprep.subr.bf16.mxu0 %v2037
    %2592 = vmatpush1.bf16.msra.mxu0 %v2036
    %2593 = vmatprep.subr.bf16.mxu0 %v2045
    %2594 = vmatpush1.bf16.msra.mxu0 %v2044
    %2595 = vmatprep.subr.bf16.mxu0 %v2053
    %2596 = vmatpush1.bf16.msra.mxu0 %v2052
    %2597 = vmatprep.subr.bf16.mxu0 %v2061
    %2598 = vmatpush1.bf16.msra.mxu0 %v2060
    %2599 = vmatprep.subr.bf16.mxu0 %v2069
    %2600 = vmatpush1.bf16.msra.mxu0 %v2068
    %2601 = vmatprep.subr.bf16.mxu0 %v2077
    %2602 = vmatpush1.bf16.msra.mxu0 %v2076
    %2603 = vmatprep.subr.bf16.mxu0 %v2085
    %2604 = vmatpush1.bf16.msra.mxu0 %v2084
    %2605 = vmatprep.subr.bf16.mxu0 %v2093
    %2606 = vmatpush1.bf16.msra.mxu0 %v2092
    %2607 = vmatprep.subr.bf16.mxu0 %v2101
    %2608 = vmatpush1.bf16.msra.mxu0 %v2100
    %2609 = vmatprep.subr.bf16.mxu0 %v2109
    %2610 = vmatpush1.bf16.msra.mxu0 %v2108
    %2611 = vmatprep.subr.bf16.mxu0 %v2117
    %2612 = vmatpush1.bf16.msra.mxu0 %v2116
    %2613 = vmatprep.mubr.bf16.mxu0 %v797
    %2614 = vmatmul.mubr.bf16.gmra.mrb[0].mxu0 %v796
    %v2615 = vpop.f32.mrb[0].mxu0
    %v2616 = vadd.f32 %v2575, %v2615
    %v2617 = vpop.f32.mrb[0].mxu0
    %v2618 = vadd.f32 %v2577, %v2617
    %v2619 = vpop.f32.mrb[0].mxu0
    %v2620 = vpop.f32.mrb[0].mxu0
    %2621 = vdwg.mxu0
    %2622 = vmatprep.subr.bf16.mxu0 %v1871
    %2623 = vmatpush1.bf16.msra.mxu0 %v1870
    %2624 = vmatprep.subr.bf16.mxu0 %v1879
    %2625 = vmatpush1.bf16.msra.mxu0 %v1878
    %2626 = vmatprep.subr.bf16.mxu0 %v1887
    %2627 = vmatpush1.bf16.msra.mxu0 %v1886
    %2628 = vmatprep.subr.bf16.mxu0 %v1895
    %2629 = vmatpush1.bf16.msra.mxu0 %v1894
    %2630 = vmatprep.subr.bf16.mxu0 %v1903
    %2631 = vmatpush1.bf16.msra.mxu0 %v1902
    %2632 = vmatprep.subr.bf16.mxu0 %v1911
    %2633 = vmatpush1.bf16.msra.mxu0 %v1910
    %2634 = vmatprep.subr.bf16.mxu0 %v1919
    %2635 = vmatpush1.bf16.msra.mxu0 %v1918
    %2636 = vmatprep.subr.bf16.mxu0 %v1927
    %2637 = vmatpush1.bf16.msra.mxu0 %v1926
    %2638 = vmatprep.subr.bf16.mxu0 %v1935
    %2639 = vmatpush1.bf16.msra.mxu0 %v1934
    %2640 = vmatprep.subr.bf16.mxu0 %v1943
    %2641 = vmatpush1.bf16.msra.mxu0 %v1942
    %2642 = vmatprep.subr.bf16.mxu0 %v1951
    %2643 = vmatpush1.bf16.msra.mxu0 %v1950
    %2644 = vmatprep.subr.bf16.mxu0 %v1959
    %2645 = vmatpush1.bf16.msra.mxu0 %v1958
    %2646 = vmatprep.subr.bf16.mxu0 %v1967
    %2647 = vmatpush1.bf16.msra.mxu0 %v1966
    %2648 = vmatprep.subr.bf16.mxu0 %v1975
    %2649 = vmatpush1.bf16.msra.mxu0 %v1974
    %2650 = vmatprep.subr.bf16.mxu0 %v1983
    %2651 = vmatpush1.bf16.msra.mxu0 %v1982
    %2652 = vmatprep.subr.bf16.mxu0 %v1991
    %2653 = vmatpush1.bf16.msra.mxu0 %v1990
    %2654 = vmatprep.mubr.bf16.mxu0 %v795
    %2655 = vmatmul.mubr.bf16.gmra.mrb[0].mxu0 %v794
    %v2656 = vpop.f32.mrb[0].mxu0
    %v2657 = vadd.f32 %v1083, %v2656
    %v2658 = vpop.f32.mrb[0].mxu0
    %v2659 = vadd.f32 %v1087, %v2658
    %v2660 = vpop.f32.mrb[0].mxu0
    %v2661 = vpop.f32.mrb[0].mxu0
    %2662 = vdwg.mxu0
    %2663 = vmatprep.subr.bf16.mxu0 %v1999
    %2664 = vmatpush1.bf16.msra.mxu0 %v1998
    %2665 = vmatprep.subr.bf16.mxu0 %v2007
    %2666 = vmatpush1.bf16.msra.mxu0 %v2006
    %2667 = vmatprep.subr.bf16.mxu0 %v2015
    %2668 = vmatpush1.bf16.msra.mxu0 %v2014
    %2669 = vmatprep.subr.bf16.mxu0 %v2023
    %2670 = vmatpush1.bf16.msra.mxu0 %v2022
    %2671 = vmatprep.subr.bf16.mxu0 %v2031
    %2672 = vmatpush1.bf16.msra.mxu0 %v2030
    %2673 = vmatprep.subr.bf16.mxu0 %v2039
    %2674 = vmatpush1.bf16.msra.mxu0 %v2038
    %2675 = vmatprep.subr.bf16.mxu0 %v2047
    %2676 = vmatpush1.bf16.msra.mxu0 %v2046
    %2677 = vmatprep.subr.bf16.mxu0 %v2055
    %2678 = vmatpush1.bf16.msra.mxu0 %v2054
    %2679 = vmatprep.subr.bf16.mxu0 %v2063
    %2680 = vmatpush1.bf16.msra.mxu0 %v2062
    %2681 = vmatprep.subr.bf16.mxu0 %v2071
    %2682 = vmatpush1.bf16.msra.mxu0 %v2070
    %2683 = vmatprep.subr.bf16.mxu0 %v2079
    %2684 = vmatpush1.bf16.msra.mxu0 %v2078
    %2685 = vmatprep.subr.bf16.mxu0 %v2087
    %2686 = vmatpush1.bf16.msra.mxu0 %v2086
    %2687 = vmatprep.subr.bf16.mxu0 %v2095
    %2688 = vmatpush1.bf16.msra.mxu0 %v2094
    %2689 = vmatprep.subr.bf16.mxu0 %v2103
    %2690 = vmatpush1.bf16.msra.mxu0 %v2102
    %2691 = vmatprep.subr.bf16.mxu0 %v2111
    %2692 = vmatpush1.bf16.msra.mxu0 %v2110
    %2693 = vmatprep.subr.bf16.mxu0 %v2119
    %2694 = vmatpush1.bf16.msra.mxu0 %v2118
    %2695 = vmatprep.mubr.bf16.mxu0 %v797
    %2696 = vmatmul.mubr.bf16.gmra.mrb[0].mxu0 %v796
    %v2697 = vpop.f32.mrb[0].mxu0
    %v2698 = vadd.f32 %v2657, %v2697
    %v2699 = vpop.f32.mrb[0].mxu0
    %v2700 = vadd.f32 %v2659, %v2699
    %v2701 = vpop.f32.mrb[0].mxu0
    %v2702 = vpop.f32.mrb[0].mxu0
    %2703 = vdwg.mxu0
    %vm2704 = vcmp.gt.f32.partialorder %v2452, 0.0
    %vm2705 = vcmp.gt.f32.partialorder %v2454, 0.0
    %vm2706 = vcmp.gt.f32.partialorder %v2534, 0.0
    %vm2707 = vcmp.gt.f32.partialorder %v2536, 0.0
    %vm2708 = vcmp.gt.f32.partialorder %v2616, 0.0
    %vm2709 = vcmp.gt.f32.partialorder %v2618, 0.0
    %vm2710 = vcmp.gt.f32.partialorder %v2698, 0.0
    %vm2711 = vcmp.gt.f32.partialorder %v2700, 0.0
    %v2712 = vmul.f32 %v2452, 0.2
    %v2713 = vmul.f32 %v2454, 0.2
    %v2714 = vmul.f32 %v2534, 0.2
    %v2715 = vmul.f32 %v2536, 0.2
    %v2716 = vmul.f32 %v2616, 0.2
    %v2717 = vmul.f32 %v2618, 0.2
    %v2718 = vmul.f32 %v2698, 0.2
    %v2719 = vmul.f32 %v2700, 0.2
    %v2720 = vsel %vm2704, %v2452, %v2712
    %v2721 = vsel %vm2705, %v2454, %v2713
    %v2722 = vsel %vm2706, %v2534, %v2714
    %v2723 = vsel %vm2707, %v2536, %v2715
    %v2724 = vsel %vm2708, %v2616, %v2716
    %v2725 = vsel %vm2709, %v2618, %v2717
    %v2726 = vsel %vm2710, %v2698, %v2718
    %v2727 = vsel %vm2711, %v2700, %v2719
    %v2728 = vpack.c.bf16 %v2720, %v2720
    %v2729 = vpack.c.bf16 %v2721, %v2721
    %v2730 = vpack.c.bf16 %v2722, %v2722
    %v2731 = vpack.c.bf16 %v2723, %v2723
    %v2732 = vpack.c.bf16 %v2724, %v2724
    %v2733 = vpack.c.bf16 %v2725, %v2725
    %v2734 = vpack.c.bf16 %v2726, %v2726
    %v2735 = vpack.c.bf16 %v2727, %v2727
    %v2736 = vld [vmem:[#allocation13] sm:$0xff]
    %v2737 = vld [vmem:[#allocation13 + $0x8] sm:$0xff]
    %v2738 = vld [vmem:[#allocation13 + $0x10] sm:$0xff]
    %v2739 = vld [vmem:[#allocation13 + $0x18] sm:$0xf]
    %v2740 = vld [vmem:[#allocation13 + $0x1c] sm:$0xff]
    %v2741 = vld [vmem:[#allocation13 + $0x24] sm:$0xff]
    %v2742 = vld [vmem:[#allocation13 + $0x2c] sm:$0xff]
    %v2743 = vld [vmem:[#allocation13 + $0x34] sm:$0xf]
    %v2744 = vld [vmem:[#allocation13 + $0x38] sm:$0xff]
    %v2745 = vld [vmem:[#allocation13 + $0x40] sm:$0xff]
    %v2746 = vld [vmem:[#allocation13 + $0x48] sm:$0xff]
    %v2747 = vld [vmem:[#allocation13 + $0x50] sm:$0xf]
    %v2748 = vld [vmem:[#allocation13 + $0x54] sm:$0xff]
    %v2749 = vld [vmem:[#allocation13 + $0x5c] sm:$0xff]
    %v2750 = vld [vmem:[#allocation13 + $0x64] sm:$0xff]
    %v2751 = vld [vmem:[#allocation13 + $0x6c] sm:$0xf]
    %v2752 = vld [vmem:[#allocation13 + $0x70] sm:$0xff]
    %v2753 = vld [vmem:[#allocation13 + $0x78] sm:$0xff]
    %v2754 = vld [vmem:[#allocation13 + $0x80] sm:$0xff]
    %v2755 = vld [vmem:[#allocation13 + $0x88] sm:$0xf]
    %v2756 = vld [vmem:[#allocation13 + $0x8c] sm:$0xff]
    %v2757 = vld [vmem:[#allocation13 + $0x94] sm:$0xff]
    %v2758 = vld [vmem:[#allocation13 + $0x9c] sm:$0xff]
    %v2759 = vld [vmem:[#allocation13 + $0xa4] sm:$0xf]
    %v2760 = vld [vmem:[#allocation13 + $0xa8] sm:$0xff]
    %v2761 = vld [vmem:[#allocation13 + $0xb0] sm:$0xff]
    %v2762 = vld [vmem:[#allocation13 + $0xb8] sm:$0xff]
    %v2763 = vld [vmem:[#allocation13 + $0xc0] sm:$0xf]
    %v2764 = vld [vmem:[#allocation13 + $0xc4] sm:$0xff]
    %v2765 = vld [vmem:[#allocation13 + $0xcc] sm:$0xff]
    %v2766 = vld [vmem:[#allocation13 + $0xd4] sm:$0xff]
    %v2767 = vld [vmem:[#allocation13 + $0xdc] sm:$0xf]
    %v2768 = vld [vmem:[#allocation13 + $0xe0] sm:$0xff]
    %v2769 = vld [vmem:[#allocation13 + $0xe8] sm:$0xff]
    %v2770 = vld [vmem:[#allocation13 + $0xf0] sm:$0xff]
    %v2771 = vld [vmem:[#allocation13 + $0xf8] sm:$0xf]
    %v2772 = vld [vmem:[#allocation13 + $0xfc] sm:$0xff]
    %v2773 = vld [vmem:[#allocation13 + $0x104] sm:$0xff]
    %v2774 = vld [vmem:[#allocation13 + $0x10c] sm:$0xff]
    %v2775 = vld [vmem:[#allocation13 + $0x114] sm:$0xf]
    %v2776 = vld [vmem:[#allocation13 + $0x118] sm:$0xff]
    %v2777 = vld [vmem:[#allocation13 + $0x120] sm:$0xff]
    %v2778 = vld [vmem:[#allocation13 + $0x128] sm:$0xff]
    %v2779 = vld [vmem:[#allocation13 + $0x130] sm:$0xf]
    %v2780 = vld [vmem:[#allocation13 + $0x134] sm:$0xff]
    %v2781 = vld [vmem:[#allocation13 + $0x13c] sm:$0xff]
    %v2782 = vld [vmem:[#allocation13 + $0x144] sm:$0xff]
    %v2783 = vld [vmem:[#allocation13 + $0x14c] sm:$0xf]
    %v2784 = vld [vmem:[#allocation13 + $0x150] sm:$0xff]
    %v2785 = vld [vmem:[#allocation13 + $0x158] sm:$0xff]
    %v2786 = vld [vmem:[#allocation13 + $0x160] sm:$0xff]
    %v2787 = vld [vmem:[#allocation13 + $0x168] sm:$0xf]
    %v2788 = vld [vmem:[#allocation13 + $0x16c] sm:$0xff]
    %v2789 = vld [vmem:[#allocation13 + $0x174] sm:$0xff]
    %v2790 = vld [vmem:[#allocation13 + $0x17c] sm:$0xff]
    %v2791 = vld [vmem:[#allocation13 + $0x184] sm:$0xf]
    %v2792 = vld [vmem:[#allocation13 + $0x188] sm:$0xff]
    %v2793 = vld [vmem:[#allocation13 + $0x190] sm:$0xff]
    %v2794 = vld [vmem:[#allocation13 + $0x198] sm:$0xff]
    %v2795 = vld [vmem:[#allocation13 + $0x1a0] sm:$0xf]
    %v2796 = vld [vmem:[#allocation13 + $0x1a4] sm:$0xff]
    %v2797 = vld [vmem:[#allocation13 + $0x1ac] sm:$0xff]
    %v2798 = vld [vmem:[#allocation13 + $0x1b4] sm:$0xff]
    %v2799 = vld [vmem:[#allocation13 + $0x1bc] sm:$0xf]
    %v2800 = vld [vmem:[#allocation13 + $0x1c0] sm:$0xff]
    %v2801 = vld [vmem:[#allocation13 + $0x1c8] sm:$0xff]
    %v2802 = vld [vmem:[#allocation13 + $0x1d0] sm:$0xff]
    %v2803 = vld [vmem:[#allocation13 + $0x1d8] sm:$0xf]
    %v2804 = vld [vmem:[#allocation13 + $0x1dc] sm:$0xff]
    %v2805 = vld [vmem:[#allocation13 + $0x1e4] sm:$0xff]
    %v2806 = vld [vmem:[#allocation13 + $0x1ec] sm:$0xff]
    %v2807 = vld [vmem:[#allocation13 + $0x1f4] sm:$0xf]
    %v2808 = vld [vmem:[#allocation13 + $0x1f8] sm:$0xff]
    %v2809 = vld [vmem:[#allocation13 + $0x200] sm:$0xff]
    %v2810 = vld [vmem:[#allocation13 + $0x208] sm:$0xff]
    %v2811 = vld [vmem:[#allocation13 + $0x210] sm:$0xf]
    %v2812 = vld [vmem:[#allocation13 + $0x214] sm:$0xff]
    %v2813 = vld [vmem:[#allocation13 + $0x21c] sm:$0xff]
    %v2814 = vld [vmem:[#allocation13 + $0x224] sm:$0xff]
    %v2815 = vld [vmem:[#allocation13 + $0x22c] sm:$0xf]
    %v2816 = vld [vmem:[#allocation13 + $0x230] sm:$0xff]
    %v2817 = vld [vmem:[#allocation13 + $0x238] sm:$0xff]
    %v2818 = vld [vmem:[#allocation13 + $0x240] sm:$0xff]
    %v2819 = vld [vmem:[#allocation13 + $0x248] sm:$0xf]
    %v2820 = vld [vmem:[#allocation13 + $0x24c] sm:$0xff]
    %v2821 = vld [vmem:[#allocation13 + $0x254] sm:$0xff]
    %v2822 = vld [vmem:[#allocation13 + $0x25c] sm:$0xff]
    %v2823 = vld [vmem:[#allocation13 + $0x264] sm:$0xf]
    %v2824 = vld [vmem:[#allocation13 + $0x268] sm:$0xff]
    %v2825 = vld [vmem:[#allocation13 + $0x270] sm:$0xff]
    %v2826 = vld [vmem:[#allocation13 + $0x278] sm:$0xff]
    %v2827 = vld [vmem:[#allocation13 + $0x280] sm:$0xf]
    %v2828 = vld [vmem:[#allocation13 + $0x284] sm:$0xff]
    %v2829 = vld [vmem:[#allocation13 + $0x28c] sm:$0xff]
    %v2830 = vld [vmem:[#allocation13 + $0x294] sm:$0xff]
    %v2831 = vld [vmem:[#allocation13 + $0x29c] sm:$0xf]
    %v2832 = vld [vmem:[#allocation13 + $0x2a0] sm:$0xff]
    %v2833 = vld [vmem:[#allocation13 + $0x2a8] sm:$0xff]
    %v2834 = vld [vmem:[#allocation13 + $0x2b0] sm:$0xff]
    %v2835 = vld [vmem:[#allocation13 + $0x2b8] sm:$0xf]
    %v2836 = vld [vmem:[#allocation13 + $0x2bc] sm:$0xff]
    %v2837 = vld [vmem:[#allocation13 + $0x2c4] sm:$0xff]
    %v2838 = vld [vmem:[#allocation13 + $0x2cc] sm:$0xff]
    %v2839 = vld [vmem:[#allocation13 + $0x2d4] sm:$0xf]
    %v2840 = vld [vmem:[#allocation13 + $0x2d8] sm:$0xff]
    %v2841 = vld [vmem:[#allocation13 + $0x2e0] sm:$0xff]
    %v2842 = vld [vmem:[#allocation13 + $0x2e8] sm:$0xff]
    %v2843 = vld [vmem:[#allocation13 + $0x2f0] sm:$0xf]
    %v2844 = vld [vmem:[#allocation13 + $0x2f4] sm:$0xff]
    %v2845 = vld [vmem:[#allocation13 + $0x2fc] sm:$0xff]
    %v2846 = vld [vmem:[#allocation13 + $0x304] sm:$0xff]
    %v2847 = vld [vmem:[#allocation13 + $0x30c] sm:$0xf]
    %v2848 = vld [vmem:[#allocation13 + $0x310] sm:$0xff]
    %v2849 = vld [vmem:[#allocation13 + $0x318] sm:$0xff]
    %v2850 = vld [vmem:[#allocation13 + $0x320] sm:$0xff]
    %v2851 = vld [vmem:[#allocation13 + $0x328] sm:$0xf]
    %v2852 = vld [vmem:[#allocation13 + $0x32c] sm:$0xff]
    %v2853 = vld [vmem:[#allocation13 + $0x334] sm:$0xff]
    %v2854 = vld [vmem:[#allocation13 + $0x33c] sm:$0xff]
    %v2855 = vld [vmem:[#allocation13 + $0x344] sm:$0xf]
    %v2856 = vld [vmem:[#allocation13 + $0x348] sm:$0xff]
    %v2857 = vld [vmem:[#allocation13 + $0x350] sm:$0xff]
    %v2858 = vld [vmem:[#allocation13 + $0x358] sm:$0xff]
    %v2859 = vld [vmem:[#allocation13 + $0x360] sm:$0xf]
    %v2860 = vld [vmem:[#allocation13 + $0x364] sm:$0xff]
    %v2861 = vld [vmem:[#allocation13 + $0x36c] sm:$0xff]
    %v2862 = vld [vmem:[#allocation13 + $0x374] sm:$0xff]
    %v2863 = vld [vmem:[#allocation13 + $0x37c] sm:$0xf]
    %v2864 = vld [vmem:[#allocation13 + $0x380] sm:$0xff]
    %v2865 = vld [vmem:[#allocation13 + $0x388] sm:$0xff]
    %v2866 = vld [vmem:[#allocation13 + $0x390] sm:$0xff]
    %v2867 = vld [vmem:[#allocation13 + $0x398] sm:$0xf]
    %v2868 = vld [vmem:[#allocation13 + $0x39c] sm:$0xff]
    %v2869 = vld [vmem:[#allocation13 + $0x3a4] sm:$0xff]
    %v2870 = vld [vmem:[#allocation13 + $0x3ac] sm:$0xff]
    %v2871 = vld [vmem:[#allocation13 + $0x3b4] sm:$0xf]
    %v2872 = vld [vmem:[#allocation13 + $0x3b8] sm:$0xff]
    %v2873 = vld [vmem:[#allocation13 + $0x3c0] sm:$0xff]
    %v2874 = vld [vmem:[#allocation13 + $0x3c8] sm:$0xff]
    %v2875 = vld [vmem:[#allocation13 + $0x3d0] sm:$0xf]
    %v2876 = vld [vmem:[#allocation13 + $0x3d4] sm:$0xff]
    %v2877 = vld [vmem:[#allocation13 + $0x3dc] sm:$0xff]
    %v2878 = vld [vmem:[#allocation13 + $0x3e4] sm:$0xff]
    %v2879 = vld [vmem:[#allocation13 + $0x3ec] sm:$0xf]
    %v2880 = vld [vmem:[#allocation13 + $0x3f0] sm:$0xff]
    %v2881 = vld [vmem:[#allocation13 + $0x3f8] sm:$0xff]
    %v2882 = vld [vmem:[#allocation13 + $0x400] sm:$0xff]
    %v2883 = vld [vmem:[#allocation13 + $0x408] sm:$0xf]
    %v2884 = vld [vmem:[#allocation13 + $0x40c] sm:$0xff]
    %v2885 = vld [vmem:[#allocation13 + $0x414] sm:$0xff]
    %v2886 = vld [vmem:[#allocation13 + $0x41c] sm:$0xff]
    %v2887 = vld [vmem:[#allocation13 + $0x424] sm:$0xf]
    %v2888 = vld [vmem:[#allocation13 + $0x428] sm:$0xff]
    %v2889 = vld [vmem:[#allocation13 + $0x430] sm:$0xff]
    %v2890 = vld [vmem:[#allocation13 + $0x438] sm:$0xff]
    %v2891 = vld [vmem:[#allocation13 + $0x440] sm:$0xf]
    %v2892 = vld [vmem:[#allocation13 + $0x444] sm:$0xff]
    %v2893 = vld [vmem:[#allocation13 + $0x44c] sm:$0xff]
    %v2894 = vld [vmem:[#allocation13 + $0x454] sm:$0xff]
    %v2895 = vld [vmem:[#allocation13 + $0x45c] sm:$0xf]
    %v2896 = vld [vmem:[#allocation13 + $0x460] sm:$0xff]
    %v2897 = vld [vmem:[#allocation13 + $0x468] sm:$0xff]
    %v2898 = vld [vmem:[#allocation13 + $0x470] sm:$0xff]
    %v2899 = vld [vmem:[#allocation13 + $0x478] sm:$0xf]
    %v2900 = vld [vmem:[#allocation13 + $0x47c] sm:$0xff]
    %v2901 = vld [vmem:[#allocation13 + $0x484] sm:$0xff]
    %v2902 = vld [vmem:[#allocation13 + $0x48c] sm:$0xff]
    %v2903 = vld [vmem:[#allocation13 + $0x494] sm:$0xf]
    %v2904 = vld [vmem:[#allocation13 + $0x498] sm:$0xff]
    %v2905 = vld [vmem:[#allocation13 + $0x4a0] sm:$0xff]
    %v2906 = vld [vmem:[#allocation13 + $0x4a8] sm:$0xff]
    %v2907 = vld [vmem:[#allocation13 + $0x4b0] sm:$0xf]
    %v2908 = vld [vmem:[#allocation13 + $0x4b4] sm:$0xff]
    %v2909 = vld [vmem:[#allocation13 + $0x4bc] sm:$0xff]
    %v2910 = vld [vmem:[#allocation13 + $0x4c4] sm:$0xff]
    %v2911 = vld [vmem:[#allocation13 + $0x4cc] sm:$0xf]
    %v2912 = vld [vmem:[#allocation13 + $0x4d0] sm:$0xff]
    %v2913 = vld [vmem:[#allocation13 + $0x4d8] sm:$0xff]
    %v2914 = vld [vmem:[#allocation13 + $0x4e0] sm:$0xff]
    %v2915 = vld [vmem:[#allocation13 + $0x4e8] sm:$0xf]
    %v2916 = vld [vmem:[#allocation13 + $0x4ec] sm:$0xff]
    %v2917 = vld [vmem:[#allocation13 + $0x4f4] sm:$0xff]
    %v2918 = vld [vmem:[#allocation13 + $0x4fc] sm:$0xff]
    %v2919 = vld [vmem:[#allocation13 + $0x504] sm:$0xf]
    %v2920 = vld [vmem:[#allocation13 + $0x508] sm:$0xff]
    %v2921 = vld [vmem:[#allocation13 + $0x510] sm:$0xff]
    %v2922 = vld [vmem:[#allocation13 + $0x518] sm:$0xff]
    %v2923 = vld [vmem:[#allocation13 + $0x520] sm:$0xf]
    %v2924 = vld [vmem:[#allocation13 + $0x524] sm:$0xff]
    %v2925 = vld [vmem:[#allocation13 + $0x52c] sm:$0xff]
    %v2926 = vld [vmem:[#allocation13 + $0x534] sm:$0xff]
    %v2927 = vld [vmem:[#allocation13 + $0x53c] sm:$0xf]
    %v2928 = vld [vmem:[#allocation13 + $0x540] sm:$0xff]
    %v2929 = vld [vmem:[#allocation13 + $0x548] sm:$0xff]
    %v2930 = vld [vmem:[#allocation13 + $0x550] sm:$0xff]
    %v2931 = vld [vmem:[#allocation13 + $0x558] sm:$0xf]
    %v2932 = vld [vmem:[#allocation13 + $0x55c] sm:$0xff]
    %v2933 = vld [vmem:[#allocation13 + $0x564] sm:$0xff]
    %v2934 = vld [vmem:[#allocation13 + $0x56c] sm:$0xff]
    %v2935 = vld [vmem:[#allocation13 + $0x574] sm:$0xf]
    %v2936 = vld [vmem:[#allocation13 + $0x578] sm:$0xff]
    %v2937 = vld [vmem:[#allocation13 + $0x580] sm:$0xff]
    %v2938 = vld [vmem:[#allocation13 + $0x588] sm:$0xff]
    %v2939 = vld [vmem:[#allocation13 + $0x590] sm:$0xf]
    %v2940 = vld [vmem:[#allocation13 + $0x594] sm:$0xff]
    %v2941 = vld [vmem:[#allocation13 + $0x59c] sm:$0xff]
    %v2942 = vld [vmem:[#allocation13 + $0x5a4] sm:$0xff]
    %v2943 = vld [vmem:[#allocation13 + $0x5ac] sm:$0xf]
    %v2944 = vld [vmem:[#allocation13 + $0x5b0] sm:$0xff]
    %v2945 = vld [vmem:[#allocation13 + $0x5b8] sm:$0xff]
    %v2946 = vld [vmem:[#allocation13 + $0x5c0] sm:$0xff]
    %v2947 = vld [vmem:[#allocation13 + $0x5c8] sm:$0xf]
    %v2948 = vld [vmem:[#allocation13 + $0x5cc] sm:$0xff]
    %v2949 = vld [vmem:[#allocation13 + $0x5d4] sm:$0xff]
    %v2950 = vld [vmem:[#allocation13 + $0x5dc] sm:$0xff]
    %v2951 = vld [vmem:[#allocation13 + $0x5e4] sm:$0xf]
    %v2952 = vld [vmem:[#allocation13 + $0x5e8] sm:$0xff]
    %v2953 = vld [vmem:[#allocation13 + $0x5f0] sm:$0xff]
    %v2954 = vld [vmem:[#allocation13 + $0x5f8] sm:$0xff]
    %v2955 = vld [vmem:[#allocation13 + $0x600] sm:$0xf]
    %v2956 = vld [vmem:[#allocation13 + $0x604] sm:$0xff]
    %v2957 = vld [vmem:[#allocation13 + $0x60c] sm:$0xff]
    %v2958 = vld [vmem:[#allocation13 + $0x614] sm:$0xff]
    %v2959 = vld [vmem:[#allocation13 + $0x61c] sm:$0xf]
    %v2960 = vld [vmem:[#allocation13 + $0x620] sm:$0xff]
    %v2961 = vld [vmem:[#allocation13 + $0x628] sm:$0xff]
    %v2962 = vld [vmem:[#allocation13 + $0x630] sm:$0xff]
    %v2963 = vld [vmem:[#allocation13 + $0x638] sm:$0xf]
    %v2964 = vld [vmem:[#allocation13 + $0x63c] sm:$0xff]
    %v2965 = vld [vmem:[#allocation13 + $0x644] sm:$0xff]
    %v2966 = vld [vmem:[#allocation13 + $0x64c] sm:$0xff]
    %v2967 = vld [vmem:[#allocation13 + $0x654] sm:$0xf]
    %v2968 = vld [vmem:[#allocation13 + $0x658] sm:$0xff]
    %v2969 = vld [vmem:[#allocation13 + $0x660] sm:$0xff]
    %v2970 = vld [vmem:[#allocation13 + $0x668] sm:$0xff]
    %v2971 = vld [vmem:[#allocation13 + $0x670] sm:$0xf]
    %v2972 = vld [vmem:[#allocation13 + $0x674] sm:$0xff]
    %v2973 = vld [vmem:[#allocation13 + $0x67c] sm:$0xff]
    %v2974 = vld [vmem:[#allocation13 + $0x684] sm:$0xff]
    %v2975 = vld [vmem:[#allocation13 + $0x68c] sm:$0xf]
    %v2976 = vld [vmem:[#allocation13 + $0x690] sm:$0xff]
    %v2977 = vld [vmem:[#allocation13 + $0x698] sm:$0xff]
    %v2978 = vld [vmem:[#allocation13 + $0x6a0] sm:$0xff]
    %v2979 = vld [vmem:[#allocation13 + $0x6a8] sm:$0xf]
    %v2980 = vld [vmem:[#allocation13 + $0x6ac] sm:$0xff]
    %v2981 = vld [vmem:[#allocation13 + $0x6b4] sm:$0xff]
    %v2982 = vld [vmem:[#allocation13 + $0x6bc] sm:$0xff]
    %v2983 = vld [vmem:[#allocation13 + $0x6c4] sm:$0xf]
    %v2984 = vld [vmem:[#allocation13 + $0x6c8] sm:$0xff]
    %v2985 = vld [vmem:[#allocation13 + $0x6d0] sm:$0xff]
    %v2986 = vld [vmem:[#allocation13 + $0x6d8] sm:$0xff]
    %v2987 = vld [vmem:[#allocation13 + $0x6e0] sm:$0xf]
    %v2988 = vld [vmem:[#allocation13 + $0x6e4] sm:$0xff]
    %v2989 = vld [vmem:[#allocation13 + $0x6ec] sm:$0xff]
    %v2990 = vld [vmem:[#allocation13 + $0x6f4] sm:$0xff]
    %v2991 = vld [vmem:[#allocation13 + $0x6fc] sm:$0xf]
    %v2992 = vld [vmem:[#allocation13 + $0x700] sm:$0xff]
    %v2993 = vld [vmem:[#allocation13 + $0x708] sm:$0xff]
    %v2994 = vld [vmem:[#allocation13 + $0x710] sm:$0xff]
    %v2995 = vld [vmem:[#allocation13 + $0x718] sm:$0xf]
    %v2996 = vld [vmem:[#allocation13 + $0x71c] sm:$0xff]
    %v2997 = vld [vmem:[#allocation13 + $0x724] sm:$0xff]
    %v2998 = vld [vmem:[#allocation13 + $0x72c] sm:$0xff]
    %v2999 = vld [vmem:[#allocation13 + $0x734] sm:$0xf]
    %v3000 = vld [vmem:[#allocation13 + $0x738] sm:$0xff]
    %v3001 = vld [vmem:[#allocation13 + $0x740] sm:$0xff]
    %v3002 = vld [vmem:[#allocation13 + $0x748] sm:$0xff]
    %v3003 = vld [vmem:[#allocation13 + $0x750] sm:$0xf]
    %v3004 = vld [vmem:[#allocation13 + $0x754] sm:$0xff]
    %v3005 = vld [vmem:[#allocation13 + $0x75c] sm:$0xff]
    %v3006 = vld [vmem:[#allocation13 + $0x764] sm:$0xff]
    %v3007 = vld [vmem:[#allocation13 + $0x76c] sm:$0xf]
    %v3008 = vld [vmem:[#allocation13 + $0x770] sm:$0xff]
    %v3009 = vld [vmem:[#allocation13 + $0x778] sm:$0xff]
    %v3010 = vld [vmem:[#allocation13 + $0x780] sm:$0xff]
    %v3011 = vld [vmem:[#allocation13 + $0x788] sm:$0xf]
    %v3012 = vld [vmem:[#allocation13 + $0x78c] sm:$0xff]
    %v3013 = vld [vmem:[#allocation13 + $0x794] sm:$0xff]
    %v3014 = vld [vmem:[#allocation13 + $0x79c] sm:$0xff]
    %v3015 = vld [vmem:[#allocation13 + $0x7a4] sm:$0xf]
    %v3016 = vld [vmem:[#allocation13 + $0x7a8] sm:$0xff]
    %v3017 = vld [vmem:[#allocation13 + $0x7b0] sm:$0xff]
    %v3018 = vld [vmem:[#allocation13 + $0x7b8] sm:$0xff]
    %v3019 = vld [vmem:[#allocation13 + $0x7c0] sm:$0xf]
    %v3020 = vld [vmem:[#allocation13 + $0x7c4] sm:$0xff]
    %v3021 = vld [vmem:[#allocation13 + $0x7cc] sm:$0xff]
    %v3022 = vld [vmem:[#allocation13 + $0x7d4] sm:$0xff]
    %v3023 = vld [vmem:[#allocation13 + $0x7dc] sm:$0xf]
    %v3024 = vld [vmem:[#allocation13 + $0x7e0] sm:$0xff]
    %v3025 = vld [vmem:[#allocation13 + $0x7e8] sm:$0xff]
    %v3026 = vld [vmem:[#allocation13 + $0x7f0] sm:$0xff]
    %v3027 = vld [vmem:[#allocation13 + $0x7f8] sm:$0xf]
    %v3028 = vld [vmem:[#allocation13 + $0x7fc] sm:$0xff]
    %v3029 = vld [vmem:[#allocation13 + $0x804] sm:$0xff]
    %v3030 = vld [vmem:[#allocation13 + $0x80c] sm:$0xff]
    %v3031 = vld [vmem:[#allocation13 + $0x814] sm:$0xf]
    %v3032 = vld [vmem:[#allocation13 + $0x818] sm:$0xff]
    %v3033 = vld [vmem:[#allocation13 + $0x820] sm:$0xff]
    %v3034 = vld [vmem:[#allocation13 + $0x828] sm:$0xff]
    %v3035 = vld [vmem:[#allocation13 + $0x830] sm:$0xf]
    %v3036 = vld [vmem:[#allocation13 + $0x834] sm:$0xff]
    %v3037 = vld [vmem:[#allocation13 + $0x83c] sm:$0xff]
    %v3038 = vld [vmem:[#allocation13 + $0x844] sm:$0xff]
    %v3039 = vld [vmem:[#allocation13 + $0x84c] sm:$0xf]
    %v3040 = vld [vmem:[#allocation13 + $0x850] sm:$0xff]
    %v3041 = vld [vmem:[#allocation13 + $0x858] sm:$0xff]
    %v3042 = vld [vmem:[#allocation13 + $0x860] sm:$0xff]
    %v3043 = vld [vmem:[#allocation13 + $0x868] sm:$0xf]
    %v3044 = vld [vmem:[#allocation13 + $0x86c] sm:$0xff]
    %v3045 = vld [vmem:[#allocation13 + $0x874] sm:$0xff]
    %v3046 = vld [vmem:[#allocation13 + $0x87c] sm:$0xff]
    %v3047 = vld [vmem:[#allocation13 + $0x884] sm:$0xf]
    %v3048 = vld [vmem:[#allocation13 + $0x888] sm:$0xff]
    %v3049 = vld [vmem:[#allocation13 + $0x890] sm:$0xff]
    %v3050 = vld [vmem:[#allocation13 + $0x898] sm:$0xff]
    %v3051 = vld [vmem:[#allocation13 + $0x8a0] sm:$0xf]
    %v3052 = vld [vmem:[#allocation13 + $0x8a4] sm:$0xff]
    %v3053 = vld [vmem:[#allocation13 + $0x8ac] sm:$0xff]
    %v3054 = vld [vmem:[#allocation13 + $0x8b4] sm:$0xff]
    %v3055 = vld [vmem:[#allocation13 + $0x8bc] sm:$0xf]
    %v3056 = vld [vmem:[#allocation13 + $0x8c0] sm:$0xff]
    %v3057 = vld [vmem:[#allocation13 + $0x8c8] sm:$0xff]
    %v3058 = vld [vmem:[#allocation13 + $0x8d0] sm:$0xff]
    %v3059 = vld [vmem:[#allocation13 + $0x8d8] sm:$0xf]
    %v3060 = vld [vmem:[#allocation13 + $0x8dc] sm:$0xff]
    %v3061 = vld [vmem:[#allocation13 + $0x8e4] sm:$0xff]
    %v3062 = vld [vmem:[#allocation13 + $0x8ec] sm:$0xff]
    %v3063 = vld [vmem:[#allocation13 + $0x8f4] sm:$0xf]
    %v3064 = vld [vmem:[#allocation13 + $0x8f8] sm:$0xff]
    %v3065 = vld [vmem:[#allocation13 + $0x900] sm:$0xff]
    %v3066 = vld [vmem:[#allocation13 + $0x908] sm:$0xff]
    %v3067 = vld [vmem:[#allocation13 + $0x910] sm:$0xf]
    %v3068 = vld [vmem:[#allocation13 + $0x914] sm:$0xff]
    %v3069 = vld [vmem:[#allocation13 + $0x91c] sm:$0xff]
    %v3070 = vld [vmem:[#allocation13 + $0x924] sm:$0xff]
    %v3071 = vld [vmem:[#allocation13 + $0x92c] sm:$0xf]
    %v3072 = vld [vmem:[#allocation13 + $0x930] sm:$0xff]
    %v3073 = vld [vmem:[#allocation13 + $0x938] sm:$0xff]
    %v3074 = vld [vmem:[#allocation13 + $0x940] sm:$0xff]
    %v3075 = vld [vmem:[#allocation13 + $0x948] sm:$0xf]
    %v3076 = vld [vmem:[#allocation13 + $0x94c] sm:$0xff]
    %v3077 = vld [vmem:[#allocation13 + $0x954] sm:$0xff]
    %v3078 = vld [vmem:[#allocation13 + $0x95c] sm:$0xff]
    %v3079 = vld [vmem:[#allocation13 + $0x964] sm:$0xf]
    %v3080 = vld [vmem:[#allocation13 + $0x968] sm:$0xff]
    %v3081 = vld [vmem:[#allocation13 + $0x970] sm:$0xff]
    %v3082 = vld [vmem:[#allocation13 + $0x978] sm:$0xff]
    %v3083 = vld [vmem:[#allocation13 + $0x980] sm:$0xf]
    %v3084 = vld [vmem:[#allocation13 + $0x984] sm:$0xff]
    %v3085 = vld [vmem:[#allocation13 + $0x98c] sm:$0xff]
    %v3086 = vld [vmem:[#allocation13 + $0x994] sm:$0xff]
    %v3087 = vld [vmem:[#allocation13 + $0x99c] sm:$0xf]
    %v3088 = vld [vmem:[#allocation13 + $0x9a0] sm:$0xff]
    %v3089 = vld [vmem:[#allocation13 + $0x9a8] sm:$0xff]
    %v3090 = vld [vmem:[#allocation13 + $0x9b0] sm:$0xff]
    %v3091 = vld [vmem:[#allocation13 + $0x9b8] sm:$0xf]
    %v3092 = vld [vmem:[#allocation13 + $0x9bc] sm:$0xff]
    %v3093 = vld [vmem:[#allocation13 + $0x9c4] sm:$0xff]
    %v3094 = vld [vmem:[#allocation13 + $0x9cc] sm:$0xff]
    %v3095 = vld [vmem:[#allocation13 + $0x9d4] sm:$0xf]
    %v3096 = vld [vmem:[#allocation13 + $0x9d8] sm:$0xff]
    %v3097 = vld [vmem:[#allocation13 + $0x9e0] sm:$0xff]
    %v3098 = vld [vmem:[#allocation13 + $0x9e8] sm:$0xff]
    %v3099 = vld [vmem:[#allocation13 + $0x9f0] sm:$0xf]
    %v3100 = vld [vmem:[#allocation13 + $0x9f4] sm:$0xff]
    %v3101 = vld [vmem:[#allocation13 + $0x9fc] sm:$0xff]
    %v3102 = vld [vmem:[#allocation13 + $0xa04] sm:$0xff]
    %v3103 = vld [vmem:[#allocation13 + $0xa0c] sm:$0xf]
    %v3104 = vld [vmem:[#allocation13 + $0xa10] sm:$0xff]
    %v3105 = vld [vmem:[#allocation13 + $0xa18] sm:$0xff]
    %v3106 = vld [vmem:[#allocation13 + $0xa20] sm:$0xff]
    %v3107 = vld [vmem:[#allocation13 + $0xa28] sm:$0xf]
    %v3108 = vld [vmem:[#allocation13 + $0xa2c] sm:$0xff]
    %v3109 = vld [vmem:[#allocation13 + $0xa34] sm:$0xff]
    %v3110 = vld [vmem:[#allocation13 + $0xa3c] sm:$0xff]
    %v3111 = vld [vmem:[#allocation13 + $0xa44] sm:$0xf]
    %v3112 = vld [vmem:[#allocation13 + $0xa48] sm:$0xff]
    %v3113 = vld [vmem:[#allocation13 + $0xa50] sm:$0xff]
    %v3114 = vld [vmem:[#allocation13 + $0xa58] sm:$0xff]
    %v3115 = vld [vmem:[#allocation13 + $0xa60] sm:$0xf]
    %v3116 = vld [vmem:[#allocation13 + $0xa64] sm:$0xff]
    %v3117 = vld [vmem:[#allocation13 + $0xa6c] sm:$0xff]
    %v3118 = vld [vmem:[#allocation13 + $0xa74] sm:$0xff]
    %v3119 = vld [vmem:[#allocation13 + $0xa7c] sm:$0xf]
    %v3120 = vld [vmem:[#allocation13 + $0xa80] sm:$0xff]
    %v3121 = vld [vmem:[#allocation13 + $0xa88] sm:$0xff]
    %v3122 = vld [vmem:[#allocation13 + $0xa90] sm:$0xff]
    %v3123 = vld [vmem:[#allocation13 + $0xa98] sm:$0xf]
    %v3124 = vld [vmem:[#allocation13 + $0xa9c] sm:$0xff]
    %v3125 = vld [vmem:[#allocation13 + $0xaa4] sm:$0xff]
    %v3126 = vld [vmem:[#allocation13 + $0xaac] sm:$0xff]
    %v3127 = vld [vmem:[#allocation13 + $0xab4] sm:$0xf]
    %v3128 = vld [vmem:[#allocation13 + $0xab8] sm:$0xff]
    %v3129 = vld [vmem:[#allocation13 + $0xac0] sm:$0xff]
    %v3130 = vld [vmem:[#allocation13 + $0xac8] sm:$0xff]
    %v3131 = vld [vmem:[#allocation13 + $0xad0] sm:$0xf]
    %v3132 = vld [vmem:[#allocation13 + $0xad4] sm:$0xff]
    %v3133 = vld [vmem:[#allocation13 + $0xadc] sm:$0xff]
    %v3134 = vld [vmem:[#allocation13 + $0xae4] sm:$0xff]
    %v3135 = vld [vmem:[#allocation13 + $0xaec] sm:$0xf]
    %v3136 = vld [vmem:[#allocation13 + $0xaf0] sm:$0xff]
    %v3137 = vld [vmem:[#allocation13 + $0xaf8] sm:$0xff]
    %v3138 = vld [vmem:[#allocation13 + $0xb00] sm:$0xff]
    %v3139 = vld [vmem:[#allocation13 + $0xb08] sm:$0xf]
    %v3140 = vld [vmem:[#allocation13 + $0xb0c] sm:$0xff]
    %v3141 = vld [vmem:[#allocation13 + $0xb14] sm:$0xff]
    %v3142 = vld [vmem:[#allocation13 + $0xb1c] sm:$0xff]
    %v3143 = vld [vmem:[#allocation13 + $0xb24] sm:$0xf]
    %v3144 = vld [vmem:[#allocation13 + $0xb28] sm:$0xff]
    %v3145 = vld [vmem:[#allocation13 + $0xb30] sm:$0xff]
    %v3146 = vld [vmem:[#allocation13 + $0xb38] sm:$0xff]
    %v3147 = vld [vmem:[#allocation13 + $0xb40] sm:$0xf]
    %v3148 = vld [vmem:[#allocation13 + $0xb44] sm:$0xff]
    %v3149 = vld [vmem:[#allocation13 + $0xb4c] sm:$0xff]
    %v3150 = vld [vmem:[#allocation13 + $0xb54] sm:$0xff]
    %v3151 = vld [vmem:[#allocation13 + $0xb5c] sm:$0xf]
    %v3152 = vld [vmem:[#allocation13 + $0xb60] sm:$0xff]
    %v3153 = vld [vmem:[#allocation13 + $0xb68] sm:$0xff]
    %v3154 = vld [vmem:[#allocation13 + $0xb70] sm:$0xff]
    %v3155 = vld [vmem:[#allocation13 + $0xb78] sm:$0xf]
    %v3156 = vld [vmem:[#allocation13 + $0xb7c] sm:$0xff]
    %v3157 = vld [vmem:[#allocation13 + $0xb84] sm:$0xff]
    %v3158 = vld [vmem:[#allocation13 + $0xb8c] sm:$0xff]
    %v3159 = vld [vmem:[#allocation13 + $0xb94] sm:$0xf]
    %v3160 = vld [vmem:[#allocation13 + $0xb98] sm:$0xff]
    %v3161 = vld [vmem:[#allocation13 + $0xba0] sm:$0xff]
    %v3162 = vld [vmem:[#allocation13 + $0xba8] sm:$0xff]
    %v3163 = vld [vmem:[#allocation13 + $0xbb0] sm:$0xf]
    %v3164 = vld [vmem:[#allocation13 + $0xbb4] sm:$0xff]
    %v3165 = vld [vmem:[#allocation13 + $0xbbc] sm:$0xff]
    %v3166 = vld [vmem:[#allocation13 + $0xbc4] sm:$0xff]
    %v3167 = vld [vmem:[#allocation13 + $0xbcc] sm:$0xf]
    %v3168 = vld [vmem:[#allocation13 + $0xbd0] sm:$0xff]
    %v3169 = vld [vmem:[#allocation13 + $0xbd8] sm:$0xff]
    %v3170 = vld [vmem:[#allocation13 + $0xbe0] sm:$0xff]
    %v3171 = vld [vmem:[#allocation13 + $0xbe8] sm:$0xf]
    %v3172 = vld [vmem:[#allocation13 + $0xbec] sm:$0xff]
    %v3173 = vld [vmem:[#allocation13 + $0xbf4] sm:$0xff]
    %v3174 = vld [vmem:[#allocation13 + $0xbfc] sm:$0xff]
    %v3175 = vld [vmem:[#allocation13 + $0xc04] sm:$0xf]
    %v3176 = vld [vmem:[#allocation13 + $0xc08] sm:$0xff]
    %v3177 = vld [vmem:[#allocation13 + $0xc10] sm:$0xff]
    %v3178 = vld [vmem:[#allocation13 + $0xc18] sm:$0xff]
    %v3179 = vld [vmem:[#allocation13 + $0xc20] sm:$0xf]
    %v3180 = vld [vmem:[#allocation13 + $0xc24] sm:$0xff]
    %v3181 = vld [vmem:[#allocation13 + $0xc2c] sm:$0xff]
    %v3182 = vld [vmem:[#allocation13 + $0xc34] sm:$0xff]
    %v3183 = vld [vmem:[#allocation13 + $0xc3c] sm:$0xf]
    %v3184 = vld [vmem:[#allocation13 + $0xc40] sm:$0xff]
    %v3185 = vld [vmem:[#allocation13 + $0xc48] sm:$0xff]
    %v3186 = vld [vmem:[#allocation13 + $0xc50] sm:$0xff]
    %v3187 = vld [vmem:[#allocation13 + $0xc58] sm:$0xf]
    %v3188 = vld [vmem:[#allocation13 + $0xc5c] sm:$0xff]
    %v3189 = vld [vmem:[#allocation13 + $0xc64] sm:$0xff]
    %v3190 = vld [vmem:[#allocation13 + $0xc6c] sm:$0xff]
    %v3191 = vld [vmem:[#allocation13 + $0xc74] sm:$0xf]
    %v3192 = vld [vmem:[#allocation13 + $0xc78] sm:$0xff]
    %v3193 = vld [vmem:[#allocation13 + $0xc80] sm:$0xff]
    %v3194 = vld [vmem:[#allocation13 + $0xc88] sm:$0xff]
    %v3195 = vld [vmem:[#allocation13 + $0xc90] sm:$0xf]
    %v3196 = vld [vmem:[#allocation13 + $0xc94] sm:$0xff]
    %v3197 = vld [vmem:[#allocation13 + $0xc9c] sm:$0xff]
    %v3198 = vld [vmem:[#allocation13 + $0xca4] sm:$0xff]
    %v3199 = vld [vmem:[#allocation13 + $0xcac] sm:$0xf]
    %v3200 = vld [vmem:[#allocation13 + $0xcb0] sm:$0xff]
    %v3201 = vld [vmem:[#allocation13 + $0xcb8] sm:$0xff]
    %v3202 = vld [vmem:[#allocation13 + $0xcc0] sm:$0xff]
    %v3203 = vld [vmem:[#allocation13 + $0xcc8] sm:$0xf]
    %v3204 = vld [vmem:[#allocation13 + $0xccc] sm:$0xff]
    %v3205 = vld [vmem:[#allocation13 + $0xcd4] sm:$0xff]
    %v3206 = vld [vmem:[#allocation13 + $0xcdc] sm:$0xff]
    %v3207 = vld [vmem:[#allocation13 + $0xce4] sm:$0xf]
    %v3208 = vld [vmem:[#allocation13 + $0xce8] sm:$0xff]
    %v3209 = vld [vmem:[#allocation13 + $0xcf0] sm:$0xff]
    %v3210 = vld [vmem:[#allocation13 + $0xcf8] sm:$0xff]
    %v3211 = vld [vmem:[#allocation13 + $0xd00] sm:$0xf]
    %v3212 = vld [vmem:[#allocation13 + $0xd04] sm:$0xff]
    %v3213 = vld [vmem:[#allocation13 + $0xd0c] sm:$0xff]
    %v3214 = vld [vmem:[#allocation13 + $0xd14] sm:$0xff]
    %v3215 = vld [vmem:[#allocation13 + $0xd1c] sm:$0xf]
    %v3216 = vld [vmem:[#allocation13 + $0xd20] sm:$0xff]
    %v3217 = vld [vmem:[#allocation13 + $0xd28] sm:$0xff]
    %v3218 = vld [vmem:[#allocation13 + $0xd30] sm:$0xff]
    %v3219 = vld [vmem:[#allocation13 + $0xd38] sm:$0xf]
    %v3220 = vld [vmem:[#allocation13 + $0xd3c] sm:$0xff]
    %v3221 = vld [vmem:[#allocation13 + $0xd44] sm:$0xff]
    %v3222 = vld [vmem:[#allocation13 + $0xd4c] sm:$0xff]
    %v3223 = vld [vmem:[#allocation13 + $0xd54] sm:$0xf]
    %v3224 = vld [vmem:[#allocation13 + $0xd58] sm:$0xff]
    %v3225 = vld [vmem:[#allocation13 + $0xd60] sm:$0xff]
    %v3226 = vld [vmem:[#allocation13 + $0xd68] sm:$0xff]
    %v3227 = vld [vmem:[#allocation13 + $0xd70] sm:$0xf]
    %v3228 = vld [vmem:[#allocation13 + $0xd74] sm:$0xff]
    %v3229 = vld [vmem:[#allocation13 + $0xd7c] sm:$0xff]
    %v3230 = vld [vmem:[#allocation13 + $0xd84] sm:$0xff]
    %v3231 = vld [vmem:[#allocation13 + $0xd8c] sm:$0xf]
    %v3232 = vld [vmem:[#allocation13 + $0xd90] sm:$0xff]
    %v3233 = vld [vmem:[#allocation13 + $0xd98] sm:$0xff]
    %v3234 = vld [vmem:[#allocation13 + $0xda0] sm:$0xff]
    %v3235 = vld [vmem:[#allocation13 + $0xda8] sm:$0xf]
    %v3236 = vld [vmem:[#allocation13 + $0xdac] sm:$0xff]
    %v3237 = vld [vmem:[#allocation13 + $0xdb4] sm:$0xff]
    %v3238 = vld [vmem:[#allocation13 + $0xdbc] sm:$0xff]
    %v3239 = vld [vmem:[#allocation13 + $0xdc4] sm:$0xf]
    %v3240 = vld [vmem:[#allocation13 + $0xdc8] sm:$0xff]
    %v3241 = vld [vmem:[#allocation13 + $0xdd0] sm:$0xff]
    %v3242 = vld [vmem:[#allocation13 + $0xdd8] sm:$0xff]
    %v3243 = vld [vmem:[#allocation13 + $0xde0] sm:$0xf]
    %v3244 = vld [vmem:[#allocation13 + $0xde4] sm:$0xff]
    %v3245 = vld [vmem:[#allocation13 + $0xdec] sm:$0xff]
    %v3246 = vld [vmem:[#allocation13 + $0xdf4] sm:$0xff]
    %v3247 = vld [vmem:[#allocation13 + $0xdfc] sm:$0xf]
    %v3248 = vld [vmem:[#allocation14] sm:$0xff]
    %v3250 = vlaneseq
    %v3251 = vshrl.u32 %v3250, 7
    %v3252 = vsub.s32 0, %v3251
    %v3253 = vrot.slane %v3248, %v3252
    %v3254 = vlaneseq
    %v3255 = vshrl.u32 %v3254, 7
    %v3256 = vsub.s32 1, %v3255
    %v3257 = vrot.slane %v3248, %v3256
    %v3258 = vlaneseq
    %v3259 = vshrl.u32 %v3258, 7
    %v3260 = vsub.s32 2, %v3259
    %v3261 = vrot.slane %v3248, %v3260
    %v3262 = vlaneseq
    %v3263 = vshrl.u32 %v3262, 7
    %v3264 = vsub.s32 3, %v3263
    %v3265 = vrot.slane %v3248, %v3264
    %v3266 = vlaneseq
    %v3267 = vshrl.u32 %v3266, 7
    %v3268 = vsub.s32 4, %v3267
    %v3269 = vrot.slane %v3248, %v3268
    %v3270 = vlaneseq
    %v3271 = vshrl.u32 %v3270, 7
    %v3272 = vsub.s32 5, %v3271
    %v3273 = vrot.slane %v3248, %v3272
    %v3274 = vlaneseq
    %v3275 = vshrl.u32 %v3274, 7
    %v3276 = vsub.s32 6, %v3275
    %v3277 = vrot.slane %v3248, %v3276
    %v3797 = vunpack.c.l.b16 %v2736
    %v3798 = vunpack.c.h.b16 %v2736
    %v3799 = vunpack.c.l.b16 %v2737
    %v3800 = vunpack.c.h.b16 %v2737
    %v3801 = vunpack.c.l.b16 %v2738
    %v3802 = vunpack.c.h.b16 %v2738
    %v3803 = vunpack.c.l.b16 %v2739
    %v3804 = vunpack.c.l.b16 %v2740
    %v3805 = vunpack.c.h.b16 %v2740
    %v3806 = vunpack.c.l.b16 %v2741
    %v3807 = vunpack.c.h.b16 %v2741
    %v3808 = vunpack.c.l.b16 %v2742
    %v3809 = vunpack.c.h.b16 %v2742
    %v3810 = vunpack.c.l.b16 %v2743
    %v3811 = vunpack.c.l.b16 %v2744
    %v3812 = vunpack.c.h.b16 %v2744
    %v3813 = vunpack.c.l.b16 %v2745
    %v3814 = vunpack.c.h.b16 %v2745
    %v3815 = vunpack.c.l.b16 %v2746
    %v3816 = vunpack.c.h.b16 %v2746
    %v3817 = vunpack.c.l.b16 %v2747
    %v3818 = vunpack.c.l.b16 %v2748
    %v3819 = vunpack.c.h.b16 %v2748
    %v3820 = vunpack.c.l.b16 %v2749
    %v3821 = vunpack.c.h.b16 %v2749
    %v3822 = vunpack.c.l.b16 %v2750
    %v3823 = vunpack.c.h.b16 %v2750
    %v3824 = vunpack.c.l.b16 %v2751
    %v3825 = vunpack.c.l.b16 %v2752
    %v3826 = vunpack.c.h.b16 %v2752
    %v3827 = vunpack.c.l.b16 %v2753
    %v3828 = vunpack.c.h.b16 %v2753
    %v3829 = vunpack.c.l.b16 %v2754
    %v3830 = vunpack.c.h.b16 %v2754
    %v3831 = vunpack.c.l.b16 %v2755
    %v3832 = vunpack.c.l.b16 %v2756
    %v3833 = vunpack.c.h.b16 %v2756
    %v3834 = vunpack.c.l.b16 %v2757
    %v3835 = vunpack.c.h.b16 %v2757
    %v3836 = vunpack.c.l.b16 %v2758
    %v3837 = vunpack.c.h.b16 %v2758
    %v3838 = vunpack.c.l.b16 %v2759
    %v3839 = vunpack.c.l.b16 %v2760
    %v3840 = vunpack.c.h.b16 %v2760
    %v3841 = vunpack.c.l.b16 %v2761
    %v3842 = vunpack.c.h.b16 %v2761
    %v3843 = vunpack.c.l.b16 %v2762
    %v3844 = vunpack.c.h.b16 %v2762
    %v3845 = vunpack.c.l.b16 %v2763
    %v3846 = vunpack.c.l.b16 %v2764
    %v3847 = vunpack.c.h.b16 %v2764
    %v3848 = vunpack.c.l.b16 %v2765
    %v3849 = vunpack.c.h.b16 %v2765
    %v3850 = vunpack.c.l.b16 %v2766
    %v3851 = vunpack.c.h.b16 %v2766
    %v3852 = vunpack.c.l.b16 %v2767
    %v3853 = vunpack.c.l.b16 %v2768
    %v3854 = vunpack.c.h.b16 %v2768
    %v3855 = vunpack.c.l.b16 %v2769
    %v3856 = vunpack.c.h.b16 %v2769
    %v3857 = vunpack.c.l.b16 %v2770
    %v3858 = vunpack.c.h.b16 %v2770
    %v3859 = vunpack.c.l.b16 %v2771
    %v3860 = vunpack.c.l.b16 %v2772
    %v3861 = vunpack.c.h.b16 %v2772
    %v3862 = vunpack.c.l.b16 %v2773
    %v3863 = vunpack.c.h.b16 %v2773
    %v3864 = vunpack.c.l.b16 %v2774
    %v3865 = vunpack.c.h.b16 %v2774
    %v3866 = vunpack.c.l.b16 %v2775
    %v3867 = vunpack.c.l.b16 %v2776
    %v3868 = vunpack.c.h.b16 %v2776
    %v3869 = vunpack.c.l.b16 %v2777
    %v3870 = vunpack.c.h.b16 %v2777
    %v3871 = vunpack.c.l.b16 %v2778
    %v3872 = vunpack.c.h.b16 %v2778
    %v3873 = vunpack.c.l.b16 %v2779
    %v3874 = vunpack.c.l.b16 %v2780
    %v3875 = vunpack.c.h.b16 %v2780
    %v3876 = vunpack.c.l.b16 %v2781
    %v3877 = vunpack.c.h.b16 %v2781
    %v3878 = vunpack.c.l.b16 %v2782
    %v3879 = vunpack.c.h.b16 %v2782
    %v3880 = vunpack.c.l.b16 %v2783
    %v3881 = vunpack.c.l.b16 %v2784
    %v3882 = vunpack.c.h.b16 %v2784
    %v3883 = vunpack.c.l.b16 %v2785
    %v3884 = vunpack.c.h.b16 %v2785
    %v3885 = vunpack.c.l.b16 %v2786
    %v3886 = vunpack.c.h.b16 %v2786
    %v3887 = vunpack.c.l.b16 %v2787
    %v3888 = vunpack.c.l.b16 %v2788
    %v3889 = vunpack.c.h.b16 %v2788
    %v3890 = vunpack.c.l.b16 %v2789
    %v3891 = vunpack.c.h.b16 %v2789
    %v3892 = vunpack.c.l.b16 %v2790
    %v3893 = vunpack.c.h.b16 %v2790
    %v3894 = vunpack.c.l.b16 %v2791
    %v3895 = vunpack.c.l.b16 %v2792
    %v3896 = vunpack.c.h.b16 %v2792
    %v3897 = vunpack.c.l.b16 %v2793
    %v3898 = vunpack.c.h.b16 %v2793
    %v3899 = vunpack.c.l.b16 %v2794
    %v3900 = vunpack.c.h.b16 %v2794
    %v3901 = vunpack.c.l.b16 %v2795
    %v3902 = vunpack.c.l.b16 %v2796
    %v3903 = vunpack.c.h.b16 %v2796
    %v3904 = vunpack.c.l.b16 %v2797
    %v3905 = vunpack.c.h.b16 %v2797
    %v3906 = vunpack.c.l.b16 %v2798
    %v3907 = vunpack.c.h.b16 %v2798
    %v3908 = vunpack.c.l.b16 %v2799
    %v3909 = vunpack.c.l.b16 %v2800
    %v3910 = vunpack.c.h.b16 %v2800
    %v3911 = vunpack.c.l.b16 %v2801
    %v3912 = vunpack.c.h.b16 %v2801
    %v3913 = vunpack.c.l.b16 %v2802
    %v3914 = vunpack.c.h.b16 %v2802
    %v3915 = vunpack.c.l.b16 %v2803
    %v3916 = vunpack.c.l.b16 %v2804
    %v3917 = vunpack.c.h.b16 %v2804
    %v3918 = vunpack.c.l.b16 %v2805
    %v3919 = vunpack.c.h.b16 %v2805
    %v3920 = vunpack.c.l.b16 %v2806
    %v3921 = vunpack.c.h.b16 %v2806
    %v3922 = vunpack.c.l.b16 %v2807
    %v3923 = vunpack.c.l.b16 %v2808
    %v3924 = vunpack.c.h.b16 %v2808
    %v3925 = vunpack.c.l.b16 %v2809
    %v3926 = vunpack.c.h.b16 %v2809
    %v3927 = vunpack.c.l.b16 %v2810
    %v3928 = vunpack.c.h.b16 %v2810
    %v3929 = vunpack.c.l.b16 %v2811
    %v3930 = vunpack.c.l.b16 %v2812
    %v3931 = vunpack.c.h.b16 %v2812
    %v3932 = vunpack.c.l.b16 %v2813
    %v3933 = vunpack.c.h.b16 %v2813
    %v3934 = vunpack.c.l.b16 %v2814
    %v3935 = vunpack.c.h.b16 %v2814
    %v3936 = vunpack.c.l.b16 %v2815
    %v3937 = vunpack.c.l.b16 %v2816
    %v3938 = vunpack.c.h.b16 %v2816
    %v3939 = vunpack.c.l.b16 %v2817
    %v3940 = vunpack.c.h.b16 %v2817
    %v3941 = vunpack.c.l.b16 %v2818
    %v3942 = vunpack.c.h.b16 %v2818
    %v3943 = vunpack.c.l.b16 %v2819
    %v3944 = vunpack.c.l.b16 %v2820
    %v3945 = vunpack.c.h.b16 %v2820
    %v3946 = vunpack.c.l.b16 %v2821
    %v3947 = vunpack.c.h.b16 %v2821
    %v3948 = vunpack.c.l.b16 %v2822
    %v3949 = vunpack.c.h.b16 %v2822
    %v3950 = vunpack.c.l.b16 %v2823
    %v3951 = vunpack.c.l.b16 %v2824
    %v3952 = vunpack.c.h.b16 %v2824
    %v3953 = vunpack.c.l.b16 %v2825
    %v3954 = vunpack.c.h.b16 %v2825
    %v3955 = vunpack.c.l.b16 %v2826
    %v3956 = vunpack.c.h.b16 %v2826
    %v3957 = vunpack.c.l.b16 %v2827
    %v3958 = vunpack.c.l.b16 %v2828
    %v3959 = vunpack.c.h.b16 %v2828
    %v3960 = vunpack.c.l.b16 %v2829
    %v3961 = vunpack.c.h.b16 %v2829
    %v3962 = vunpack.c.l.b16 %v2830
    %v3963 = vunpack.c.h.b16 %v2830
    %v3964 = vunpack.c.l.b16 %v2831
    %v3965 = vunpack.c.l.b16 %v2832
    %v3966 = vunpack.c.h.b16 %v2832
    %v3967 = vunpack.c.l.b16 %v2833
    %v3968 = vunpack.c.h.b16 %v2833
    %v3969 = vunpack.c.l.b16 %v2834
    %v3970 = vunpack.c.h.b16 %v2834
    %v3971 = vunpack.c.l.b16 %v2835
    %v3972 = vunpack.c.l.b16 %v2836
    %v3973 = vunpack.c.h.b16 %v2836
    %v3974 = vunpack.c.l.b16 %v2837
    %v3975 = vunpack.c.h.b16 %v2837
    %v3976 = vunpack.c.l.b16 %v2838
    %v3977 = vunpack.c.h.b16 %v2838
    %v3978 = vunpack.c.l.b16 %v2839
    %v3979 = vunpack.c.l.b16 %v2840
    %v3980 = vunpack.c.h.b16 %v2840
    %v3981 = vunpack.c.l.b16 %v2841
    %v3982 = vunpack.c.h.b16 %v2841
    %v3983 = vunpack.c.l.b16 %v2842
    %v3984 = vunpack.c.h.b16 %v2842
    %v3985 = vunpack.c.l.b16 %v2843
    %v3986 = vunpack.c.l.b16 %v2844
    %v3987 = vunpack.c.h.b16 %v2844
    %v3988 = vunpack.c.l.b16 %v2845
    %v3989 = vunpack.c.h.b16 %v2845
    %v3990 = vunpack.c.l.b16 %v2846
    %v3991 = vunpack.c.h.b16 %v2846
    %v3992 = vunpack.c.l.b16 %v2847
    %v3993 = vunpack.c.l.b16 %v2848
    %v3994 = vunpack.c.h.b16 %v2848
    %v3995 = vunpack.c.l.b16 %v2849
    %v3996 = vunpack.c.h.b16 %v2849
    %v3997 = vunpack.c.l.b16 %v2850
    %v3998 = vunpack.c.h.b16 %v2850
    %v3999 = vunpack.c.l.b16 %v2851
    %v4000 = vunpack.c.l.b16 %v2852
    %v4001 = vunpack.c.h.b16 %v2852
    %v4002 = vunpack.c.l.b16 %v2853
    %v4003 = vunpack.c.h.b16 %v2853
    %v4004 = vunpack.c.l.b16 %v2854
    %v4005 = vunpack.c.h.b16 %v2854
    %v4006 = vunpack.c.l.b16 %v2855
    %v4007 = vunpack.c.l.b16 %v2856
    %v4008 = vunpack.c.h.b16 %v2856
    %v4009 = vunpack.c.l.b16 %v2857
    %v4010 = vunpack.c.h.b16 %v2857
    %v4011 = vunpack.c.l.b16 %v2858
    %v4012 = vunpack.c.h.b16 %v2858
    %v4013 = vunpack.c.l.b16 %v2859
    %v4014 = vunpack.c.l.b16 %v2860
    %v4015 = vunpack.c.h.b16 %v2860
    %v4016 = vunpack.c.l.b16 %v2861
    %v4017 = vunpack.c.h.b16 %v2861
    %v4018 = vunpack.c.l.b16 %v2862
    %v4019 = vunpack.c.h.b16 %v2862
    %v4020 = vunpack.c.l.b16 %v2863
    %v4021 = vunpack.c.l.b16 %v2864
    %v4022 = vunpack.c.h.b16 %v2864
    %v4023 = vunpack.c.l.b16 %v2865
    %v4024 = vunpack.c.h.b16 %v2865
    %v4025 = vunpack.c.l.b16 %v2866
    %v4026 = vunpack.c.h.b16 %v2866
    %v4027 = vunpack.c.l.b16 %v2867
    %v4028 = vunpack.c.l.b16 %v2868
    %v4029 = vunpack.c.h.b16 %v2868
    %v4030 = vunpack.c.l.b16 %v2869
    %v4031 = vunpack.c.h.b16 %v2869
    %v4032 = vunpack.c.l.b16 %v2870
    %v4033 = vunpack.c.h.b16 %v2870
    %v4034 = vunpack.c.l.b16 %v2871
    %v4035 = vunpack.c.l.b16 %v2872
    %v4036 = vunpack.c.h.b16 %v2872
    %v4037 = vunpack.c.l.b16 %v2873
    %v4038 = vunpack.c.h.b16 %v2873
    %v4039 = vunpack.c.l.b16 %v2874
    %v4040 = vunpack.c.h.b16 %v2874
    %v4041 = vunpack.c.l.b16 %v2875
    %v4042 = vunpack.c.l.b16 %v2876
    %v4043 = vunpack.c.h.b16 %v2876
    %v4044 = vunpack.c.l.b16 %v2877
    %v4045 = vunpack.c.h.b16 %v2877
    %v4046 = vunpack.c.l.b16 %v2878
    %v4047 = vunpack.c.h.b16 %v2878
    %v4048 = vunpack.c.l.b16 %v2879
    %v4049 = vunpack.c.l.b16 %v2880
    %v4050 = vunpack.c.h.b16 %v2880
    %v4051 = vunpack.c.l.b16 %v2881
    %v4052 = vunpack.c.h.b16 %v2881
    %v4053 = vunpack.c.l.b16 %v2882
    %v4054 = vunpack.c.h.b16 %v2882
    %v4055 = vunpack.c.l.b16 %v2883
    %v4056 = vunpack.c.l.b16 %v2884
    %v4057 = vunpack.c.h.b16 %v2884
    %v4058 = vunpack.c.l.b16 %v2885
    %v4059 = vunpack.c.h.b16 %v2885
    %v4060 = vunpack.c.l.b16 %v2886
    %v4061 = vunpack.c.h.b16 %v2886
    %v4062 = vunpack.c.l.b16 %v2887
    %v4063 = vunpack.c.l.b16 %v2888
    %v4064 = vunpack.c.h.b16 %v2888
    %v4065 = vunpack.c.l.b16 %v2889
    %v4066 = vunpack.c.h.b16 %v2889
    %v4067 = vunpack.c.l.b16 %v2890
    %v4068 = vunpack.c.h.b16 %v2890
    %v4069 = vunpack.c.l.b16 %v2891
    %v4070 = vunpack.c.l.b16 %v2892
    %v4071 = vunpack.c.h.b16 %v2892
    %v4072 = vunpack.c.l.b16 %v2893
    %v4073 = vunpack.c.h.b16 %v2893
    %v4074 = vunpack.c.l.b16 %v2894
    %v4075 = vunpack.c.h.b16 %v2894
    %v4076 = vunpack.c.l.b16 %v2895
    %v4077 = vunpack.c.l.b16 %v2896
    %v4078 = vunpack.c.h.b16 %v2896
    %v4079 = vunpack.c.l.b16 %v2897
    %v4080 = vunpack.c.h.b16 %v2897
    %v4081 = vunpack.c.l.b16 %v2898
    %v4082 = vunpack.c.h.b16 %v2898
    %v4083 = vunpack.c.l.b16 %v2899
    %v4084 = vunpack.c.l.b16 %v2900
    %v4085 = vunpack.c.h.b16 %v2900
    %v4086 = vunpack.c.l.b16 %v2901
    %v4087 = vunpack.c.h.b16 %v2901
    %v4088 = vunpack.c.l.b16 %v2902
    %v4089 = vunpack.c.h.b16 %v2902
    %v4090 = vunpack.c.l.b16 %v2903
    %v4091 = vunpack.c.l.b16 %v2904
    %v4092 = vunpack.c.h.b16 %v2904
    %v4093 = vunpack.c.l.b16 %v2905
    %v4094 = vunpack.c.h.b16 %v2905
    %v4095 = vunpack.c.l.b16 %v2906
    %v4096 = vunpack.c.h.b16 %v2906
    %v4097 = vunpack.c.l.b16 %v2907
    %v4098 = vunpack.c.l.b16 %v2908
    %v4099 = vunpack.c.h.b16 %v2908
    %v4100 = vunpack.c.l.b16 %v2909
    %v4101 = vunpack.c.h.b16 %v2909
    %v4102 = vunpack.c.l.b16 %v2910
    %v4103 = vunpack.c.h.b16 %v2910
    %v4104 = vunpack.c.l.b16 %v2911
    %v4105 = vunpack.c.l.b16 %v2912
    %v4106 = vunpack.c.h.b16 %v2912
    %v4107 = vunpack.c.l.b16 %v2913
    %v4108 = vunpack.c.h.b16 %v2913
    %v4109 = vunpack.c.l.b16 %v2914
    %v4110 = vunpack.c.h.b16 %v2914
    %v4111 = vunpack.c.l.b16 %v2915
    %v4112 = vunpack.c.l.b16 %v2916
    %v4113 = vunpack.c.h.b16 %v2916
    %v4114 = vunpack.c.l.b16 %v2917
    %v4115 = vunpack.c.h.b16 %v2917
    %v4116 = vunpack.c.l.b16 %v2918
    %v4117 = vunpack.c.h.b16 %v2918
    %v4118 = vunpack.c.l.b16 %v2919
    %v4119 = vunpack.c.l.b16 %v2920
    %v4120 = vunpack.c.h.b16 %v2920
    %v4121 = vunpack.c.l.b16 %v2921
    %v4122 = vunpack.c.h.b16 %v2921
    %v4123 = vunpack.c.l.b16 %v2922
    %v4124 = vunpack.c.h.b16 %v2922
    %v4125 = vunpack.c.l.b16 %v2923
    %v4126 = vunpack.c.l.b16 %v2924
    %v4127 = vunpack.c.h.b16 %v2924
    %v4128 = vunpack.c.l.b16 %v2925
    %v4129 = vunpack.c.h.b16 %v2925
    %v4130 = vunpack.c.l.b16 %v2926
    %v4131 = vunpack.c.h.b16 %v2926
    %v4132 = vunpack.c.l.b16 %v2927
    %v4133 = vunpack.c.l.b16 %v2928
    %v4134 = vunpack.c.h.b16 %v2928
    %v4135 = vunpack.c.l.b16 %v2929
    %v4136 = vunpack.c.h.b16 %v2929
    %v4137 = vunpack.c.l.b16 %v2930
    %v4138 = vunpack.c.h.b16 %v2930
    %v4139 = vunpack.c.l.b16 %v2931
    %v4140 = vunpack.c.l.b16 %v2932
    %v4141 = vunpack.c.h.b16 %v2932
    %v4142 = vunpack.c.l.b16 %v2933
    %v4143 = vunpack.c.h.b16 %v2933
    %v4144 = vunpack.c.l.b16 %v2934
    %v4145 = vunpack.c.h.b16 %v2934
    %v4146 = vunpack.c.l.b16 %v2935
    %v4147 = vunpack.c.l.b16 %v2936
    %v4148 = vunpack.c.h.b16 %v2936
    %v4149 = vunpack.c.l.b16 %v2937
    %v4150 = vunpack.c.h.b16 %v2937
    %v4151 = vunpack.c.l.b16 %v2938
    %v4152 = vunpack.c.h.b16 %v2938
    %v4153 = vunpack.c.l.b16 %v2939
    %v4154 = vunpack.c.l.b16 %v2940
    %v4155 = vunpack.c.h.b16 %v2940
    %v4156 = vunpack.c.l.b16 %v2941
    %v4157 = vunpack.c.h.b16 %v2941
    %v4158 = vunpack.c.l.b16 %v2942
    %v4159 = vunpack.c.h.b16 %v2942
    %v4160 = vunpack.c.l.b16 %v2943
    %v4161 = vunpack.c.l.b16 %v2944
    %v4162 = vunpack.c.h.b16 %v2944
    %v4163 = vunpack.c.l.b16 %v2945
    %v4164 = vunpack.c.h.b16 %v2945
    %v4165 = vunpack.c.l.b16 %v2946
    %v4166 = vunpack.c.h.b16 %v2946
    %v4167 = vunpack.c.l.b16 %v2947
    %v4168 = vunpack.c.l.b16 %v2948
    %v4169 = vunpack.c.h.b16 %v2948
    %v4170 = vunpack.c.l.b16 %v2949
    %v4171 = vunpack.c.h.b16 %v2949
    %v4172 = vunpack.c.l.b16 %v2950
    %v4173 = vunpack.c.h.b16 %v2950
    %v4174 = vunpack.c.l.b16 %v2951
    %v4175 = vunpack.c.l.b16 %v2952
    %v4176 = vunpack.c.h.b16 %v2952
    %v4177 = vunpack.c.l.b16 %v2953
    %v4178 = vunpack.c.h.b16 %v2953
    %v4179 = vunpack.c.l.b16 %v2954
    %v4180 = vunpack.c.h.b16 %v2954
    %v4181 = vunpack.c.l.b16 %v2955
    %v4182 = vunpack.c.l.b16 %v2956
    %v4183 = vunpack.c.h.b16 %v2956
    %v4184 = vunpack.c.l.b16 %v2957
    %v4185 = vunpack.c.h.b16 %v2957
    %v4186 = vunpack.c.l.b16 %v2958
    %v4187 = vunpack.c.h.b16 %v2958
    %v4188 = vunpack.c.l.b16 %v2959
    %v4189 = vunpack.c.l.b16 %v2960
    %v4190 = vunpack.c.h.b16 %v2960
    %v4191 = vunpack.c.l.b16 %v2961
    %v4192 = vunpack.c.h.b16 %v2961
    %v4193 = vunpack.c.l.b16 %v2962
    %v4194 = vunpack.c.h.b16 %v2962
    %v4195 = vunpack.c.l.b16 %v2963
    %v4196 = vunpack.c.l.b16 %v2964
    %v4197 = vunpack.c.h.b16 %v2964
    %v4198 = vunpack.c.l.b16 %v2965
    %v4199 = vunpack.c.h.b16 %v2965
    %v4200 = vunpack.c.l.b16 %v2966
    %v4201 = vunpack.c.h.b16 %v2966
    %v4202 = vunpack.c.l.b16 %v2967
    %v4203 = vunpack.c.l.b16 %v2968
    %v4204 = vunpack.c.h.b16 %v2968
    %v4205 = vunpack.c.l.b16 %v2969
    %v4206 = vunpack.c.h.b16 %v2969
    %v4207 = vunpack.c.l.b16 %v2970
    %v4208 = vunpack.c.h.b16 %v2970
    %v4209 = vunpack.c.l.b16 %v2971
    %v4210 = vunpack.c.l.b16 %v2972
    %v4211 = vunpack.c.h.b16 %v2972
    %v4212 = vunpack.c.l.b16 %v2973
    %v4213 = vunpack.c.h.b16 %v2973
    %v4214 = vunpack.c.l.b16 %v2974
    %v4215 = vunpack.c.h.b16 %v2974
    %v4216 = vunpack.c.l.b16 %v2975
    %v4217 = vunpack.c.l.b16 %v2976
    %v4218 = vunpack.c.h.b16 %v2976
    %v4219 = vunpack.c.l.b16 %v2977
    %v4220 = vunpack.c.h.b16 %v2977
    %v4221 = vunpack.c.l.b16 %v2978
    %v4222 = vunpack.c.h.b16 %v2978
    %v4223 = vunpack.c.l.b16 %v2979
    %v4224 = vunpack.c.l.b16 %v2980
    %v4225 = vunpack.c.h.b16 %v2980
    %v4226 = vunpack.c.l.b16 %v2981
    %v4227 = vunpack.c.h.b16 %v2981
    %v4228 = vunpack.c.l.b16 %v2982
    %v4229 = vunpack.c.h.b16 %v2982
    %v4230 = vunpack.c.l.b16 %v2983
    %v4231 = vunpack.c.l.b16 %v2984
    %v4232 = vunpack.c.h.b16 %v2984
    %v4233 = vunpack.c.l.b16 %v2985
    %v4234 = vunpack.c.h.b16 %v2985
    %v4235 = vunpack.c.l.b16 %v2986
    %v4236 = vunpack.c.h.b16 %v2986
    %v4237 = vunpack.c.l.b16 %v2987
    %v4238 = vunpack.c.l.b16 %v2988
    %v4239 = vunpack.c.h.b16 %v2988
    %v4240 = vunpack.c.l.b16 %v2989
    %v4241 = vunpack.c.h.b16 %v2989
    %v4242 = vunpack.c.l.b16 %v2990
    %v4243 = vunpack.c.h.b16 %v2990
    %v4244 = vunpack.c.l.b16 %v2991
    %v4245 = vunpack.c.l.b16 %v2992
    %v4246 = vunpack.c.h.b16 %v2992
    %v4247 = vunpack.c.l.b16 %v2993
    %v4248 = vunpack.c.h.b16 %v2993
    %v4249 = vunpack.c.l.b16 %v2994
    %v4250 = vunpack.c.h.b16 %v2994
    %v4251 = vunpack.c.l.b16 %v2995
    %v4252 = vunpack.c.l.b16 %v2996
    %v4253 = vunpack.c.h.b16 %v2996
    %v4254 = vunpack.c.l.b16 %v2997
    %v4255 = vunpack.c.h.b16 %v2997
    %v4256 = vunpack.c.l.b16 %v2998
    %v4257 = vunpack.c.h.b16 %v2998
    %v4258 = vunpack.c.l.b16 %v2999
    %v4259 = vunpack.c.l.b16 %v3000
    %v4260 = vunpack.c.h.b16 %v3000
    %v4261 = vunpack.c.l.b16 %v3001
    %v4262 = vunpack.c.h.b16 %v3001
    %v4263 = vunpack.c.l.b16 %v3002
    %v4264 = vunpack.c.h.b16 %v3002
    %v4265 = vunpack.c.l.b16 %v3003
    %v4266 = vunpack.c.l.b16 %v3004
    %v4267 = vunpack.c.h.b16 %v3004
    %v4268 = vunpack.c.l.b16 %v3005
    %v4269 = vunpack.c.h.b16 %v3005
    %v4270 = vunpack.c.l.b16 %v3006
    %v4271 = vunpack.c.h.b16 %v3006
    %v4272 = vunpack.c.l.b16 %v3007
    %v4273 = vunpack.c.l.b16 %v3008
    %v4274 = vunpack.c.h.b16 %v3008
    %v4275 = vunpack.c.l.b16 %v3009
    %v4276 = vunpack.c.h.b16 %v3009
    %v4277 = vunpack.c.l.b16 %v3010
    %v4278 = vunpack.c.h.b16 %v3010
    %v4279 = vunpack.c.l.b16 %v3011
    %v4280 = vunpack.c.l.b16 %v3012
    %v4281 = vunpack.c.h.b16 %v3012
    %v4282 = vunpack.c.l.b16 %v3013
    %v4283 = vunpack.c.h.b16 %v3013
    %v4284 = vunpack.c.l.b16 %v3014
    %v4285 = vunpack.c.h.b16 %v3014
    %v4286 = vunpack.c.l.b16 %v3015
    %v4287 = vunpack.c.l.b16 %v3016
    %v4288 = vunpack.c.h.b16 %v3016
    %v4289 = vunpack.c.l.b16 %v3017
    %v4290 = vunpack.c.h.b16 %v3017
    %v4291 = vunpack.c.l.b16 %v3018
    %v4292 = vunpack.c.h.b16 %v3018
    %v4293 = vunpack.c.l.b16 %v3019
    %v4294 = vunpack.c.l.b16 %v3020
    %v4295 = vunpack.c.h.b16 %v3020
    %v4296 = vunpack.c.l.b16 %v3021
    %v4297 = vunpack.c.h.b16 %v3021
    %v4298 = vunpack.c.l.b16 %v3022
    %v4299 = vunpack.c.h.b16 %v3022
    %v4300 = vunpack.c.l.b16 %v3023
    %v4301 = vunpack.c.l.b16 %v3024
    %v4302 = vunpack.c.h.b16 %v3024
    %v4303 = vunpack.c.l.b16 %v3025
    %v4304 = vunpack.c.h.b16 %v3025
    %v4305 = vunpack.c.l.b16 %v3026
    %v4306 = vunpack.c.h.b16 %v3026
    %v4307 = vunpack.c.l.b16 %v3027
    %v4308 = vunpack.c.l.b16 %v3028
    %v4309 = vunpack.c.h.b16 %v3028
    %v4310 = vunpack.c.l.b16 %v3029
    %v4311 = vunpack.c.h.b16 %v3029
    %v4312 = vunpack.c.l.b16 %v3030
    %v4313 = vunpack.c.h.b16 %v3030
    %v4314 = vunpack.c.l.b16 %v3031
    %v4315 = vunpack.c.l.b16 %v3032
    %v4316 = vunpack.c.h.b16 %v3032
    %v4317 = vunpack.c.l.b16 %v3033
    %v4318 = vunpack.c.h.b16 %v3033
    %v4319 = vunpack.c.l.b16 %v3034
    %v4320 = vunpack.c.h.b16 %v3034
    %v4321 = vunpack.c.l.b16 %v3035
    %v4322 = vunpack.c.l.b16 %v3036
    %v4323 = vunpack.c.h.b16 %v3036
    %v4324 = vunpack.c.l.b16 %v3037
    %v4325 = vunpack.c.h.b16 %v3037
    %v4326 = vunpack.c.l.b16 %v3038
    %v4327 = vunpack.c.h.b16 %v3038
    %v4328 = vunpack.c.l.b16 %v3039
    %v4329 = vunpack.c.l.b16 %v3040
    %v4330 = vunpack.c.h.b16 %v3040
    %v4331 = vunpack.c.l.b16 %v3041
    %v4332 = vunpack.c.h.b16 %v3041
    %v4333 = vunpack.c.l.b16 %v3042
    %v4334 = vunpack.c.h.b16 %v3042
    %v4335 = vunpack.c.l.b16 %v3043
    %v4336 = vunpack.c.l.b16 %v3044
    %v4337 = vunpack.c.h.b16 %v3044
    %v4338 = vunpack.c.l.b16 %v3045
    %v4339 = vunpack.c.h.b16 %v3045
    %v4340 = vunpack.c.l.b16 %v3046
    %v4341 = vunpack.c.h.b16 %v3046
    %v4342 = vunpack.c.l.b16 %v3047
    %v4343 = vunpack.c.l.b16 %v3048
    %v4344 = vunpack.c.h.b16 %v3048
    %v4345 = vunpack.c.l.b16 %v3049
    %v4346 = vunpack.c.h.b16 %v3049
    %v4347 = vunpack.c.l.b16 %v3050
    %v4348 = vunpack.c.h.b16 %v3050
    %v4349 = vunpack.c.l.b16 %v3051
    %v4350 = vunpack.c.l.b16 %v3052
    %v4351 = vunpack.c.h.b16 %v3052
    %v4352 = vunpack.c.l.b16 %v3053
    %v4353 = vunpack.c.h.b16 %v3053
    %v4354 = vunpack.c.l.b16 %v3054
    %v4355 = vunpack.c.h.b16 %v3054
    %v4356 = vunpack.c.l.b16 %v3055
    %v4357 = vunpack.c.l.b16 %v3056
    %v4358 = vunpack.c.h.b16 %v3056
    %v4359 = vunpack.c.l.b16 %v3057
    %v4360 = vunpack.c.h.b16 %v3057
    %v4361 = vunpack.c.l.b16 %v3058
    %v4362 = vunpack.c.h.b16 %v3058
    %v4363 = vunpack.c.l.b16 %v3059
    %v4364 = vunpack.c.l.b16 %v3060
    %v4365 = vunpack.c.h.b16 %v3060
    %v4366 = vunpack.c.l.b16 %v3061
    %v4367 = vunpack.c.h.b16 %v3061
    %v4368 = vunpack.c.l.b16 %v3062
    %v4369 = vunpack.c.h.b16 %v3062
    %v4370 = vunpack.c.l.b16 %v3063
    %v4371 = vunpack.c.l.b16 %v3064
    %v4372 = vunpack.c.h.b16 %v3064
    %v4373 = vunpack.c.l.b16 %v3065
    %v4374 = vunpack.c.h.b16 %v3065
    %v4375 = vunpack.c.l.b16 %v3066
    %v4376 = vunpack.c.h.b16 %v3066
    %v4377 = vunpack.c.l.b16 %v3067
    %v4378 = vunpack.c.l.b16 %v3068
    %v4379 = vunpack.c.h.b16 %v3068
    %v4380 = vunpack.c.l.b16 %v3069
    %v4381 = vunpack.c.h.b16 %v3069
    %v4382 = vunpack.c.l.b16 %v3070
    %v4383 = vunpack.c.h.b16 %v3070
    %v4384 = vunpack.c.l.b16 %v3071
    %v4385 = vunpack.c.l.b16 %v3072
    %v4386 = vunpack.c.h.b16 %v3072
    %v4387 = vunpack.c.l.b16 %v3073
    %v4388 = vunpack.c.h.b16 %v3073
    %v4389 = vunpack.c.l.b16 %v3074
    %v4390 = vunpack.c.h.b16 %v3074
    %v4391 = vunpack.c.l.b16 %v3075
    %v4392 = vunpack.c.l.b16 %v3076
    %v4393 = vunpack.c.h.b16 %v3076
    %v4394 = vunpack.c.l.b16 %v3077
    %v4395 = vunpack.c.h.b16 %v3077
    %v4396 = vunpack.c.l.b16 %v3078
    %v4397 = vunpack.c.h.b16 %v3078
    %v4398 = vunpack.c.l.b16 %v3079
    %v4399 = vunpack.c.l.b16 %v3080
    %v4400 = vunpack.c.h.b16 %v3080
    %v4401 = vunpack.c.l.b16 %v3081
    %v4402 = vunpack.c.h.b16 %v3081
    %v4403 = vunpack.c.l.b16 %v3082
    %v4404 = vunpack.c.h.b16 %v3082
    %v4405 = vunpack.c.l.b16 %v3083
    %v4406 = vunpack.c.l.b16 %v3084
    %v4407 = vunpack.c.h.b16 %v3084
    %v4408 = vunpack.c.l.b16 %v3085
    %v4409 = vunpack.c.h.b16 %v3085
    %v4410 = vunpack.c.l.b16 %v3086
    %v4411 = vunpack.c.h.b16 %v3086
    %v4412 = vunpack.c.l.b16 %v3087
    %v4413 = vunpack.c.l.b16 %v3088
    %v4414 = vunpack.c.h.b16 %v3088
    %v4415 = vunpack.c.l.b16 %v3089
    %v4416 = vunpack.c.h.b16 %v3089
    %v4417 = vunpack.c.l.b16 %v3090
    %v4418 = vunpack.c.h.b16 %v3090
    %v4419 = vunpack.c.l.b16 %v3091
    %v4420 = vunpack.c.l.b16 %v3092
    %v4421 = vunpack.c.h.b16 %v3092
    %v4422 = vunpack.c.l.b16 %v3093
    %v4423 = vunpack.c.h.b16 %v3093
    %v4424 = vunpack.c.l.b16 %v3094
    %v4425 = vunpack.c.h.b16 %v3094
    %v4426 = vunpack.c.l.b16 %v3095
    %v4427 = vunpack.c.l.b16 %v3096
    %v4428 = vunpack.c.h.b16 %v3096
    %v4429 = vunpack.c.l.b16 %v3097
    %v4430 = vunpack.c.h.b16 %v3097
    %v4431 = vunpack.c.l.b16 %v3098
    %v4432 = vunpack.c.h.b16 %v3098
    %v4433 = vunpack.c.l.b16 %v3099
    %v4434 = vunpack.c.l.b16 %v3100
    %v4435 = vunpack.c.h.b16 %v3100
    %v4436 = vunpack.c.l.b16 %v3101
    %v4437 = vunpack.c.h.b16 %v3101
    %v4438 = vunpack.c.l.b16 %v3102
    %v4439 = vunpack.c.h.b16 %v3102
    %v4440 = vunpack.c.l.b16 %v3103
    %v4441 = vunpack.c.l.b16 %v3104
    %v4442 = vunpack.c.h.b16 %v3104
    %v4443 = vunpack.c.l.b16 %v3105
    %v4444 = vunpack.c.h.b16 %v3105
    %v4445 = vunpack.c.l.b16 %v3106
    %v4446 = vunpack.c.h.b16 %v3106
    %v4447 = vunpack.c.l.b16 %v3107
    %v4448 = vunpack.c.l.b16 %v3108
    %v4449 = vunpack.c.h.b16 %v3108
    %v4450 = vunpack.c.l.b16 %v3109
    %v4451 = vunpack.c.h.b16 %v3109
    %v4452 = vunpack.c.l.b16 %v3110
    %v4453 = vunpack.c.h.b16 %v3110
    %v4454 = vunpack.c.l.b16 %v3111
    %v4455 = vunpack.c.l.b16 %v3112
    %v4456 = vunpack.c.h.b16 %v3112
    %v4457 = vunpack.c.l.b16 %v3113
    %v4458 = vunpack.c.h.b16 %v3113
    %v4459 = vunpack.c.l.b16 %v3114
    %v4460 = vunpack.c.h.b16 %v3114
    %v4461 = vunpack.c.l.b16 %v3115
    %v4462 = vunpack.c.l.b16 %v3116
    %v4463 = vunpack.c.h.b16 %v3116
    %v4464 = vunpack.c.l.b16 %v3117
    %v4465 = vunpack.c.h.b16 %v3117
    %v4466 = vunpack.c.l.b16 %v3118
    %v4467 = vunpack.c.h.b16 %v3118
    %v4468 = vunpack.c.l.b16 %v3119
    %v4469 = vunpack.c.l.b16 %v3120
    %v4470 = vunpack.c.h.b16 %v3120
    %v4471 = vunpack.c.l.b16 %v3121
    %v4472 = vunpack.c.h.b16 %v3121
    %v4473 = vunpack.c.l.b16 %v3122
    %v4474 = vunpack.c.h.b16 %v3122
    %v4475 = vunpack.c.l.b16 %v3123
    %v4476 = vunpack.c.l.b16 %v3124
    %v4477 = vunpack.c.h.b16 %v3124
    %v4478 = vunpack.c.l.b16 %v3125
    %v4479 = vunpack.c.h.b16 %v3125
    %v4480 = vunpack.c.l.b16 %v3126
    %v4481 = vunpack.c.h.b16 %v3126
    %v4482 = vunpack.c.l.b16 %v3127
    %v4483 = vunpack.c.l.b16 %v3128
    %v4484 = vunpack.c.h.b16 %v3128
    %v4485 = vunpack.c.l.b16 %v3129
    %v4486 = vunpack.c.h.b16 %v3129
    %v4487 = vunpack.c.l.b16 %v3130
    %v4488 = vunpack.c.h.b16 %v3130
    %v4489 = vunpack.c.l.b16 %v3131
    %v4490 = vunpack.c.l.b16 %v3132
    %v4491 = vunpack.c.h.b16 %v3132
    %v4492 = vunpack.c.l.b16 %v3133
    %v4493 = vunpack.c.h.b16 %v3133
    %v4494 = vunpack.c.l.b16 %v3134
    %v4495 = vunpack.c.h.b16 %v3134
    %v4496 = vunpack.c.l.b16 %v3135
    %v4497 = vunpack.c.l.b16 %v3136
    %v4498 = vunpack.c.h.b16 %v3136
    %v4499 = vunpack.c.l.b16 %v3137
    %v4500 = vunpack.c.h.b16 %v3137
    %v4501 = vunpack.c.l.b16 %v3138
    %v4502 = vunpack.c.h.b16 %v3138
    %v4503 = vunpack.c.l.b16 %v3139
    %v4504 = vunpack.c.l.b16 %v3140
    %v4505 = vunpack.c.h.b16 %v3140
    %v4506 = vunpack.c.l.b16 %v3141
    %v4507 = vunpack.c.h.b16 %v3141
    %v4508 = vunpack.c.l.b16 %v3142
    %v4509 = vunpack.c.h.b16 %v3142
    %v4510 = vunpack.c.l.b16 %v3143
    %v4511 = vunpack.c.l.b16 %v3144
    %v4512 = vunpack.c.h.b16 %v3144
    %v4513 = vunpack.c.l.b16 %v3145
    %v4514 = vunpack.c.h.b16 %v3145
    %v4515 = vunpack.c.l.b16 %v3146
    %v4516 = vunpack.c.h.b16 %v3146
    %v4517 = vunpack.c.l.b16 %v3147
    %v4518 = vunpack.c.l.b16 %v3148
    %v4519 = vunpack.c.h.b16 %v3148
    %v4520 = vunpack.c.l.b16 %v3149
    %v4521 = vunpack.c.h.b16 %v3149
    %v4522 = vunpack.c.l.b16 %v3150
    %v4523 = vunpack.c.h.b16 %v3150
    %v4524 = vunpack.c.l.b16 %v3151
    %v4525 = vunpack.c.l.b16 %v3152
    %v4526 = vunpack.c.h.b16 %v3152
    %v4527 = vunpack.c.l.b16 %v3153
    %v4528 = vunpack.c.h.b16 %v3153
    %v4529 = vunpack.c.l.b16 %v3154
    %v4530 = vunpack.c.h.b16 %v3154
    %v4531 = vunpack.c.l.b16 %v3155
    %v4532 = vunpack.c.l.b16 %v3156
    %v4533 = vunpack.c.h.b16 %v3156
    %v4534 = vunpack.c.l.b16 %v3157
    %v4535 = vunpack.c.h.b16 %v3157
    %v4536 = vunpack.c.l.b16 %v3158
    %v4537 = vunpack.c.h.b16 %v3158
    %v4538 = vunpack.c.l.b16 %v3159
    %v4539 = vunpack.c.l.b16 %v3160
    %v4540 = vunpack.c.h.b16 %v3160
    %v4541 = vunpack.c.l.b16 %v3161
    %v4542 = vunpack.c.h.b16 %v3161
    %v4543 = vunpack.c.l.b16 %v3162
    %v4544 = vunpack.c.h.b16 %v3162
    %v4545 = vunpack.c.l.b16 %v3163
    %v4546 = vunpack.c.l.b16 %v3164
    %v4547 = vunpack.c.h.b16 %v3164
    %v4548 = vunpack.c.l.b16 %v3165
    %v4549 = vunpack.c.h.b16 %v3165
    %v4550 = vunpack.c.l.b16 %v3166
    %v4551 = vunpack.c.h.b16 %v3166
    %v4552 = vunpack.c.l.b16 %v3167
    %v4553 = vunpack.c.l.b16 %v3168
    %v4554 = vunpack.c.h.b16 %v3168
    %v4555 = vunpack.c.l.b16 %v3169
    %v4556 = vunpack.c.h.b16 %v3169
    %v4557 = vunpack.c.l.b16 %v3170
    %v4558 = vunpack.c.h.b16 %v3170
    %v4559 = vunpack.c.l.b16 %v3171
    %v4560 = vunpack.c.l.b16 %v3172
    %v4561 = vunpack.c.h.b16 %v3172
    %v4562 = vunpack.c.l.b16 %v3173
    %v4563 = vunpack.c.h.b16 %v3173
    %v4564 = vunpack.c.l.b16 %v3174
    %v4565 = vunpack.c.h.b16 %v3174
    %v4566 = vunpack.c.l.b16 %v3175
    %v4567 = vunpack.c.l.b16 %v3176
    %v4568 = vunpack.c.h.b16 %v3176
    %v4569 = vunpack.c.l.b16 %v3177
    %v4570 = vunpack.c.h.b16 %v3177
    %v4571 = vunpack.c.l.b16 %v3178
    %v4572 = vunpack.c.h.b16 %v3178
    %v4573 = vunpack.c.l.b16 %v3179
    %v4574 = vunpack.c.l.b16 %v3180
    %v4575 = vunpack.c.h.b16 %v3180
    %v4576 = vunpack.c.l.b16 %v3181
    %v4577 = vunpack.c.h.b16 %v3181
    %v4578 = vunpack.c.l.b16 %v3182
    %v4579 = vunpack.c.h.b16 %v3182
    %v4580 = vunpack.c.l.b16 %v3183
    %v4581 = vunpack.c.l.b16 %v3184
    %v4582 = vunpack.c.h.b16 %v3184
    %v4583 = vunpack.c.l.b16 %v3185
    %v4584 = vunpack.c.h.b16 %v3185
    %v4585 = vunpack.c.l.b16 %v3186
    %v4586 = vunpack.c.h.b16 %v3186
    %v4587 = vunpack.c.l.b16 %v3187
    %v4588 = vunpack.c.l.b16 %v3188
    %v4589 = vunpack.c.h.b16 %v3188
    %v4590 = vunpack.c.l.b16 %v3189
    %v4591 = vunpack.c.h.b16 %v3189
    %v4592 = vunpack.c.l.b16 %v3190
    %v4593 = vunpack.c.h.b16 %v3190
    %v4594 = vunpack.c.l.b16 %v3191
    %v4595 = vunpack.c.l.b16 %v3192
    %v4596 = vunpack.c.h.b16 %v3192
    %v4597 = vunpack.c.l.b16 %v3193
    %v4598 = vunpack.c.h.b16 %v3193
    %v4599 = vunpack.c.l.b16 %v3194
    %v4600 = vunpack.c.h.b16 %v3194
    %v4601 = vunpack.c.l.b16 %v3195
    %v4602 = vunpack.c.l.b16 %v3196
    %v4603 = vunpack.c.h.b16 %v3196
    %v4604 = vunpack.c.l.b16 %v3197
    %v4605 = vunpack.c.h.b16 %v3197
    %v4606 = vunpack.c.l.b16 %v3198
    %v4607 = vunpack.c.h.b16 %v3198
    %v4608 = vunpack.c.l.b16 %v3199
    %v4609 = vunpack.c.l.b16 %v3200
    %v4610 = vunpack.c.h.b16 %v3200
    %v4611 = vunpack.c.l.b16 %v3201
    %v4612 = vunpack.c.h.b16 %v3201
    %v4613 = vunpack.c.l.b16 %v3202
    %v4614 = vunpack.c.h.b16 %v3202
    %v4615 = vunpack.c.l.b16 %v3203
    %v4616 = vunpack.c.l.b16 %v3204
    %v4617 = vunpack.c.h.b16 %v3204
    %v4618 = vunpack.c.l.b16 %v3205
    %v4619 = vunpack.c.h.b16 %v3205
    %v4620 = vunpack.c.l.b16 %v3206
    %v4621 = vunpack.c.h.b16 %v3206
    %v4622 = vunpack.c.l.b16 %v3207
    %v4623 = vunpack.c.l.b16 %v3208
    %v4624 = vunpack.c.h.b16 %v3208
    %v4625 = vunpack.c.l.b16 %v3209
    %v4626 = vunpack.c.h.b16 %v3209
    %v4627 = vunpack.c.l.b16 %v3210
    %v4628 = vunpack.c.h.b16 %v3210
    %v4629 = vunpack.c.l.b16 %v3211
    %v4630 = vunpack.c.l.b16 %v3212
    %v4631 = vunpack.c.h.b16 %v3212
    %v4632 = vunpack.c.l.b16 %v3213
    %v4633 = vunpack.c.h.b16 %v3213
    %v4634 = vunpack.c.l.b16 %v3214
    %v4635 = vunpack.c.h.b16 %v3214
    %v4636 = vunpack.c.l.b16 %v3215
    %v4637 = vunpack.c.l.b16 %v3216
    %v4638 = vunpack.c.h.b16 %v3216
    %v4639 = vunpack.c.l.b16 %v3217
    %v4640 = vunpack.c.h.b16 %v3217
    %v4641 = vunpack.c.l.b16 %v3218
    %v4642 = vunpack.c.h.b16 %v3218
    %v4643 = vunpack.c.l.b16 %v3219
    %v4644 = vunpack.c.l.b16 %v3220
    %v4645 = vunpack.c.h.b16 %v3220
    %v4646 = vunpack.c.l.b16 %v3221
    %v4647 = vunpack.c.h.b16 %v3221
    %v4648 = vunpack.c.l.b16 %v3222
    %v4649 = vunpack.c.h.b16 %v3222
    %v4650 = vunpack.c.l.b16 %v3223
    %v4651 = vunpack.c.l.b16 %v3224
    %v4652 = vunpack.c.h.b16 %v3224
    %v4653 = vunpack.c.l.b16 %v3225
    %v4654 = vunpack.c.h.b16 %v3225
    %v4655 = vunpack.c.l.b16 %v3226
    %v4656 = vunpack.c.h.b16 %v3226
    %v4657 = vunpack.c.l.b16 %v3227
    %v4658 = vunpack.c.l.b16 %v3228
    %v4659 = vunpack.c.h.b16 %v3228
    %v4660 = vunpack.c.l.b16 %v3229
    %v4661 = vunpack.c.h.b16 %v3229
    %v4662 = vunpack.c.l.b16 %v3230
    %v4663 = vunpack.c.h.b16 %v3230
    %v4664 = vunpack.c.l.b16 %v3231
    %v4665 = vunpack.c.l.b16 %v3232
    %v4666 = vunpack.c.h.b16 %v3232
    %v4667 = vunpack.c.l.b16 %v3233
    %v4668 = vunpack.c.h.b16 %v3233
    %v4669 = vunpack.c.l.b16 %v3234
    %v4670 = vunpack.c.h.b16 %v3234
    %v4671 = vunpack.c.l.b16 %v3235
    %v4672 = vunpack.c.l.b16 %v3236
    %v4673 = vunpack.c.h.b16 %v3236
    %v4674 = vunpack.c.l.b16 %v3237
    %v4675 = vunpack.c.h.b16 %v3237
    %v4676 = vunpack.c.l.b16 %v3238
    %v4677 = vunpack.c.h.b16 %v3238
    %v4678 = vunpack.c.l.b16 %v3239
    %v4679 = vunpack.c.l.b16 %v3240
    %v4680 = vunpack.c.h.b16 %v3240
    %v4681 = vunpack.c.l.b16 %v3241
    %v4682 = vunpack.c.h.b16 %v3241
    %v4683 = vunpack.c.l.b16 %v3242
    %v4684 = vunpack.c.h.b16 %v3242
    %v4685 = vunpack.c.l.b16 %v3243
    %v4686 = vunpack.c.l.b16 %v3244
    %v4687 = vunpack.c.h.b16 %v3244
    %v4688 = vunpack.c.l.b16 %v3245
    %v4689 = vunpack.c.h.b16 %v3245
    %v4690 = vunpack.c.l.b16 %v3246
    %v4691 = vunpack.c.h.b16 %v3246
    %v4692 = vunpack.c.l.b16 %v3247
    %v4693 = vpack.c.b16 %v3804, %v3797
    %v4694 = vpack.c.b16 %v3805, %v3798
    %v4695 = vpack.c.b16 %v3806, %v3799
    %v4696 = vpack.c.b16 %v3807, %v3800
    %v4697 = vpack.c.b16 %v3808, %v3801
    %v4698 = vpack.c.b16 %v3809, %v3802
    %v4699 = vpack.c.b16 %v3810, %v3803
    %v4700 = vpack.c.b16 %v3818, %v3811
    %v4701 = vpack.c.b16 %v3819, %v3812
    %v4702 = vpack.c.b16 %v3820, %v3813
    %v4703 = vpack.c.b16 %v3821, %v3814
    %v4704 = vpack.c.b16 %v3822, %v3815
    %v4705 = vpack.c.b16 %v3823, %v3816
    %v4706 = vpack.c.b16 %v3824, %v3817
    %v4707 = vpack.c.b16 %v3832, %v3825
    %v4708 = vpack.c.b16 %v3833, %v3826
    %v4709 = vpack.c.b16 %v3834, %v3827
    %v4710 = vpack.c.b16 %v3835, %v3828
    %v4711 = vpack.c.b16 %v3836, %v3829
    %v4712 = vpack.c.b16 %v3837, %v3830
    %v4713 = vpack.c.b16 %v3838, %v3831
    %v4714 = vpack.c.b16 %v3846, %v3839
    %v4715 = vpack.c.b16 %v3847, %v3840
    %v4716 = vpack.c.b16 %v3848, %v3841
    %v4717 = vpack.c.b16 %v3849, %v3842
    %v4718 = vpack.c.b16 %v3850, %v3843
    %v4719 = vpack.c.b16 %v3851, %v3844
    %v4720 = vpack.c.b16 %v3852, %v3845
    %v4721 = vpack.c.b16 %v3860, %v3853
    %v4722 = vpack.c.b16 %v3861, %v3854
    %v4723 = vpack.c.b16 %v3862, %v3855
    %v4724 = vpack.c.b16 %v3863, %v3856
    %v4725 = vpack.c.b16 %v3864, %v3857
    %v4726 = vpack.c.b16 %v3865, %v3858
    %v4727 = vpack.c.b16 %v3866, %v3859
    %v4728 = vpack.c.b16 %v3874, %v3867
    %v4729 = vpack.c.b16 %v3875, %v3868
    %v4730 = vpack.c.b16 %v3876, %v3869
    %v4731 = vpack.c.b16 %v3877, %v3870
    %v4732 = vpack.c.b16 %v3878, %v3871
    %v4733 = vpack.c.b16 %v3879, %v3872
    %v4734 = vpack.c.b16 %v3880, %v3873
    %v4735 = vpack.c.b16 %v3888, %v3881
    %v4736 = vpack.c.b16 %v3889, %v3882
    %v4737 = vpack.c.b16 %v3890, %v3883
    %v4738 = vpack.c.b16 %v3891, %v3884
    %v4739 = vpack.c.b16 %v3892, %v3885
    %v4740 = vpack.c.b16 %v3893, %v3886
    %v4741 = vpack.c.b16 %v3894, %v3887
    %v4742 = vpack.c.b16 %v3902, %v3895
    %v4743 = vpack.c.b16 %v3903, %v3896
    %v4744 = vpack.c.b16 %v3904, %v3897
    %v4745 = vpack.c.b16 %v3905, %v3898
    %v4746 = vpack.c.b16 %v3906, %v3899
    %v4747 = vpack.c.b16 %v3907, %v3900
    %v4748 = vpack.c.b16 %v3908, %v3901
    %v4749 = vpack.c.b16 %v3916, %v3909
    %v4750 = vpack.c.b16 %v3917, %v3910
    %v4751 = vpack.c.b16 %v3918, %v3911
    %v4752 = vpack.c.b16 %v3919, %v3912
    %v4753 = vpack.c.b16 %v3920, %v3913
    %v4754 = vpack.c.b16 %v3921, %v3914
    %v4755 = vpack.c.b16 %v3922, %v3915
    %v4756 = vpack.c.b16 %v3930, %v3923
    %v4757 = vpack.c.b16 %v3931, %v3924
    %v4758 = vpack.c.b16 %v3932, %v3925
    %v4759 = vpack.c.b16 %v3933, %v3926
    %v4760 = vpack.c.b16 %v3934, %v3927
    %v4761 = vpack.c.b16 %v3935, %v3928
    %v4762 = vpack.c.b16 %v3936, %v3929
    %v4763 = vpack.c.b16 %v3944, %v3937
    %v4764 = vpack.c.b16 %v3945, %v3938
    %v4765 = vpack.c.b16 %v3946, %v3939
    %v4766 = vpack.c.b16 %v3947, %v3940
    %v4767 = vpack.c.b16 %v3948, %v3941
    %v4768 = vpack.c.b16 %v3949, %v3942
    %v4769 = vpack.c.b16 %v3950, %v3943
    %v4770 = vpack.c.b16 %v3958, %v3951
    %v4771 = vpack.c.b16 %v3959, %v3952
    %v4772 = vpack.c.b16 %v3960, %v3953
    %v4773 = vpack.c.b16 %v3961, %v3954
    %v4774 = vpack.c.b16 %v3962, %v3955
    %v4775 = vpack.c.b16 %v3963, %v3956
    %v4776 = vpack.c.b16 %v3964, %v3957
    %v4777 = vpack.c.b16 %v3972, %v3965
    %v4778 = vpack.c.b16 %v3973, %v3966
    %v4779 = vpack.c.b16 %v3974, %v3967
    %v4780 = vpack.c.b16 %v3975, %v3968
    %v4781 = vpack.c.b16 %v3976, %v3969
    %v4782 = vpack.c.b16 %v3977, %v3970
    %v4783 = vpack.c.b16 %v3978, %v3971
    %v4784 = vpack.c.b16 %v3986, %v3979
    %v4785 = vpack.c.b16 %v3987, %v3980
    %v4786 = vpack.c.b16 %v3988, %v3981
    %v4787 = vpack.c.b16 %v3989, %v3982
    %v4788 = vpack.c.b16 %v3990, %v3983
    %v4789 = vpack.c.b16 %v3991, %v3984
    %v4790 = vpack.c.b16 %v3992, %v3985
    %v4791 = vpack.c.b16 %v4000, %v3993
    %v4792 = vpack.c.b16 %v4001, %v3994
    %v4793 = vpack.c.b16 %v4002, %v3995
    %v4794 = vpack.c.b16 %v4003, %v3996
    %v4795 = vpack.c.b16 %v4004, %v3997
    %v4796 = vpack.c.b16 %v4005, %v3998
    %v4797 = vpack.c.b16 %v4006, %v3999
    %v4798 = vpack.c.b16 %v4014, %v4007
    %v4799 = vpack.c.b16 %v4015, %v4008
    %v4800 = vpack.c.b16 %v4016, %v4009
    %v4801 = vpack.c.b16 %v4017, %v4010
    %v4802 = vpack.c.b16 %v4018, %v4011
    %v4803 = vpack.c.b16 %v4019, %v4012
    %v4804 = vpack.c.b16 %v4020, %v4013
    %v4805 = vpack.c.b16 %v4028, %v4021
    %v4806 = vpack.c.b16 %v4029, %v4022
    %v4807 = vpack.c.b16 %v4030, %v4023
    %v4808 = vpack.c.b16 %v4031, %v4024
    %v4809 = vpack.c.b16 %v4032, %v4025
    %v4810 = vpack.c.b16 %v4033, %v4026
    %v4811 = vpack.c.b16 %v4034, %v4027
    %v4812 = vpack.c.b16 %v4042, %v4035
    %v4813 = vpack.c.b16 %v4043, %v4036
    %v4814 = vpack.c.b16 %v4044, %v4037
    %v4815 = vpack.c.b16 %v4045, %v4038
    %v4816 = vpack.c.b16 %v4046, %v4039
    %v4817 = vpack.c.b16 %v4047, %v4040
    %v4818 = vpack.c.b16 %v4048, %v4041
    %v4819 = vpack.c.b16 %v4056, %v4049
    %v4820 = vpack.c.b16 %v4057, %v4050
    %v4821 = vpack.c.b16 %v4058, %v4051
    %v4822 = vpack.c.b16 %v4059, %v4052
    %v4823 = vpack.c.b16 %v4060, %v4053
    %v4824 = vpack.c.b16 %v4061, %v4054
    %v4825 = vpack.c.b16 %v4062, %v4055
    %v4826 = vpack.c.b16 %v4070, %v4063
    %v4827 = vpack.c.b16 %v4071, %v4064
    %v4828 = vpack.c.b16 %v4072, %v4065
    %v4829 = vpack.c.b16 %v4073, %v4066
    %v4830 = vpack.c.b16 %v4074, %v4067
    %v4831 = vpack.c.b16 %v4075, %v4068
    %v4832 = vpack.c.b16 %v4076, %v4069
    %v4833 = vpack.c.b16 %v4084, %v4077
    %v4834 = vpack.c.b16 %v4085, %v4078
    %v4835 = vpack.c.b16 %v4086, %v4079
    %v4836 = vpack.c.b16 %v4087, %v4080
    %v4837 = vpack.c.b16 %v4088, %v4081
    %v4838 = vpack.c.b16 %v4089, %v4082
    %v4839 = vpack.c.b16 %v4090, %v4083
    %v4840 = vpack.c.b16 %v4098, %v4091
    %v4841 = vpack.c.b16 %v4099, %v4092
    %v4842 = vpack.c.b16 %v4100, %v4093
    %v4843 = vpack.c.b16 %v4101, %v4094
    %v4844 = vpack.c.b16 %v4102, %v4095
    %v4845 = vpack.c.b16 %v4103, %v4096
    %v4846 = vpack.c.b16 %v4104, %v4097
    %v4847 = vpack.c.b16 %v4112, %v4105
    %v4848 = vpack.c.b16 %v4113, %v4106
    %v4849 = vpack.c.b16 %v4114, %v4107
    %v4850 = vpack.c.b16 %v4115, %v4108
    %v4851 = vpack.c.b16 %v4116, %v4109
    %v4852 = vpack.c.b16 %v4117, %v4110
    %v4853 = vpack.c.b16 %v4118, %v4111
    %v4854 = vpack.c.b16 %v4126, %v4119
    %v4855 = vpack.c.b16 %v4127, %v4120
    %v4856 = vpack.c.b16 %v4128, %v4121
    %v4857 = vpack.c.b16 %v4129, %v4122
    %v4858 = vpack.c.b16 %v4130, %v4123
    %v4859 = vpack.c.b16 %v4131, %v4124
    %v4860 = vpack.c.b16 %v4132, %v4125
    %v4861 = vpack.c.b16 %v4140, %v4133
    %v4862 = vpack.c.b16 %v4141, %v4134
    %v4863 = vpack.c.b16 %v4142, %v4135
    %v4864 = vpack.c.b16 %v4143, %v4136
    %v4865 = vpack.c.b16 %v4144, %v4137
    %v4866 = vpack.c.b16 %v4145, %v4138
    %v4867 = vpack.c.b16 %v4146, %v4139
    %v4868 = vpack.c.b16 %v4154, %v4147
    %v4869 = vpack.c.b16 %v4155, %v4148
    %v4870 = vpack.c.b16 %v4156, %v4149
    %v4871 = vpack.c.b16 %v4157, %v4150
    %v4872 = vpack.c.b16 %v4158, %v4151
    %v4873 = vpack.c.b16 %v4159, %v4152
    %v4874 = vpack.c.b16 %v4160, %v4153
    %v4875 = vpack.c.b16 %v4168, %v4161
    %v4876 = vpack.c.b16 %v4169, %v4162
    %v4877 = vpack.c.b16 %v4170, %v4163
    %v4878 = vpack.c.b16 %v4171, %v4164
    %v4879 = vpack.c.b16 %v4172, %v4165
    %v4880 = vpack.c.b16 %v4173, %v4166
    %v4881 = vpack.c.b16 %v4174, %v4167
    %v4882 = vpack.c.b16 %v4182, %v4175
    %v4883 = vpack.c.b16 %v4183, %v4176
    %v4884 = vpack.c.b16 %v4184, %v4177
    %v4885 = vpack.c.b16 %v4185, %v4178
    %v4886 = vpack.c.b16 %v4186, %v4179
    %v4887 = vpack.c.b16 %v4187, %v4180
    %v4888 = vpack.c.b16 %v4188, %v4181
    %v4889 = vpack.c.b16 %v4196, %v4189
    %v4890 = vpack.c.b16 %v4197, %v4190
    %v4891 = vpack.c.b16 %v4198, %v4191
    %v4892 = vpack.c.b16 %v4199, %v4192
    %v4893 = vpack.c.b16 %v4200, %v4193
    %v4894 = vpack.c.b16 %v4201, %v4194
    %v4895 = vpack.c.b16 %v4202, %v4195
    %v4896 = vpack.c.b16 %v4210, %v4203
    %v4897 = vpack.c.b16 %v4211, %v4204
    %v4898 = vpack.c.b16 %v4212, %v4205
    %v4899 = vpack.c.b16 %v4213, %v4206
    %v4900 = vpack.c.b16 %v4214, %v4207
    %v4901 = vpack.c.b16 %v4215, %v4208
    %v4902 = vpack.c.b16 %v4216, %v4209
    %v4903 = vpack.c.b16 %v4224, %v4217
    %v4904 = vpack.c.b16 %v4225, %v4218
    %v4905 = vpack.c.b16 %v4226, %v4219
    %v4906 = vpack.c.b16 %v4227, %v4220
    %v4907 = vpack.c.b16 %v4228, %v4221
    %v4908 = vpack.c.b16 %v4229, %v4222
    %v4909 = vpack.c.b16 %v4230, %v4223
    %v4910 = vpack.c.b16 %v4238, %v4231
    %v4911 = vpack.c.b16 %v4239, %v4232
    %v4912 = vpack.c.b16 %v4240, %v4233
    %v4913 = vpack.c.b16 %v4241, %v4234
    %v4914 = vpack.c.b16 %v4242, %v4235
    %v4915 = vpack.c.b16 %v4243, %v4236
    %v4916 = vpack.c.b16 %v4244, %v4237
    %v4917 = vpack.c.b16 %v4252, %v4245
    %v4918 = vpack.c.b16 %v4253, %v4246
    %v4919 = vpack.c.b16 %v4254, %v4247
    %v4920 = vpack.c.b16 %v4255, %v4248
    %v4921 = vpack.c.b16 %v4256, %v4249
    %v4922 = vpack.c.b16 %v4257, %v4250
    %v4923 = vpack.c.b16 %v4258, %v4251
    %v4924 = vpack.c.b16 %v4266, %v4259
    %v4925 = vpack.c.b16 %v4267, %v4260
    %v4926 = vpack.c.b16 %v4268, %v4261
    %v4927 = vpack.c.b16 %v4269, %v4262
    %v4928 = vpack.c.b16 %v4270, %v4263
    %v4929 = vpack.c.b16 %v4271, %v4264
    %v4930 = vpack.c.b16 %v4272, %v4265
    %v4931 = vpack.c.b16 %v4280, %v4273
    %v4932 = vpack.c.b16 %v4281, %v4274
    %v4933 = vpack.c.b16 %v4282, %v4275
    %v4934 = vpack.c.b16 %v4283, %v4276
    %v4935 = vpack.c.b16 %v4284, %v4277
    %v4936 = vpack.c.b16 %v4285, %v4278
    %v4937 = vpack.c.b16 %v4286, %v4279
    %v4938 = vpack.c.b16 %v4294, %v4287
    %v4939 = vpack.c.b16 %v4295, %v4288
    %v4940 = vpack.c.b16 %v4296, %v4289
    %v4941 = vpack.c.b16 %v4297, %v4290
    %v4942 = vpack.c.b16 %v4298, %v4291
    %v4943 = vpack.c.b16 %v4299, %v4292
    %v4944 = vpack.c.b16 %v4300, %v4293
    %v4945 = vpack.c.b16 %v4308, %v4301
    %v4946 = vpack.c.b16 %v4309, %v4302
    %v4947 = vpack.c.b16 %v4310, %v4303
    %v4948 = vpack.c.b16 %v4311, %v4304
    %v4949 = vpack.c.b16 %v4312, %v4305
    %v4950 = vpack.c.b16 %v4313, %v4306
    %v4951 = vpack.c.b16 %v4314, %v4307
    %v4952 = vpack.c.b16 %v4322, %v4315
    %v4953 = vpack.c.b16 %v4323, %v4316
    %v4954 = vpack.c.b16 %v4324, %v4317
    %v4955 = vpack.c.b16 %v4325, %v4318
    %v4956 = vpack.c.b16 %v4326, %v4319
    %v4957 = vpack.c.b16 %v4327, %v4320
    %v4958 = vpack.c.b16 %v4328, %v4321
    %v4959 = vpack.c.b16 %v4336, %v4329
    %v4960 = vpack.c.b16 %v4337, %v4330
    %v4961 = vpack.c.b16 %v4338, %v4331
    %v4962 = vpack.c.b16 %v4339, %v4332
    %v4963 = vpack.c.b16 %v4340, %v4333
    %v4964 = vpack.c.b16 %v4341, %v4334
    %v4965 = vpack.c.b16 %v4342, %v4335
    %v4966 = vpack.c.b16 %v4350, %v4343
    %v4967 = vpack.c.b16 %v4351, %v4344
    %v4968 = vpack.c.b16 %v4352, %v4345
    %v4969 = vpack.c.b16 %v4353, %v4346
    %v4970 = vpack.c.b16 %v4354, %v4347
    %v4971 = vpack.c.b16 %v4355, %v4348
    %v4972 = vpack.c.b16 %v4356, %v4349
    %v4973 = vpack.c.b16 %v4364, %v4357
    %v4974 = vpack.c.b16 %v4365, %v4358
    %v4975 = vpack.c.b16 %v4366, %v4359
    %v4976 = vpack.c.b16 %v4367, %v4360
    %v4977 = vpack.c.b16 %v4368, %v4361
    %v4978 = vpack.c.b16 %v4369, %v4362
    %v4979 = vpack.c.b16 %v4370, %v4363
    %v4980 = vpack.c.b16 %v4378, %v4371
    %v4981 = vpack.c.b16 %v4379, %v4372
    %v4982 = vpack.c.b16 %v4380, %v4373
    %v4983 = vpack.c.b16 %v4381, %v4374
    %v4984 = vpack.c.b16 %v4382, %v4375
    %v4985 = vpack.c.b16 %v4383, %v4376
    %v4986 = vpack.c.b16 %v4384, %v4377
    %v4987 = vpack.c.b16 %v4392, %v4385
    %v4988 = vpack.c.b16 %v4393, %v4386
    %v4989 = vpack.c.b16 %v4394, %v4387
    %v4990 = vpack.c.b16 %v4395, %v4388
    %v4991 = vpack.c.b16 %v4396, %v4389
    %v4992 = vpack.c.b16 %v4397, %v4390
    %v4993 = vpack.c.b16 %v4398, %v4391
    %v4994 = vpack.c.b16 %v4406, %v4399
    %v4995 = vpack.c.b16 %v4407, %v4400
    %v4996 = vpack.c.b16 %v4408, %v4401
    %v4997 = vpack.c.b16 %v4409, %v4402
    %v4998 = vpack.c.b16 %v4410, %v4403
    %v4999 = vpack.c.b16 %v4411, %v4404
    %v5000 = vpack.c.b16 %v4412, %v4405
    %v5001 = vpack.c.b16 %v4420, %v4413
    %v5002 = vpack.c.b16 %v4421, %v4414
    %v5003 = vpack.c.b16 %v4422, %v4415
    %v5004 = vpack.c.b16 %v4423, %v4416
    %v5005 = vpack.c.b16 %v4424, %v4417
    %v5006 = vpack.c.b16 %v4425, %v4418
    %v5007 = vpack.c.b16 %v4426, %v4419
    %v5008 = vpack.c.b16 %v4434, %v4427
    %v5009 = vpack.c.b16 %v4435, %v4428
    %v5010 = vpack.c.b16 %v4436, %v4429
    %v5011 = vpack.c.b16 %v4437, %v4430
    %v5012 = vpack.c.b16 %v4438, %v4431
    %v5013 = vpack.c.b16 %v4439, %v4432
    %v5014 = vpack.c.b16 %v4440, %v4433
    %v5015 = vpack.c.b16 %v4448, %v4441
    %v5016 = vpack.c.b16 %v4449, %v4442
    %v5017 = vpack.c.b16 %v4450, %v4443
    %v5018 = vpack.c.b16 %v4451, %v4444
    %v5019 = vpack.c.b16 %v4452, %v4445
    %v5020 = vpack.c.b16 %v4453, %v4446
    %v5021 = vpack.c.b16 %v4454, %v4447
    %v5022 = vpack.c.b16 %v4462, %v4455
    %v5023 = vpack.c.b16 %v4463, %v4456
    %v5024 = vpack.c.b16 %v4464, %v4457
    %v5025 = vpack.c.b16 %v4465, %v4458
    %v5026 = vpack.c.b16 %v4466, %v4459
    %v5027 = vpack.c.b16 %v4467, %v4460
    %v5028 = vpack.c.b16 %v4468, %v4461
    %v5029 = vpack.c.b16 %v4476, %v4469
    %v5030 = vpack.c.b16 %v4477, %v4470
    %v5031 = vpack.c.b16 %v4478, %v4471
    %v5032 = vpack.c.b16 %v4479, %v4472
    %v5033 = vpack.c.b16 %v4480, %v4473
    %v5034 = vpack.c.b16 %v4481, %v4474
    %v5035 = vpack.c.b16 %v4482, %v4475
    %v5036 = vpack.c.b16 %v4490, %v4483
    %v5037 = vpack.c.b16 %v4491, %v4484
    %v5038 = vpack.c.b16 %v4492, %v4485
    %v5039 = vpack.c.b16 %v4493, %v4486
    %v5040 = vpack.c.b16 %v4494, %v4487
    %v5041 = vpack.c.b16 %v4495, %v4488
    %v5042 = vpack.c.b16 %v4496, %v4489
    %v5043 = vpack.c.b16 %v4504, %v4497
    %v5044 = vpack.c.b16 %v4505, %v4498
    %v5045 = vpack.c.b16 %v4506, %v4499
    %v5046 = vpack.c.b16 %v4507, %v4500
    %v5047 = vpack.c.b16 %v4508, %v4501
    %v5048 = vpack.c.b16 %v4509, %v4502
    %v5049 = vpack.c.b16 %v4510, %v4503
    %v5050 = vpack.c.b16 %v4518, %v4511
    %v5051 = vpack.c.b16 %v4519, %v4512
    %v5052 = vpack.c.b16 %v4520, %v4513
    %v5053 = vpack.c.b16 %v4521, %v4514
    %v5054 = vpack.c.b16 %v4522, %v4515
    %v5055 = vpack.c.b16 %v4523, %v4516
    %v5056 = vpack.c.b16 %v4524, %v4517
    %v5057 = vpack.c.b16 %v4532, %v4525
    %v5058 = vpack.c.b16 %v4533, %v4526
    %v5059 = vpack.c.b16 %v4534, %v4527
    %v5060 = vpack.c.b16 %v4535, %v4528
    %v5061 = vpack.c.b16 %v4536, %v4529
    %v5062 = vpack.c.b16 %v4537, %v4530
    %v5063 = vpack.c.b16 %v4538, %v4531
    %v5064 = vpack.c.b16 %v4546, %v4539
    %v5065 = vpack.c.b16 %v4547, %v4540
    %v5066 = vpack.c.b16 %v4548, %v4541
    %v5067 = vpack.c.b16 %v4549, %v4542
    %v5068 = vpack.c.b16 %v4550, %v4543
    %v5069 = vpack.c.b16 %v4551, %v4544
    %v5070 = vpack.c.b16 %v4552, %v4545
    %v5071 = vpack.c.b16 %v4560, %v4553
    %v5072 = vpack.c.b16 %v4561, %v4554
    %v5073 = vpack.c.b16 %v4562, %v4555
    %v5074 = vpack.c.b16 %v4563, %v4556
    %v5075 = vpack.c.b16 %v4564, %v4557
    %v5076 = vpack.c.b16 %v4565, %v4558
    %v5077 = vpack.c.b16 %v4566, %v4559
    %v5078 = vpack.c.b16 %v4574, %v4567
    %v5079 = vpack.c.b16 %v4575, %v4568
    %v5080 = vpack.c.b16 %v4576, %v4569
    %v5081 = vpack.c.b16 %v4577, %v4570
    %v5082 = vpack.c.b16 %v4578, %v4571
    %v5083 = vpack.c.b16 %v4579, %v4572
    %v5084 = vpack.c.b16 %v4580, %v4573
    %v5085 = vpack.c.b16 %v4588, %v4581
    %v5086 = vpack.c.b16 %v4589, %v4582
    %v5087 = vpack.c.b16 %v4590, %v4583
    %v5088 = vpack.c.b16 %v4591, %v4584
    %v5089 = vpack.c.b16 %v4592, %v4585
    %v5090 = vpack.c.b16 %v4593, %v4586
    %v5091 = vpack.c.b16 %v4594, %v4587
    %v5092 = vpack.c.b16 %v4602, %v4595
    %v5093 = vpack.c.b16 %v4603, %v4596
    %v5094 = vpack.c.b16 %v4604, %v4597
    %v5095 = vpack.c.b16 %v4605, %v4598
    %v5096 = vpack.c.b16 %v4606, %v4599
    %v5097 = vpack.c.b16 %v4607, %v4600
    %v5098 = vpack.c.b16 %v4608, %v4601
    %v5099 = vpack.c.b16 %v4616, %v4609
    %v5100 = vpack.c.b16 %v4617, %v4610
    %v5101 = vpack.c.b16 %v4618, %v4611
    %v5102 = vpack.c.b16 %v4619, %v4612
    %v5103 = vpack.c.b16 %v4620, %v4613
    %v5104 = vpack.c.b16 %v4621, %v4614
    %v5105 = vpack.c.b16 %v4622, %v4615
    %v5106 = vpack.c.b16 %v4630, %v4623
    %v5107 = vpack.c.b16 %v4631, %v4624
    %v5108 = vpack.c.b16 %v4632, %v4625
    %v5109 = vpack.c.b16 %v4633, %v4626
    %v5110 = vpack.c.b16 %v4634, %v4627
    %v5111 = vpack.c.b16 %v4635, %v4628
    %v5112 = vpack.c.b16 %v4636, %v4629
    %v5113 = vpack.c.b16 %v4644, %v4637
    %v5114 = vpack.c.b16 %v4645, %v4638
    %v5115 = vpack.c.b16 %v4646, %v4639
    %v5116 = vpack.c.b16 %v4647, %v4640
    %v5117 = vpack.c.b16 %v4648, %v4641
    %v5118 = vpack.c.b16 %v4649, %v4642
    %v5119 = vpack.c.b16 %v4650, %v4643
    %v5120 = vpack.c.b16 %v4658, %v4651
    %v5121 = vpack.c.b16 %v4659, %v4652
    %v5122 = vpack.c.b16 %v4660, %v4653
    %v5123 = vpack.c.b16 %v4661, %v4654
    %v5124 = vpack.c.b16 %v4662, %v4655
    %v5125 = vpack.c.b16 %v4663, %v4656
    %v5126 = vpack.c.b16 %v4664, %v4657
    %v5127 = vpack.c.b16 %v4672, %v4665
    %v5128 = vpack.c.b16 %v4673, %v4666
    %v5129 = vpack.c.b16 %v4674, %v4667
    %v5130 = vpack.c.b16 %v4675, %v4668
    %v5131 = vpack.c.b16 %v4676, %v4669
    %v5132 = vpack.c.b16 %v4677, %v4670
    %v5133 = vpack.c.b16 %v4678, %v4671
    %v5134 = vpack.c.b16 %v4686, %v4679
    %v5135 = vpack.c.b16 %v4687, %v4680
    %v5136 = vpack.c.b16 %v4688, %v4681
    %v5137 = vpack.c.b16 %v4689, %v4682
    %v5138 = vpack.c.b16 %v4690, %v4683
    %v5139 = vpack.c.b16 %v4691, %v4684
    %v5140 = vpack.c.b16 %v4692, %v4685
    %5589 = vmatprep.subr.bf16.mxu0 %v4694
    %5590 = vmatpush1.bf16.msra.mxu0 %v4693
    %5591 = vmatprep.subr.bf16.mxu0 %v4701
    %5592 = vmatpush1.bf16.msra.mxu0 %v4700
    %5593 = vmatprep.subr.bf16.mxu0 %v4708
    %5594 = vmatpush1.bf16.msra.mxu0 %v4707
    %5595 = vmatprep.subr.bf16.mxu0 %v4715
    %5596 = vmatpush1.bf16.msra.mxu0 %v4714
    %5597 = vmatprep.subr.bf16.mxu0 %v4722
    %5598 = vmatpush1.bf16.msra.mxu0 %v4721
    %5599 = vmatprep.subr.bf16.mxu0 %v4729
    %5600 = vmatpush1.bf16.msra.mxu0 %v4728
    %5601 = vmatprep.subr.bf16.mxu0 %v4736
    %5602 = vmatpush1.bf16.msra.mxu0 %v4735
    %5603 = vmatprep.subr.bf16.mxu0 %v4743
    %5604 = vmatpush1.bf16.msra.mxu0 %v4742
    %5605 = vmatprep.subr.bf16.mxu0 %v4750
    %5606 = vmatpush1.bf16.msra.mxu0 %v4749
    %5607 = vmatprep.subr.bf16.mxu0 %v4757
    %5608 = vmatpush1.bf16.msra.mxu0 %v4756
    %5609 = vmatprep.subr.bf16.mxu0 %v4764
    %5610 = vmatpush1.bf16.msra.mxu0 %v4763
    %5611 = vmatprep.subr.bf16.mxu0 %v4771
    %5612 = vmatpush1.bf16.msra.mxu0 %v4770
    %5613 = vmatprep.subr.bf16.mxu0 %v4778
    %5614 = vmatpush1.bf16.msra.mxu0 %v4777
    %5615 = vmatprep.subr.bf16.mxu0 %v4785
    %5616 = vmatpush1.bf16.msra.mxu0 %v4784
    %5617 = vmatprep.subr.bf16.mxu0 %v4792
    %5618 = vmatpush1.bf16.msra.mxu0 %v4791
    %5619 = vmatprep.subr.bf16.mxu0 %v4799
    %5620 = vmatpush1.bf16.msra.mxu0 %v4798
    %5621 = vmatprep.mubr.bf16.mxu0 %v2729
    %5622 = vmatmul.mubr.bf16.gmra.mrb[0].mxu0 %v2728
    %v5623 = vpop.f32.mrb[0].mxu0
    %v5624 = vadd.f32 %v3253, %v5623
    %v5625 = vpop.f32.mrb[0].mxu0
    %v5626 = vadd.f32 %v3257, %v5625
    %v5627 = vpop.f32.mrb[0].mxu0
    %v5628 = vpop.f32.mrb[0].mxu0
    %5629 = vdwg.mxu0
    %5630 = vmatprep.subr.bf16.mxu0 %v4806
    %5631 = vmatpush1.bf16.msra.mxu0 %v4805
    %5632 = vmatprep.subr.bf16.mxu0 %v4813
    %5633 = vmatpush1.bf16.msra.mxu0 %v4812
    %5634 = vmatprep.subr.bf16.mxu0 %v4820
    %5635 = vmatpush1.bf16.msra.mxu0 %v4819
    %5636 = vmatprep.subr.bf16.mxu0 %v4827
    %5637 = vmatpush1.bf16.msra.mxu0 %v4826
    %5638 = vmatprep.subr.bf16.mxu0 %v4834
    %5639 = vmatpush1.bf16.msra.mxu0 %v4833
    %5640 = vmatprep.subr.bf16.mxu0 %v4841
    %5641 = vmatpush1.bf16.msra.mxu0 %v4840
    %5642 = vmatprep.subr.bf16.mxu0 %v4848
    %5643 = vmatpush1.bf16.msra.mxu0 %v4847
    %5644 = vmatprep.subr.bf16.mxu0 %v4855
    %5645 = vmatpush1.bf16.msra.mxu0 %v4854
    %5646 = vmatprep.subr.bf16.mxu0 %v4862
    %5647 = vmatpush1.bf16.msra.mxu0 %v4861
    %5648 = vmatprep.subr.bf16.mxu0 %v4869
    %5649 = vmatpush1.bf16.msra.mxu0 %v4868
    %5650 = vmatprep.subr.bf16.mxu0 %v4876
    %5651 = vmatpush1.bf16.msra.mxu0 %v4875
    %5652 = vmatprep.subr.bf16.mxu0 %v4883
    %5653 = vmatpush1.bf16.msra.mxu0 %v4882
    %5654 = vmatprep.subr.bf16.mxu0 %v4890
    %5655 = vmatpush1.bf16.msra.mxu0 %v4889
    %5656 = vmatprep.subr.bf16.mxu0 %v4897
    %5657 = vmatpush1.bf16.msra.mxu0 %v4896
    %5658 = vmatprep.subr.bf16.mxu0 %v4904
    %5659 = vmatpush1.bf16.msra.mxu0 %v4903
    %5660 = vmatprep.subr.bf16.mxu0 %v4911
    %5661 = vmatpush1.bf16.msra.mxu0 %v4910
    %5662 = vmatprep.mubr.bf16.mxu0 %v2731
    %5663 = vmatmul.mubr.bf16.gmra.mrb[0].mxu0 %v2730
    %v5664 = vpop.f32.mrb[0].mxu0
    %v5665 = vadd.f32 %v5624, %v5664
    %v5666 = vpop.f32.mrb[0].mxu0
    %v5667 = vadd.f32 %v5626, %v5666
    %v5668 = vpop.f32.mrb[0].mxu0
    %v5669 = vpop.f32.mrb[0].mxu0
    %5670 = vdwg.mxu0
    %5671 = vmatprep.subr.bf16.mxu0 %v4918
    %5672 = vmatpush1.bf16.msra.mxu0 %v4917
    %5673 = vmatprep.subr.bf16.mxu0 %v4925
    %5674 = vmatpush1.bf16.msra.mxu0 %v4924
    %5675 = vmatprep.subr.bf16.mxu0 %v4932
    %5676 = vmatpush1.bf16.msra.mxu0 %v4931
    %5677 = vmatprep.subr.bf16.mxu0 %v4939
    %5678 = vmatpush1.bf16.msra.mxu0 %v4938
    %5679 = vmatprep.subr.bf16.mxu0 %v4946
    %5680 = vmatpush1.bf16.msra.mxu0 %v4945
    %5681 = vmatprep.subr.bf16.mxu0 %v4953
    %5682 = vmatpush1.bf16.msra.mxu0 %v4952
    %5683 = vmatprep.subr.bf16.mxu0 %v4960
    %5684 = vmatpush1.bf16.msra.mxu0 %v4959
    %5685 = vmatprep.subr.bf16.mxu0 %v4967
    %5686 = vmatpush1.bf16.msra.mxu0 %v4966
    %5687 = vmatprep.subr.bf16.mxu0 %v4974
    %5688 = vmatpush1.bf16.msra.mxu0 %v4973
    %5689 = vmatprep.subr.bf16.mxu0 %v4981
    %5690 = vmatpush1.bf16.msra.mxu0 %v4980
    %5691 = vmatprep.subr.bf16.mxu0 %v4988
    %5692 = vmatpush1.bf16.msra.mxu0 %v4987
    %5693 = vmatprep.subr.bf16.mxu0 %v4995
    %5694 = vmatpush1.bf16.msra.mxu0 %v4994
    %5695 = vmatprep.subr.bf16.mxu0 %v5002
    %5696 = vmatpush1.bf16.msra.mxu0 %v5001
    %5697 = vmatprep.subr.bf16.mxu0 %v5009
    %5698 = vmatpush1.bf16.msra.mxu0 %v5008
    %5699 = vmatprep.subr.bf16.mxu0 %v5016
    %5700 = vmatpush1.bf16.msra.mxu0 %v5015
    %5701 = vmatprep.subr.bf16.mxu0 %v5023
    %5702 = vmatpush1.bf16.msra.mxu0 %v5022
    %5703 = vmatprep.mubr.bf16.mxu0 %v2733
    %5704 = vmatmul.mubr.bf16.gmra.mrb[0].mxu0 %v2732
    %v5705 = vpop.f32.mrb[0].mxu0
    %v5706 = vadd.f32 %v5665, %v5705
    %v5707 = vpop.f32.mrb[0].mxu0
    %v5708 = vadd.f32 %v5667, %v5707
    %v5709 = vpop.f32.mrb[0].mxu0
    %v5710 = vpop.f32.mrb[0].mxu0
    %5711 = vdwg.mxu0
    %5712 = vmatprep.subr.bf16.mxu0 %v5030
    %5713 = vmatpush1.bf16.msra.mxu0 %v5029
    %5714 = vmatprep.subr.bf16.mxu0 %v5037
    %5715 = vmatpush1.bf16.msra.mxu0 %v5036
    %5716 = vmatprep.subr.bf16.mxu0 %v5044
    %5717 = vmatpush1.bf16.msra.mxu0 %v5043
    %5718 = vmatprep.subr.bf16.mxu0 %v5051
    %5719 = vmatpush1.bf16.msra.mxu0 %v5050
    %5720 = vmatprep.subr.bf16.mxu0 %v5058
    %5721 = vmatpush1.bf16.msra.mxu0 %v5057
    %5722 = vmatprep.subr.bf16.mxu0 %v5065
    %5723 = vmatpush1.bf16.msra.mxu0 %v5064
    %5724 = vmatprep.subr.bf16.mxu0 %v5072
    %5725 = vmatpush1.bf16.msra.mxu0 %v5071
    %5726 = vmatprep.subr.bf16.mxu0 %v5079
    %5727 = vmatpush1.bf16.msra.mxu0 %v5078
    %5728 = vmatprep.subr.bf16.mxu0 %v5086
    %5729 = vmatpush1.bf16.msra.mxu0 %v5085
    %5730 = vmatprep.subr.bf16.mxu0 %v5093
    %5731 = vmatpush1.bf16.msra.mxu0 %v5092
    %5732 = vmatprep.subr.bf16.mxu0 %v5100
    %5733 = vmatpush1.bf16.msra.mxu0 %v5099
    %5734 = vmatprep.subr.bf16.mxu0 %v5107
    %5735 = vmatpush1.bf16.msra.mxu0 %v5106
    %5736 = vmatprep.subr.bf16.mxu0 %v5114
    %5737 = vmatpush1.bf16.msra.mxu0 %v5113
    %5738 = vmatprep.subr.bf16.mxu0 %v5121
    %5739 = vmatpush1.bf16.msra.mxu0 %v5120
    %5740 = vmatprep.subr.bf16.mxu0 %v5128
    %5741 = vmatpush1.bf16.msra.mxu0 %v5127
    %5742 = vmatprep.subr.bf16.mxu0 %v5135
    %5743 = vmatpush1.bf16.msra.mxu0 %v5134
    %5744 = vmatprep.mubr.bf16.mxu0 %v2735
    %5745 = vmatmul.mubr.bf16.gmra.mrb[0].mxu0 %v2734
    %v5746 = vpop.f32.mrb[0].mxu0
    %v5747 = vadd.f32 %v5706, %v5746
    %v5748 = vpop.f32.mrb[0].mxu0
    %v5749 = vadd.f32 %v5708, %v5748
    %v5750 = vpop.f32.mrb[0].mxu0
    %v5751 = vpop.f32.mrb[0].mxu0
    %5752 = vdwg.mxu0
    %5753 = vmatprep.subr.bf16.mxu0 %v4696
    %5754 = vmatpush1.bf16.msra.mxu0 %v4695
    %5755 = vmatprep.subr.bf16.mxu0 %v4703
    %5756 = vmatpush1.bf16.msra.mxu0 %v4702
    %5757 = vmatprep.subr.bf16.mxu0 %v4710
    %5758 = vmatpush1.bf16.msra.mxu0 %v4709
    %5759 = vmatprep.subr.bf16.mxu0 %v4717
    %5760 = vmatpush1.bf16.msra.mxu0 %v4716
    %5761 = vmatprep.subr.bf16.mxu0 %v4724
    %5762 = vmatpush1.bf16.msra.mxu0 %v4723
    %5763 = vmatprep.subr.bf16.mxu0 %v4731
    %5764 = vmatpush1.bf16.msra.mxu0 %v4730
    %5765 = vmatprep.subr.bf16.mxu0 %v4738
    %5766 = vmatpush1.bf16.msra.mxu0 %v4737
    %5767 = vmatprep.subr.bf16.mxu0 %v4745
    %5768 = vmatpush1.bf16.msra.mxu0 %v4744
    %5769 = vmatprep.subr.bf16.mxu0 %v4752
    %5770 = vmatpush1.bf16.msra.mxu0 %v4751
    %5771 = vmatprep.subr.bf16.mxu0 %v4759
    %5772 = vmatpush1.bf16.msra.mxu0 %v4758
    %5773 = vmatprep.subr.bf16.mxu0 %v4766
    %5774 = vmatpush1.bf16.msra.mxu0 %v4765
    %5775 = vmatprep.subr.bf16.mxu0 %v4773
    %5776 = vmatpush1.bf16.msra.mxu0 %v4772
    %5777 = vmatprep.subr.bf16.mxu0 %v4780
    %5778 = vmatpush1.bf16.msra.mxu0 %v4779
    %5779 = vmatprep.subr.bf16.mxu0 %v4787
    %5780 = vmatpush1.bf16.msra.mxu0 %v4786
    %5781 = vmatprep.subr.bf16.mxu0 %v4794
    %5782 = vmatpush1.bf16.msra.mxu0 %v4793
    %5783 = vmatprep.subr.bf16.mxu0 %v4801
    %5784 = vmatpush1.bf16.msra.mxu0 %v4800
    %5785 = vmatprep.mubr.bf16.mxu0 %v2729
    %5786 = vmatmul.mubr.bf16.gmra.mrb[0].mxu0 %v2728
    %v5787 = vpop.f32.mrb[0].mxu0
    %v5788 = vadd.f32 %v3261, %v5787
    %v5789 = vpop.f32.mrb[0].mxu0
    %v5790 = vadd.f32 %v3265, %v5789
    %v5791 = vpop.f32.mrb[0].mxu0
    %v5792 = vpop.f32.mrb[0].mxu0
    %5793 = vdwg.mxu0
    %5794 = vmatprep.subr.bf16.mxu0 %v4808
    %5795 = vmatpush1.bf16.msra.mxu0 %v4807
    %5796 = vmatprep.subr.bf16.mxu0 %v4815
    %5797 = vmatpush1.bf16.msra.mxu0 %v4814
    %5798 = vmatprep.subr.bf16.mxu0 %v4822
    %5799 = vmatpush1.bf16.msra.mxu0 %v4821
    %5800 = vmatprep.subr.bf16.mxu0 %v4829
    %5801 = vmatpush1.bf16.msra.mxu0 %v4828
    %5802 = vmatprep.subr.bf16.mxu0 %v4836
    %5803 = vmatpush1.bf16.msra.mxu0 %v4835
    %5804 = vmatprep.subr.bf16.mxu0 %v4843
    %5805 = vmatpush1.bf16.msra.mxu0 %v4842
    %5806 = vmatprep.subr.bf16.mxu0 %v4850
    %5807 = vmatpush1.bf16.msra.mxu0 %v4849
    %5808 = vmatprep.subr.bf16.mxu0 %v4857
    %5809 = vmatpush1.bf16.msra.mxu0 %v4856
    %5810 = vmatprep.subr.bf16.mxu0 %v4864
    %5811 = vmatpush1.bf16.msra.mxu0 %v4863
    %5812 = vmatprep.subr.bf16.mxu0 %v4871
    %5813 = vmatpush1.bf16.msra.mxu0 %v4870
    %5814 = vmatprep.subr.bf16.mxu0 %v4878
    %5815 = vmatpush1.bf16.msra.mxu0 %v4877
    %5816 = vmatprep.subr.bf16.mxu0 %v4885
    %5817 = vmatpush1.bf16.msra.mxu0 %v4884
    %5818 = vmatprep.subr.bf16.mxu0 %v4892
    %5819 = vmatpush1.bf16.msra.mxu0 %v4891
    %5820 = vmatprep.subr.bf16.mxu0 %v4899
    %5821 = vmatpush1.bf16.msra.mxu0 %v4898
    %5822 = vmatprep.subr.bf16.mxu0 %v4906
    %5823 = vmatpush1.bf16.msra.mxu0 %v4905
    %5824 = vmatprep.subr.bf16.mxu0 %v4913
    %5825 = vmatpush1.bf16.msra.mxu0 %v4912
    %5826 = vmatprep.mubr.bf16.mxu0 %v2731
    %5827 = vmatmul.mubr.bf16.gmra.mrb[0].mxu0 %v2730
    %v5828 = vpop.f32.mrb[0].mxu0
    %v5829 = vadd.f32 %v5788, %v5828
    %v5830 = vpop.f32.mrb[0].mxu0
    %v5831 = vadd.f32 %v5790, %v5830
    %v5832 = vpop.f32.mrb[0].mxu0
    %v5833 = vpop.f32.mrb[0].mxu0
    %5834 = vdwg.mxu0
    %5835 = vmatprep.subr.bf16.mxu0 %v4920
    %5836 = vmatpush1.bf16.msra.mxu0 %v4919
    %5837 = vmatprep.subr.bf16.mxu0 %v4927
    %5838 = vmatpush1.bf16.msra.mxu0 %v4926
    %5839 = vmatprep.subr.bf16.mxu0 %v4934
    %5840 = vmatpush1.bf16.msra.mxu0 %v4933
    %5841 = vmatprep.subr.bf16.mxu0 %v4941
    %5842 = vmatpush1.bf16.msra.mxu0 %v4940
    %5843 = vmatprep.subr.bf16.mxu0 %v4948
    %5844 = vmatpush1.bf16.msra.mxu0 %v4947
    %5845 = vmatprep.subr.bf16.mxu0 %v4955
    %5846 = vmatpush1.bf16.msra.mxu0 %v4954
    %5847 = vmatprep.subr.bf16.mxu0 %v4962
    %5848 = vmatpush1.bf16.msra.mxu0 %v4961
    %5849 = vmatprep.subr.bf16.mxu0 %v4969
    %5850 = vmatpush1.bf16.msra.mxu0 %v4968
    %5851 = vmatprep.subr.bf16.mxu0 %v4976
    %5852 = vmatpush1.bf16.msra.mxu0 %v4975
    %5853 = vmatprep.subr.bf16.mxu0 %v4983
    %5854 = vmatpush1.bf16.msra.mxu0 %v4982
    %5855 = vmatprep.subr.bf16.mxu0 %v4990
    %5856 = vmatpush1.bf16.msra.mxu0 %v4989
    %5857 = vmatprep.subr.bf16.mxu0 %v4997
    %5858 = vmatpush1.bf16.msra.mxu0 %v4996
    %5859 = vmatprep.subr.bf16.mxu0 %v5004
    %5860 = vmatpush1.bf16.msra.mxu0 %v5003
    %5861 = vmatprep.subr.bf16.mxu0 %v5011
    %5862 = vmatpush1.bf16.msra.mxu0 %v5010
    %5863 = vmatprep.subr.bf16.mxu0 %v5018
    %5864 = vmatpush1.bf16.msra.mxu0 %v5017
    %5865 = vmatprep.subr.bf16.mxu0 %v5025
    %5866 = vmatpush1.bf16.msra.mxu0 %v5024
    %5867 = vmatprep.mubr.bf16.mxu0 %v2733
    %5868 = vmatmul.mubr.bf16.gmra.mrb[0].mxu0 %v2732
    %v5869 = vpop.f32.mrb[0].mxu0
    %v5870 = vadd.f32 %v5829, %v5869
    %v5871 = vpop.f32.mrb[0].mxu0
    %v5872 = vadd.f32 %v5831, %v5871
    %v5873 = vpop.f32.mrb[0].mxu0
    %v5874 = vpop.f32.mrb[0].mxu0
    %5875 = vdwg.mxu0
    %5876 = vmatprep.subr.bf16.mxu0 %v5032
    %5877 = vmatpush1.bf16.msra.mxu0 %v5031
    %5878 = vmatprep.subr.bf16.mxu0 %v5039
    %5879 = vmatpush1.bf16.msra.mxu0 %v5038
    %5880 = vmatprep.subr.bf16.mxu0 %v5046
    %5881 = vmatpush1.bf16.msra.mxu0 %v5045
    %5882 = vmatprep.subr.bf16.mxu0 %v5053
    %5883 = vmatpush1.bf16.msra.mxu0 %v5052
    %5884 = vmatprep.subr.bf16.mxu0 %v5060
    %5885 = vmatpush1.bf16.msra.mxu0 %v5059
    %5886 = vmatprep.subr.bf16.mxu0 %v5067
    %5887 = vmatpush1.bf16.msra.mxu0 %v5066
    %5888 = vmatprep.subr.bf16.mxu0 %v5074
    %5889 = vmatpush1.bf16.msra.mxu0 %v5073
    %5890 = vmatprep.subr.bf16.mxu0 %v5081
    %5891 = vmatpush1.bf16.msra.mxu0 %v5080
    %5892 = vmatprep.subr.bf16.mxu0 %v5088
    %5893 = vmatpush1.bf16.msra.mxu0 %v5087
    %5894 = vmatprep.subr.bf16.mxu0 %v5095
    %5895 = vmatpush1.bf16.msra.mxu0 %v5094
    %5896 = vmatprep.subr.bf16.mxu0 %v5102
    %5897 = vmatpush1.bf16.msra.mxu0 %v5101
    %5898 = vmatprep.subr.bf16.mxu0 %v5109
    %5899 = vmatpush1.bf16.msra.mxu0 %v5108
    %5900 = vmatprep.subr.bf16.mxu0 %v5116
    %5901 = vmatpush1.bf16.msra.mxu0 %v5115
    %5902 = vmatprep.subr.bf16.mxu0 %v5123
    %5903 = vmatpush1.bf16.msra.mxu0 %v5122
    %5904 = vmatprep.subr.bf16.mxu0 %v5130
    %5905 = vmatpush1.bf16.msra.mxu0 %v5129
    %5906 = vmatprep.subr.bf16.mxu0 %v5137
    %5907 = vmatpush1.bf16.msra.mxu0 %v5136
    %5908 = vmatprep.mubr.bf16.mxu0 %v2735
    %5909 = vmatmul.mubr.bf16.gmra.mrb[0].mxu0 %v2734
    %v5910 = vpop.f32.mrb[0].mxu0
    %v5911 = vadd.f32 %v5870, %v5910
    %v5912 = vpop.f32.mrb[0].mxu0
    %v5913 = vadd.f32 %v5872, %v5912
    %v5914 = vpop.f32.mrb[0].mxu0
    %v5915 = vpop.f32.mrb[0].mxu0
    %5916 = vdwg.mxu0
    %5917 = vmatprep.subr.bf16.mxu0 %v4698
    %5918 = vmatpush1.bf16.msra.mxu0 %v4697
    %5919 = vmatprep.subr.bf16.mxu0 %v4705
    %5920 = vmatpush1.bf16.msra.mxu0 %v4704
    %5921 = vmatprep.subr.bf16.mxu0 %v4712
    %5922 = vmatpush1.bf16.msra.mxu0 %v4711
    %5923 = vmatprep.subr.bf16.mxu0 %v4719
    %5924 = vmatpush1.bf16.msra.mxu0 %v4718
    %5925 = vmatprep.subr.bf16.mxu0 %v4726
    %5926 = vmatpush1.bf16.msra.mxu0 %v4725
    %5927 = vmatprep.subr.bf16.mxu0 %v4733
    %5928 = vmatpush1.bf16.msra.mxu0 %v4732
    %5929 = vmatprep.subr.bf16.mxu0 %v4740
    %5930 = vmatpush1.bf16.msra.mxu0 %v4739
    %5931 = vmatprep.subr.bf16.mxu0 %v4747
    %5932 = vmatpush1.bf16.msra.mxu0 %v4746
    %5933 = vmatprep.subr.bf16.mxu0 %v4754
    %5934 = vmatpush1.bf16.msra.mxu0 %v4753
    %5935 = vmatprep.subr.bf16.mxu0 %v4761
    %5936 = vmatpush1.bf16.msra.mxu0 %v4760
    %5937 = vmatprep.subr.bf16.mxu0 %v4768
    %5938 = vmatpush1.bf16.msra.mxu0 %v4767
    %5939 = vmatprep.subr.bf16.mxu0 %v4775
    %5940 = vmatpush1.bf16.msra.mxu0 %v4774
    %5941 = vmatprep.subr.bf16.mxu0 %v4782
    %5942 = vmatpush1.bf16.msra.mxu0 %v4781
    %5943 = vmatprep.subr.bf16.mxu0 %v4789
    %5944 = vmatpush1.bf16.msra.mxu0 %v4788
    %5945 = vmatprep.subr.bf16.mxu0 %v4796
    %5946 = vmatpush1.bf16.msra.mxu0 %v4795
    %5947 = vmatprep.subr.bf16.mxu0 %v4803
    %5948 = vmatpush1.bf16.msra.mxu0 %v4802
    %5949 = vmatprep.mubr.bf16.mxu0 %v2729
    %5950 = vmatmul.mubr.bf16.gmra.mrb[0].mxu0 %v2728
    %v5951 = vpop.f32.mrb[0].mxu0
    %v5952 = vadd.f32 %v3269, %v5951
    %v5953 = vpop.f32.mrb[0].mxu0
    %v5954 = vadd.f32 %v3273, %v5953
    %v5955 = vpop.f32.mrb[0].mxu0
    %v5956 = vpop.f32.mrb[0].mxu0
    %5957 = vdwg.mxu0
    %5958 = vmatprep.subr.bf16.mxu0 %v4810
    %5959 = vmatpush1.bf16.msra.mxu0 %v4809
    %5960 = vmatprep.subr.bf16.mxu0 %v4817
    %5961 = vmatpush1.bf16.msra.mxu0 %v4816
    %5962 = vmatprep.subr.bf16.mxu0 %v4824
    %5963 = vmatpush1.bf16.msra.mxu0 %v4823
    %5964 = vmatprep.subr.bf16.mxu0 %v4831
    %5965 = vmatpush1.bf16.msra.mxu0 %v4830
    %5966 = vmatprep.subr.bf16.mxu0 %v4838
    %5967 = vmatpush1.bf16.msra.mxu0 %v4837
    %5968 = vmatprep.subr.bf16.mxu0 %v4845
    %5969 = vmatpush1.bf16.msra.mxu0 %v4844
    %5970 = vmatprep.subr.bf16.mxu0 %v4852
    %5971 = vmatpush1.bf16.msra.mxu0 %v4851
    %5972 = vmatprep.subr.bf16.mxu0 %v4859
    %5973 = vmatpush1.bf16.msra.mxu0 %v4858
    %5974 = vmatprep.subr.bf16.mxu0 %v4866
    %5975 = vmatpush1.bf16.msra.mxu0 %v4865
    %5976 = vmatprep.subr.bf16.mxu0 %v4873
    %5977 = vmatpush1.bf16.msra.mxu0 %v4872
    %5978 = vmatprep.subr.bf16.mxu0 %v4880
    %5979 = vmatpush1.bf16.msra.mxu0 %v4879
    %5980 = vmatprep.subr.bf16.mxu0 %v4887
    %5981 = vmatpush1.bf16.msra.mxu0 %v4886
    %5982 = vmatprep.subr.bf16.mxu0 %v4894
    %5983 = vmatpush1.bf16.msra.mxu0 %v4893
    %5984 = vmatprep.subr.bf16.mxu0 %v4901
    %5985 = vmatpush1.bf16.msra.mxu0 %v4900
    %5986 = vmatprep.subr.bf16.mxu0 %v4908
    %5987 = vmatpush1.bf16.msra.mxu0 %v4907
    %5988 = vmatprep.subr.bf16.mxu0 %v4915
    %5989 = vmatpush1.bf16.msra.mxu0 %v4914
    %5990 = vmatprep.mubr.bf16.mxu0 %v2731
    %5991 = vmatmul.mubr.bf16.gmra.mrb[0].mxu0 %v2730
    %v5992 = vpop.f32.mrb[0].mxu0
    %v5993 = vadd.f32 %v5952, %v5992
    %v5994 = vpop.f32.mrb[0].mxu0
    %v5995 = vadd.f32 %v5954, %v5994
    %v5996 = vpop.f32.mrb[0].mxu0
    %v5997 = vpop.f32.mrb[0].mxu0
    %5998 = vdwg.mxu0
    %5999 = vmatprep.subr.bf16.mxu0 %v4922
    %6000 = vmatpush1.bf16.msra.mxu0 %v4921
    %6001 = vmatprep.subr.bf16.mxu0 %v4929
    %6002 = vmatpush1.bf16.msra.mxu0 %v4928
    %6003 = vmatprep.subr.bf16.mxu0 %v4936
    %6004 = vmatpush1.bf16.msra.mxu0 %v4935
    %6005 = vmatprep.subr.bf16.mxu0 %v4943
    %6006 = vmatpush1.bf16.msra.mxu0 %v4942
    %6007 = vmatprep.subr.bf16.mxu0 %v4950
    %6008 = vmatpush1.bf16.msra.mxu0 %v4949
    %6009 = vmatprep.subr.bf16.mxu0 %v4957
    %6010 = vmatpush1.bf16.msra.mxu0 %v4956
    %6011 = vmatprep.subr.bf16.mxu0 %v4964
    %6012 = vmatpush1.bf16.msra.mxu0 %v4963
    %6013 = vmatprep.subr.bf16.mxu0 %v4971
    %6014 = vmatpush1.bf16.msra.mxu0 %v4970
    %6015 = vmatprep.subr.bf16.mxu0 %v4978
    %6016 = vmatpush1.bf16.msra.mxu0 %v4977
    %6017 = vmatprep.subr.bf16.mxu0 %v4985
    %6018 = vmatpush1.bf16.msra.mxu0 %v4984
    %6019 = vmatprep.subr.bf16.mxu0 %v4992
    %6020 = vmatpush1.bf16.msra.mxu0 %v4991
    %6021 = vmatprep.subr.bf16.mxu0 %v4999
    %6022 = vmatpush1.bf16.msra.mxu0 %v4998
    %6023 = vmatprep.subr.bf16.mxu0 %v5006
    %6024 = vmatpush1.bf16.msra.mxu0 %v5005
    %6025 = vmatprep.subr.bf16.mxu0 %v5013
    %6026 = vmatpush1.bf16.msra.mxu0 %v5012
    %6027 = vmatprep.subr.bf16.mxu0 %v5020
    %6028 = vmatpush1.bf16.msra.mxu0 %v5019
    %6029 = vmatprep.subr.bf16.mxu0 %v5027
    %6030 = vmatpush1.bf16.msra.mxu0 %v5026
    %6031 = vmatprep.mubr.bf16.mxu0 %v2733
    %6032 = vmatmul.mubr.bf16.gmra.mrb[0].mxu0 %v2732
    %v6033 = vpop.f32.mrb[0].mxu0
    %v6034 = vadd.f32 %v5993, %v6033
    %v6035 = vpop.f32.mrb[0].mxu0
    %v6036 = vadd.f32 %v5995, %v6035
    %v6037 = vpop.f32.mrb[0].mxu0
    %v6038 = vpop.f32.mrb[0].mxu0
    %6039 = vdwg.mxu0
    %6040 = vmatprep.subr.bf16.mxu0 %v5034
    %6041 = vmatpush1.bf16.msra.mxu0 %v5033
    %6042 = vmatprep.subr.bf16.mxu0 %v5041
    %6043 = vmatpush1.bf16.msra.mxu0 %v5040
    %6044 = vmatprep.subr.bf16.mxu0 %v5048
    %6045 = vmatpush1.bf16.msra.mxu0 %v5047
    %6046 = vmatprep.subr.bf16.mxu0 %v5055
    %6047 = vmatpush1.bf16.msra.mxu0 %v5054
    %6048 = vmatprep.subr.bf16.mxu0 %v5062
    %6049 = vmatpush1.bf16.msra.mxu0 %v5061
    %6050 = vmatprep.subr.bf16.mxu0 %v5069
    %6051 = vmatpush1.bf16.msra.mxu0 %v5068
    %6052 = vmatprep.subr.bf16.mxu0 %v5076
    %6053 = vmatpush1.bf16.msra.mxu0 %v5075
    %6054 = vmatprep.subr.bf16.mxu0 %v5083
    %6055 = vmatpush1.bf16.msra.mxu0 %v5082
    %6056 = vmatprep.subr.bf16.mxu0 %v5090
    %6057 = vmatpush1.bf16.msra.mxu0 %v5089
    %6058 = vmatprep.subr.bf16.mxu0 %v5097
    %6059 = vmatpush1.bf16.msra.mxu0 %v5096
    %6060 = vmatprep.subr.bf16.mxu0 %v5104
    %6061 = vmatpush1.bf16.msra.mxu0 %v5103
    %6062 = vmatprep.subr.bf16.mxu0 %v5111
    %6063 = vmatpush1.bf16.msra.mxu0 %v5110
    %6064 = vmatprep.subr.bf16.mxu0 %v5118
    %6065 = vmatpush1.bf16.msra.mxu0 %v5117
    %6066 = vmatprep.subr.bf16.mxu0 %v5125
    %6067 = vmatpush1.bf16.msra.mxu0 %v5124
    %6068 = vmatprep.subr.bf16.mxu0 %v5132
    %6069 = vmatpush1.bf16.msra.mxu0 %v5131
    %6070 = vmatprep.subr.bf16.mxu0 %v5139
    %6071 = vmatpush1.bf16.msra.mxu0 %v5138
    %6072 = vmatprep.mubr.bf16.mxu0 %v2735
    %6073 = vmatmul.mubr.bf16.gmra.mrb[0].mxu0 %v2734
    %v6074 = vpop.f32.mrb[0].mxu0
    %v6075 = vadd.f32 %v6034, %v6074
    %v6076 = vpop.f32.mrb[0].mxu0
    %v6077 = vadd.f32 %v6036, %v6076
    %v6078 = vpop.f32.mrb[0].mxu0
    %v6079 = vpop.f32.mrb[0].mxu0
    %6080 = vdwg.mxu0
    %6081 = vmatprep.subr.bf16.mxu0 0
    %6082 = vmatpush1.bf16.msra.mxu0 %v4699
    %6083 = vmatprep.subr.bf16.mxu0 0
    %6084 = vmatpush1.bf16.msra.mxu0 %v4706
    %6085 = vmatprep.subr.bf16.mxu0 0
    %6086 = vmatpush1.bf16.msra.mxu0 %v4713
    %6087 = vmatprep.subr.bf16.mxu0 0
    %6088 = vmatpush1.bf16.msra.mxu0 %v4720
    %6089 = vmatprep.subr.bf16.mxu0 0
    %6090 = vmatpush1.bf16.msra.mxu0 %v4727
    %6091 = vmatprep.subr.bf16.mxu0 0
    %6092 = vmatpush1.bf16.msra.mxu0 %v4734
    %6093 = vmatprep.subr.bf16.mxu0 0
    %6094 = vmatpush1.bf16.msra.mxu0 %v4741
    %6095 = vmatprep.subr.bf16.mxu0 0
    %6096 = vmatpush1.bf16.msra.mxu0 %v4748
    %6097 = vmatprep.subr.bf16.mxu0 0
    %6098 = vmatpush1.bf16.msra.mxu0 %v4755
    %6099 = vmatprep.subr.bf16.mxu0 0
    %6100 = vmatpush1.bf16.msra.mxu0 %v4762
    %6101 = vmatprep.subr.bf16.mxu0 0
    %6102 = vmatpush1.bf16.msra.mxu0 %v4769
    %6103 = vmatprep.subr.bf16.mxu0 0
    %6104 = vmatpush1.bf16.msra.mxu0 %v4776
    %6105 = vmatprep.subr.bf16.mxu0 0
    %6106 = vmatpush1.bf16.msra.mxu0 %v4783
    %6107 = vmatprep.subr.bf16.mxu0 0
    %6108 = vmatpush1.bf16.msra.mxu0 %v4790
    %6109 = vmatprep.subr.bf16.mxu0 0
    %6110 = vmatpush1.bf16.msra.mxu0 %v4797
    %6111 = vmatprep.subr.bf16.mxu0 0
    %6112 = vmatpush1.bf16.msra.mxu0 %v4804
    %6113 = vmatprep.mubr.bf16.mxu0 %v2729
    %6114 = vmatmul.mubr.bf16.gmra.mrb[0].mxu0 %v2728
    %v6115 = vpop.f32.mrb[0].mxu0
    %v6116 = vadd.f32 %v3277, %v6115
    %v6117 = vpop.f32.mrb[0].mxu0
    %v6118 = vpop.f32.mrb[0].mxu0
    %v6119 = vpop.f32.mrb[0].mxu0
    %6120 = vdwg.mxu0
    %6121 = vmatprep.subr.bf16.mxu0 0
    %6122 = vmatpush1.bf16.msra.mxu0 %v4811
    %6123 = vmatprep.subr.bf16.mxu0 0
    %6124 = vmatpush1.bf16.msra.mxu0 %v4818
    %6125 = vmatprep.subr.bf16.mxu0 0
    %6126 = vmatpush1.bf16.msra.mxu0 %v4825
    %6127 = vmatprep.subr.bf16.mxu0 0
    %6128 = vmatpush1.bf16.msra.mxu0 %v4832
    %6129 = vmatprep.subr.bf16.mxu0 0
    %6130 = vmatpush1.bf16.msra.mxu0 %v4839
    %6131 = vmatprep.subr.bf16.mxu0 0
    %6132 = vmatpush1.bf16.msra.mxu0 %v4846
    %6133 = vmatprep.subr.bf16.mxu0 0
    %6134 = vmatpush1.bf16.msra.mxu0 %v4853
    %6135 = vmatprep.subr.bf16.mxu0 0
    %6136 = vmatpush1.bf16.msra.mxu0 %v4860
    %6137 = vmatprep.subr.bf16.mxu0 0
    %6138 = vmatpush1.bf16.msra.mxu0 %v4867
    %6139 = vmatprep.subr.bf16.mxu0 0
    %6140 = vmatpush1.bf16.msra.mxu0 %v4874
    %6141 = vmatprep.subr.bf16.mxu0 0
    %6142 = vmatpush1.bf16.msra.mxu0 %v4881
    %6143 = vmatprep.subr.bf16.mxu0 0
    %6144 = vmatpush1.bf16.msra.mxu0 %v4888
    %6145 = vmatprep.subr.bf16.mxu0 0
    %6146 = vmatpush1.bf16.msra.mxu0 %v4895
    %6147 = vmatprep.subr.bf16.mxu0 0
    %6148 = vmatpush1.bf16.msra.mxu0 %v4902
    %6149 = vmatprep.subr.bf16.mxu0 0
    %6150 = vmatpush1.bf16.msra.mxu0 %v4909
    %6151 = vmatprep.subr.bf16.mxu0 0
    %6152 = vmatpush1.bf16.msra.mxu0 %v4916
    %6153 = vmatprep.mubr.bf16.mxu0 %v2731
    %6154 = vmatmul.mubr.bf16.gmra.mrb[0].mxu0 %v2730
    %v6155 = vpop.f32.mrb[0].mxu0
    %v6156 = vadd.f32 %v6116, %v6155
    %v6157 = vpop.f32.mrb[0].mxu0
    %v6158 = vpop.f32.mrb[0].mxu0
    %v6159 = vpop.f32.mrb[0].mxu0
    %6160 = vdwg.mxu0
    %6161 = vmatprep.subr.bf16.mxu0 0
    %6162 = vmatpush1.bf16.msra.mxu0 %v4923
    %6163 = vmatprep.subr.bf16.mxu0 0
    %6164 = vmatpush1.bf16.msra.mxu0 %v4930
    %6165 = vmatprep.subr.bf16.mxu0 0
    %6166 = vmatpush1.bf16.msra.mxu0 %v4937
    %6167 = vmatprep.subr.bf16.mxu0 0
    %6168 = vmatpush1.bf16.msra.mxu0 %v4944
    %6169 = vmatprep.subr.bf16.mxu0 0
    %6170 = vmatpush1.bf16.msra.mxu0 %v4951
    %6171 = vmatprep.subr.bf16.mxu0 0
    %6172 = vmatpush1.bf16.msra.mxu0 %v4958
    %6173 = vmatprep.subr.bf16.mxu0 0
    %6174 = vmatpush1.bf16.msra.mxu0 %v4965
    %6175 = vmatprep.subr.bf16.mxu0 0
    %6176 = vmatpush1.bf16.msra.mxu0 %v4972
    %6177 = vmatprep.subr.bf16.mxu0 0
    %6178 = vmatpush1.bf16.msra.mxu0 %v4979
    %6179 = vmatprep.subr.bf16.mxu0 0
    %6180 = vmatpush1.bf16.msra.mxu0 %v4986
    %6181 = vmatprep.subr.bf16.mxu0 0
    %6182 = vmatpush1.bf16.msra.mxu0 %v4993
    %6183 = vmatprep.subr.bf16.mxu0 0
    %6184 = vmatpush1.bf16.msra.mxu0 %v5000
    %6185 = vmatprep.subr.bf16.mxu0 0
    %6186 = vmatpush1.bf16.msra.mxu0 %v5007
    %6187 = vmatprep.subr.bf16.mxu0 0
    %6188 = vmatpush1.bf16.msra.mxu0 %v5014
    %6189 = vmatprep.subr.bf16.mxu0 0
    %6190 = vmatpush1.bf16.msra.mxu0 %v5021
    %6191 = vmatprep.subr.bf16.mxu0 0
    %6192 = vmatpush1.bf16.msra.mxu0 %v5028
    %6193 = vmatprep.mubr.bf16.mxu0 %v2733
    %6194 = vmatmul.mubr.bf16.gmra.mrb[0].mxu0 %v2732
    %v6195 = vpop.f32.mrb[0].mxu0
    %v6196 = vadd.f32 %v6156, %v6195
    %v6197 = vpop.f32.mrb[0].mxu0
    %v6198 = vpop.f32.mrb[0].mxu0
    %v6199 = vpop.f32.mrb[0].mxu0
    %6200 = vdwg.mxu0
    %6201 = vmatprep.subr.bf16.mxu0 0
    %6202 = vmatpush1.bf16.msra.mxu0 %v5035
    %6203 = vmatprep.subr.bf16.mxu0 0
    %6204 = vmatpush1.bf16.msra.mxu0 %v5042
    %6205 = vmatprep.subr.bf16.mxu0 0
    %6206 = vmatpush1.bf16.msra.mxu0 %v5049
    %6207 = vmatprep.subr.bf16.mxu0 0
    %6208 = vmatpush1.bf16.msra.mxu0 %v5056
    %6209 = vmatprep.subr.bf16.mxu0 0
    %6210 = vmatpush1.bf16.msra.mxu0 %v5063
    %6211 = vmatprep.subr.bf16.mxu0 0
    %6212 = vmatpush1.bf16.msra.mxu0 %v5070
    %6213 = vmatprep.subr.bf16.mxu0 0
    %6214 = vmatpush1.bf16.msra.mxu0 %v5077
    %6215 = vmatprep.subr.bf16.mxu0 0
    %6216 = vmatpush1.bf16.msra.mxu0 %v5084
    %6217 = vmatprep.subr.bf16.mxu0 0
    %6218 = vmatpush1.bf16.msra.mxu0 %v5091
    %6219 = vmatprep.subr.bf16.mxu0 0
    %6220 = vmatpush1.bf16.msra.mxu0 %v5098
    %6221 = vmatprep.subr.bf16.mxu0 0
    %6222 = vmatpush1.bf16.msra.mxu0 %v5105
    %6223 = vmatprep.subr.bf16.mxu0 0
    %6224 = vmatpush1.bf16.msra.mxu0 %v5112
    %6225 = vmatprep.subr.bf16.mxu0 0
    %6226 = vmatpush1.bf16.msra.mxu0 %v5119
    %6227 = vmatprep.subr.bf16.mxu0 0
    %6228 = vmatpush1.bf16.msra.mxu0 %v5126
    %6229 = vmatprep.subr.bf16.mxu0 0
    %6230 = vmatpush1.bf16.msra.mxu0 %v5133
    %6231 = vmatprep.subr.bf16.mxu0 0
    %6232 = vmatpush1.bf16.msra.mxu0 %v5140
    %6233 = vmatprep.mubr.bf16.mxu0 %v2735
    %6234 = vmatmul.mubr.bf16.gmra.mrb[0].mxu0 %v2734
    %v6235 = vpop.f32.mrb[0].mxu0
    %v6236 = vadd.f32 %v6196, %v6235
    %v6237 = vpop.f32.mrb[0].mxu0
    %v6238 = vpop.f32.mrb[0].mxu0
    %v6239 = vpop.f32.mrb[0].mxu0
    %6240 = vdwg.mxu0
    %v6241 = vtanh.pop %v5747
    %v6242 = vtanh.pop %v5749
    %v6243 = vtanh.pop %v5911
    %v6244 = vtanh.pop %v5913
    %v6245 = vtanh.pop %v6075
    %v6246 = vtanh.pop %v6077
    %v6247 = vtanh.pop %v6236
    %v6248 = vpack.c.bf16 %v6241, %v6241
    %v6249 = vpack.c.bf16 %v6242, %v6242
    %v6250 = vpack.c.bf16 %v6243, %v6243
    %v6251 = vpack.c.bf16 %v6244, %v6244
    %v6252 = vpack.c.bf16 %v6245, %v6245
    %v6253 = vpack.c.bf16 %v6246, %v6246
    %v6254 = vpack.c.bf16 %v6247, %v6247
    %v6262 = vunpack.c.l.b16 %v6248
    %v6263 = vunpack.c.l.b16 %v6249
    %v6264 = vunpack.c.l.b16 %v6250
    %v6265 = vunpack.c.l.b16 %v6251
    %v6266 = vunpack.c.l.b16 %v6252
    %v6267 = vunpack.c.l.b16 %v6253
    %v6268 = vunpack.c.l.b16 %v6254
    %v6269 = vpack.c.b16 %v6263, %v6262
    %v6270 = vpack.c.b16 %v6265, %v6264
    %v6271 = vpack.c.b16 %v6267, %v6266
    %v6272 = vpack.c.b16 %v6268, %v6268
    %6277 = vst [vmem:[#allocation16] sm:$0xff] %v6269
    %6278 = vst [vmem:[#allocation16 + $0x8] sm:$0xff] %v6270
    %6279 = vst [vmem:[#allocation16 + $0x10] sm:$0xff] %v6271
    %6280 = vst [vmem:[#allocation16 + $0x18] sm:$0xf] %v6272
    // Predicated region
    $region70: #{generator_forward.1} parent=1 // pred_check
      _
    $region71: #{generator_forward.1} parent=1 // pred_check_branch
      %6282 = sbr.rel (0) target = $region73
    $region72: #{generator_forward.1} parent=1 // pred_region
      %s6284 = ssub.s32 448, 448
      %6285 = vsyncadd [#allocation4], %s6284
      %s6287 = sshll.u32 [#allocation16], 4
      %s6288 = int_to_ptr.vmem [resolvable:$true] %s6287
      %6290 = dma.vmem_to_hbm [thread:$0]  %s6288, 448, %s9, [#allocation4]
    $region73: #{generator_forward.1} parent=1 // pred_fallthru
      _
    // Predicated region
    $region74: #{generator_forward.1} parent=1 // pred_check
      _
    $region75: #{generator_forward.1} parent=1 // pred_check_branch
      %6292 = sbr.rel (0) target = $region77
    $region76: #{generator_forward.1} parent=1 // pred_region
      %6293 = dma.done [#allocation4], 448
    $region77: #{generator_forward.1} parent=1 // pred_fallthru
      _
    %6294 = vsyncpa [#allocation3], 1
    %6295 = vsyncpa [#allocation6], 1
    %6296 = vsyncpa [#allocation9], 1
    %6297 = vsyncpa [#allocation12], 1
    %6298 = vsyncpa [#allocation15], 1
    %6299 = vsyncpa [#allocation4], 1

</llo_original>
